<compile_context>
chip_gen: v7x
topology: tpu7x:2x2x1
jax: 0.10.0
libtpu: 0.0.40
codegen_flags: <defaults>
</compile_context>

<pallas_src>
import functools

import jax
import jax.numpy as jnp
from jax.experimental import pallas as pl

EPS = 1e-5  # PyTorch nn.LayerNorm default eps


def _layernorm(x, gamma, beta):
    # x: (N, D), gamma/beta: (1, D)
    mu = jnp.mean(x, axis=-1, keepdims=True)
    var = jnp.mean((x - mu) ** 2, axis=-1, keepdims=True)
    return (x - mu) * jax.lax.rsqrt(var + EPS) * gamma + beta


def _gelu_exact(x):
    # Exact (erf-based) GELU, matching HF GELUActivation / F.gelu default.
    return 0.5 * x * (1.0 + jax.lax.erf(x * 0.7071067811865476))


def moondra_fused_kernel(
    tok_ref, embed_ref,
    g1_ref, b1_ref, wqkv_ref, bqkv_ref, wo_ref, bo_ref,
    g2_ref, b2_ref, wff1_ref, bff1_ref, wff2_ref, bff2_ref,
    gf_ref, bf_ref, wh_ref, bh_ref,
    o_ref,
    *, num_heads, batch,
):
    BS = tok_ref.shape[0]
    V, D = embed_ref.shape
    L = wqkv_ref.shape[0]
    H = num_heads
    hd = D // H
    B = batch
    S = BS // B
    scale = 1.0 / float(hd) ** 0.5

    # ---------- embedding lookup as a one-hot matmul (MXU, no gather) ----------
    tok = tok_ref[...]                                              # (BS, 1) int32
    vocab_ids = jax.lax.broadcasted_iota(jnp.int32, (BS, V), 1)
    onehot = (vocab_ids == tok).astype(jnp.float32)                 # (BS, V)
    x = jnp.dot(onehot, embed_ref[...], preferred_element_type=jnp.float32)  # (BS, D)

    for l in range(L):  # static unroll; L is known at trace time and tiny
        # ---------- attention branch (pre-LN) ----------
        xn = _layernorm(x, g1_ref[l], b1_ref[l])                    # (BS, D)
        qkv = jnp.dot(xn, wqkv_ref[l],
                      preferred_element_type=jnp.float32) + bqkv_ref[l]  # (BS, 3D)
        wo_l = wo_ref[l]                                            # (D, D)

        attn = jnp.zeros((BS, D), jnp.float32)
        for h in range(H):
            # (BS, hd) lane slices -> free split of the leading dim to (B, S, hd)
            qh = qkv[:, h * hd:(h + 1) * hd].reshape(B, S, hd)
            kh = qkv[:, D + h * hd:D + (h + 1) * hd].reshape(B, S, hd)
            vh = qkv[:, 2 * D + h * hd:2 * D + (h + 1) * hd].reshape(B, S, hd)

            s = jnp.einsum("bqd,bkd->bqk", qh, kh,
                           preferred_element_type=jnp.float32) * scale   # (B, S, S)
            s = s - jnp.max(s, axis=-1, keepdims=True)
            p = jnp.exp(s)
            p = p * pl.reciprocal(jnp.sum(p, axis=-1, keepdims=True), approx=True)
            ctx = jnp.einsum("bqk,bkd->bqd", p, vh,
                             preferred_element_type=jnp.float32)         # (B, S, hd)

            # Accumulate through W_out row-slice: avoids the lane-dim concat.
            attn = attn + jnp.dot(ctx.reshape(BS, hd),
                                  wo_l[h * hd:(h + 1) * hd, :],
                                  preferred_element_type=jnp.float32)
        x = x + attn + bo_ref[l]            # dropout == identity (eval mode)

        # ---------- feed-forward branch (pre-LN) ----------
        xn2 = _layernorm(x, g2_ref[l], b2_ref[l])
        h1 = jnp.dot(xn2, wff1_ref[l],
                     preferred_element_type=jnp.float32) + bff1_ref[l]
        h1 = _gelu_exact(h1)
        x = x + jnp.dot(h1, wff2_ref[l],
                        preferred_element_type=jnp.float32) + bff2_ref[l]

    # ---------- final LayerNorm + lm_head (vocab padded to lane-dense 128) ----------
    xn = _layernorm(x, gf_ref[...], bf_ref[...])
    logits = jnp.dot(xn, wh_ref[...], preferred_element_type=jnp.float32) + bh_ref[...]
    o_ref[...] = logits.astype(o_ref.dtype)                         # (BS, V_pad) dense store


def moondra_forward(tokens, params, num_heads):
    B, S = tokens.shape
    BS = B * S
    vocab, _ = params["embed"].shape
    v_pad = params["w_head"].shape[1]

    kern = functools.partial(moondra_fused_kernel, num_heads=num_heads, batch=B)
    # No grid / no BlockSpecs: every operand is a single whole-array VMEM block.
    logits_pad = pl.pallas_call(
        kern,
        out_shape=jax.ShapeDtypeStruct((BS, v_pad), jnp.float32),
    )(
        tokens.reshape(BS, 1).astype(jnp.int32),
        params["embed"],
        params["g1"], params["b1"],
        params["wqkv"], params["bqkv"],
        params["wo"], params["bo"],
        params["g2"], params["b2"],
        params["wff1"], params["bff1"],
        params["wff2"], params["bff2"],
        params["gf"], params["bf"],
        params["w_head"], params["b_head"],
    )
    return logits_pad[:, :vocab].reshape(B, S, vocab)


# ----------------------------- parameter setup -----------------------------

def init_params(key, vocab_size, embed_dim, ff_dim, num_layers, lane=128):
    scale = 0.02
    D, F = embed_dim, ff_dim

    def nrm(k, shape):
        return jax.random.normal(k, shape, jnp.float32) * scale

    keys = jax.random.split(key, 2 + num_layers)

    names = ("g1", "b1", "wqkv", "bqkv", "wo", "bo", "g2", "b2",
             "wff1", "bff1", "wff2", "bff2")
    per = {n: [] for n in names}
    for l in range(num_layers):
        ks = jax.random.split(keys[1 + l], 12)
        wq, wk, wv = nrm(ks[0], (D, D)), nrm(ks[2], (D, D)), nrm(ks[4], (D, D))
        bq, bk, bv = nrm(ks[1], (1, D)), nrm(ks[3], (1, D)), nrm(ks[5], (1, D))
        per["g1"].append(jnp.ones((1, D), jnp.float32))
        per["b1"].append(jnp.zeros((1, D), jnp.float32))
        per["wqkv"].append(jnp.concatenate([wq, wk, wv], axis=1))   # (D, 3D)
        per["bqkv"].append(jnp.concatenate([bq, bk, bv], axis=1))   # (1, 3D)
        per["wo"].append(nrm(ks[6], (D, D)))
        per["bo"].append(nrm(ks[7], (1, D)))
        per["g2"].append(jnp.ones((1, D), jnp.float32))
        per["b2"].append(jnp.zeros((1, D), jnp.float32))
        per["wff1"].append(nrm(ks[8], (D, F)))
        per["bff1"].append(nrm(ks[9], (1, F)))
        per["wff2"].append(nrm(ks[10], (F, D)))
        per["bff2"].append(nrm(ks[11], (1, D)))

    params = {"embed": nrm(keys[0], (vocab_size, D))}
    for n in names:
        params[n] = jnp.stack(per[n], axis=0)                       # stacked (L, ...)

    kh1, kh2 = jax.random.split(keys[-1])
    v_pad = ((vocab_size + lane - 1) // lane) * lane                # lane-dense lm_head
    w_head = jnp.zeros((D, v_pad), jnp.float32).at[:, :vocab_size].set(
        nrm(kh1, (D, vocab_size)))
    b_head = jnp.zeros((1, v_pad), jnp.float32).at[:, :vocab_size].set(
        nrm(kh2, (1, vocab_size)))
    params.update({
        "gf": jnp.ones((1, D), jnp.float32),
        "bf": jnp.zeros((1, D), jnp.float32),
        "w_head": w_head,
        "b_head": b_head,
    })
    return params


if __name__ == "__main__":
    # Small configuration consistent with the module's structure.
    VOCAB, EMBED, HEADS, FF, LAYERS = 64, 32, 4, 64, 2
    B, S = 2, 8

    key = jax.random.PRNGKey(0)
    k_tok, k_par = jax.random.split(key)
    tokens = jax.random.randint(k_tok, (B, S), 0, VOCAB, dtype=jnp.int32)
    params = init_params(k_par, VOCAB, EMBED, FF, LAYERS)

    logits = moondra_forward(tokens, params, HEADS)
    jax.block_until_ready(logits)
    assert logits.shape == (B, S, VOCAB)
    print("KERNEL_OK")
</pallas_src>

<mosaic_0001>
module attributes {stable_mosaic.version = 11 : i64} {
  func.func @moondra_fused_kernel(%arg0: memref<16x1xi32, #tpu.memory_space<vmem>>, %arg1: memref<64x32xf32, #tpu.memory_space<vmem>>, %arg2: memref<2x1x32xf32, #tpu.memory_space<vmem>>, %arg3: memref<2x1x32xf32, #tpu.memory_space<vmem>>, %arg4: memref<2x32x96xf32, #tpu.memory_space<vmem>>, %arg5: memref<2x1x96xf32, #tpu.memory_space<vmem>>, %arg6: memref<2x32x32xf32, #tpu.memory_space<vmem>>, %arg7: memref<2x1x32xf32, #tpu.memory_space<vmem>>, %arg8: memref<2x1x32xf32, #tpu.memory_space<vmem>>, %arg9: memref<2x1x32xf32, #tpu.memory_space<vmem>>, %arg10: memref<2x32x64xf32, #tpu.memory_space<vmem>>, %arg11: memref<2x1x64xf32, #tpu.memory_space<vmem>>, %arg12: memref<2x64x32xf32, #tpu.memory_space<vmem>>, %arg13: memref<2x1x32xf32, #tpu.memory_space<vmem>>, %arg14: memref<1x32xf32, #tpu.memory_space<vmem>>, %arg15: memref<1x32xf32, #tpu.memory_space<vmem>>, %arg16: memref<32x128xf32, #tpu.memory_space<vmem>>, %arg17: memref<1x128xf32, #tpu.memory_space<vmem>>, %arg18: memref<16x128xf32, #tpu.memory_space<vmem>>) attributes {dimension_semantics = [], scalar_prefetch = 0 : i64, scratch_operands = 0 : i64, tpu.core_type = #tpu.core_type<tc>} {
    %c0 = arith.constant 0 : index
    %c0_0 = arith.constant 0 : index
    %0 = vector.load %arg0[%c0, %c0_0] : memref<16x1xi32, #tpu.memory_space<vmem>>, vector<16x1xi32>
    %1 = tpu.iota {dimensions = array<i32: 1>} : vector<16x64xi32>
    %2 = vector.broadcast %0 : vector<16x1xi32> to vector<16x64xi32>
    %3 = arith.cmpi eq, %1, %2 : vector<16x64xi32>
    %4 = arith.extui %3 : vector<16x64xi1> to vector<16x64xi32>
    %5 = arith.sitofp %4 : vector<16x64xi32> to vector<16x64xf32>
    %c0_1 = arith.constant 0 : index
    %c0_2 = arith.constant 0 : index
    %6 = vector.load %arg1[%c0_1, %c0_2] : memref<64x32xf32, #tpu.memory_space<vmem>>, vector<64x32xf32>
    %cst = arith.constant dense<0.000000e+00> : vector<16x32xf32>
    %7 = tpu.matmul %5, %6, %cst {dimension_numbers = #tpu.dot_dimension_numbers<[1], [0], [0], [1], [0, 0, 1, 1], [], []>} : vector<16x64xf32>, vector<64x32xf32>, vector<16x32xf32> -> vector<16x32xf32>
    %c0_3 = arith.constant 0 : index
    %c0_4 = arith.constant 0 : index
    %c0_5 = arith.constant 0 : index
    %8 = vector.load %arg2[%c0_3, %c0_4, %c0_5] : memref<2x1x32xf32, #tpu.memory_space<vmem>>, vector<1x1x32xf32>
    %9 = vector.shape_cast %8 : vector<1x1x32xf32> to vector<1x32xf32>
    %c0_6 = arith.constant 0 : index
    %c0_7 = arith.constant 0 : index
    %c0_8 = arith.constant 0 : index
    %10 = vector.load %arg3[%c0_6, %c0_7, %c0_8] : memref<2x1x32xf32, #tpu.memory_space<vmem>>, vector<1x1x32xf32>
    %11 = vector.shape_cast %10 : vector<1x1x32xf32> to vector<1x32xf32>
    %cst_9 = arith.constant dense<0.000000e+00> : vector<16xf32>
    %12 = vector.multi_reduction <add>, %7, %cst_9 [1] : vector<16x32xf32> to vector<16xf32>
    %13 = vector.shape_cast %12 : vector<16xf32> to vector<16x1xf32>
    %cst_10 = arith.constant 3.200000e+01 : f32
    %14 = vector.broadcast %cst_10 : f32 to vector<16x1xf32>
    %15 = arith.divf %13, %14 : vector<16x1xf32>
    %16 = vector.broadcast %15 : vector<16x1xf32> to vector<16x32xf32>
    %17 = arith.subf %7, %16 : vector<16x32xf32>
    %18 = arith.mulf %17, %17 : vector<16x32xf32>
    %cst_11 = arith.constant dense<0.000000e+00> : vector<16xf32>
    %19 = vector.multi_reduction <add>, %18, %cst_11 [1] : vector<16x32xf32> to vector<16xf32>
    %20 = vector.shape_cast %19 : vector<16xf32> to vector<16x1xf32>
    %cst_12 = arith.constant 3.200000e+01 : f32
    %21 = vector.broadcast %cst_12 : f32 to vector<16x1xf32>
    %22 = arith.divf %20, %21 : vector<16x1xf32>
    %23 = vector.broadcast %15 : vector<16x1xf32> to vector<16x32xf32>
    %24 = arith.subf %7, %23 : vector<16x32xf32>
    %cst_13 = arith.constant 9.99999974E-6 : f32
    %25 = vector.broadcast %cst_13 : f32 to vector<16x1xf32>
    %26 = arith.addf %22, %25 : vector<16x1xf32>
    %27 = math.rsqrt %26 : vector<16x1xf32>
    %28 = vector.broadcast %27 : vector<16x1xf32> to vector<16x32xf32>
    %29 = arith.mulf %24, %28 : vector<16x32xf32>
    %30 = vector.broadcast %9 : vector<1x32xf32> to vector<16x32xf32>
    %31 = arith.mulf %29, %30 : vector<16x32xf32>
    %32 = vector.broadcast %11 : vector<1x32xf32> to vector<16x32xf32>
    %33 = arith.addf %31, %32 : vector<16x32xf32>
    %c0_14 = arith.constant 0 : index
    %c0_15 = arith.constant 0 : index
    %c0_16 = arith.constant 0 : index
    %34 = vector.load %arg4[%c0_14, %c0_15, %c0_16] : memref<2x32x96xf32, #tpu.memory_space<vmem>>, vector<1x32x96xf32>
    %35 = vector.shape_cast %34 : vector<1x32x96xf32> to vector<32x96xf32>
    %cst_17 = arith.constant dense<0.000000e+00> : vector<16x96xf32>
    %36 = tpu.matmul %33, %35, %cst_17 {dimension_numbers = #tpu.dot_dimension_numbers<[1], [0], [0], [1], [0, 0, 1, 1], [], []>} : vector<16x32xf32>, vector<32x96xf32>, vector<16x96xf32> -> vector<16x96xf32>
    %c0_18 = arith.constant 0 : index
    %c0_19 = arith.constant 0 : index
    %c0_20 = arith.constant 0 : index
    %37 = vector.load %arg5[%c0_18, %c0_19, %c0_20] : memref<2x1x96xf32, #tpu.memory_space<vmem>>, vector<1x1x96xf32>
    %38 = vector.shape_cast %37 : vector<1x1x96xf32> to vector<1x96xf32>
    %39 = vector.broadcast %38 : vector<1x96xf32> to vector<16x96xf32>
    %40 = arith.addf %36, %39 : vector<16x96xf32>
    %c0_21 = arith.constant 0 : index
    %c0_22 = arith.constant 0 : index
    %c0_23 = arith.constant 0 : index
    %41 = vector.load %arg6[%c0_21, %c0_22, %c0_23] : memref<2x32x32xf32, #tpu.memory_space<vmem>>, vector<1x32x32xf32>
    %42 = vector.shape_cast %41 : vector<1x32x32xf32> to vector<32x32xf32>
    %cst_24 = arith.constant 0.000000e+00 : f32
    %43 = vector.broadcast %cst_24 : f32 to vector<16x32xf32>
    %44 = vector.extract_strided_slice %40 {offsets = [0, 0], sizes = [16, 8], strides = [1, 1]} : vector<16x96xf32> to vector<16x8xf32>
    %45 = vector.shape_cast %44 : vector<16x8xf32> to vector<2x8x8xf32>
    %46 = vector.extract_strided_slice %40 {offsets = [0, 32], sizes = [16, 8], strides = [1, 1]} : vector<16x96xf32> to vector<16x8xf32>
    %47 = vector.shape_cast %46 : vector<16x8xf32> to vector<2x8x8xf32>
    %48 = vector.extract_strided_slice %40 {offsets = [0, 64], sizes = [16, 8], strides = [1, 1]} : vector<16x96xf32> to vector<16x8xf32>
    %49 = vector.shape_cast %48 : vector<16x8xf32> to vector<2x8x8xf32>
    "tpu.trace_start"() <{level = 10 : i32, message = "bqd,bkd->bqk"}> : () -> ()
    %cst_25 = arith.constant dense<0.000000e+00> : vector<2x8x8xf32>
    %50 = tpu.matmul %45, %47, %cst_25 {dimension_numbers = #tpu.dot_dimension_numbers<[2], [2], [1], [1], [0, 0, 0, 1, 1, 1], [0], [0]>} : vector<2x8x8xf32>, vector<2x8x8xf32>, vector<2x8x8xf32> -> vector<2x8x8xf32>
    "tpu.trace_stop"() : () -> ()
    %cst_26 = arith.constant 0.353553385 : f32
    %51 = vector.broadcast %cst_26 : f32 to vector<2x8x8xf32>
    %52 = arith.mulf %50, %51 : vector<2x8x8xf32>
    %cst_27 = arith.constant dense<0xFF800000> : vector<2x8xf32>
    %53 = vector.multi_reduction <maximumf>, %52, %cst_27 [2] : vector<2x8x8xf32> to vector<2x8xf32>
    %54 = vector.shape_cast %53 : vector<2x8xf32> to vector<2x8x1xf32>
    %55 = vector.broadcast %54 : vector<2x8x1xf32> to vector<2x8x8xf32>
    %56 = arith.subf %52, %55 : vector<2x8x8xf32>
    %57 = math.exp %56 : vector<2x8x8xf32>
    %cst_28 = arith.constant dense<0.000000e+00> : vector<2x8xf32>
    %58 = vector.multi_reduction <add>, %57, %cst_28 [2] : vector<2x8x8xf32> to vector<2x8xf32>
    %59 = vector.shape_cast %58 : vector<2x8xf32> to vector<2x8x1xf32>
    %60 = tpu.reciprocal %59 {approx = true} : vector<2x8x1xf32> -> vector<2x8x1xf32>
    %61 = vector.broadcast %60 : vector<2x8x1xf32> to vector<2x8x8xf32>
    %62 = arith.mulf %57, %61 : vector<2x8x8xf32>
    "tpu.trace_start"() <{level = 10 : i32, message = "bqk,bkd->bqd"}> : () -> ()
    %cst_29 = arith.constant dense<0.000000e+00> : vector<2x8x8xf32>
    %63 = tpu.matmul %62, %49, %cst_29 {dimension_numbers = #tpu.dot_dimension_numbers<[2], [1], [1], [2], [0, 0, 0, 1, 1, 2], [0], [0]>} : vector<2x8x8xf32>, vector<2x8x8xf32>, vector<2x8x8xf32> -> vector<2x8x8xf32>
    "tpu.trace_stop"() : () -> ()
    %64 = vector.shape_cast %63 : vector<2x8x8xf32> to vector<16x8xf32>
    %65 = vector.extract_strided_slice %42 {offsets = [0, 0], sizes = [8, 32], strides = [1, 1]} : vector<32x32xf32> to vector<8x32xf32>
    %cst_30 = arith.constant dense<0.000000e+00> : vector<16x32xf32>
    %66 = tpu.matmul %64, %65, %cst_30 {dimension_numbers = #tpu.dot_dimension_numbers<[1], [0], [0], [1], [0, 0, 1, 1], [], []>} : vector<16x8xf32>, vector<8x32xf32>, vector<16x32xf32> -> vector<16x32xf32>
    %67 = arith.addf %43, %66 : vector<16x32xf32>
    %68 = vector.extract_strided_slice %40 {offsets = [0, 8], sizes = [16, 8], strides = [1, 1]} : vector<16x96xf32> to vector<16x8xf32>
    %69 = vector.shape_cast %68 : vector<16x8xf32> to vector<2x8x8xf32>
    %70 = vector.extract_strided_slice %40 {offsets = [0, 40], sizes = [16, 8], strides = [1, 1]} : vector<16x96xf32> to vector<16x8xf32>
    %71 = vector.shape_cast %70 : vector<16x8xf32> to vector<2x8x8xf32>
    %72 = vector.extract_strided_slice %40 {offsets = [0, 72], sizes = [16, 8], strides = [1, 1]} : vector<16x96xf32> to vector<16x8xf32>
    %73 = vector.shape_cast %72 : vector<16x8xf32> to vector<2x8x8xf32>
    "tpu.trace_start"() <{level = 10 : i32, message = "bqd,bkd->bqk"}> : () -> ()
    %cst_31 = arith.constant dense<0.000000e+00> : vector<2x8x8xf32>
    %74 = tpu.matmul %69, %71, %cst_31 {dimension_numbers = #tpu.dot_dimension_numbers<[2], [2], [1], [1], [0, 0, 0, 1, 1, 1], [0], [0]>} : vector<2x8x8xf32>, vector<2x8x8xf32>, vector<2x8x8xf32> -> vector<2x8x8xf32>
    "tpu.trace_stop"() : () -> ()
    %cst_32 = arith.constant 0.353553385 : f32
    %75 = vector.broadcast %cst_32 : f32 to vector<2x8x8xf32>
    %76 = arith.mulf %74, %75 : vector<2x8x8xf32>
    %cst_33 = arith.constant dense<0xFF800000> : vector<2x8xf32>
    %77 = vector.multi_reduction <maximumf>, %76, %cst_33 [2] : vector<2x8x8xf32> to vector<2x8xf32>
    %78 = vector.shape_cast %77 : vector<2x8xf32> to vector<2x8x1xf32>
    %79 = vector.broadcast %78 : vector<2x8x1xf32> to vector<2x8x8xf32>
    %80 = arith.subf %76, %79 : vector<2x8x8xf32>
    %81 = math.exp %80 : vector<2x8x8xf32>
    %cst_34 = arith.constant dense<0.000000e+00> : vector<2x8xf32>
    %82 = vector.multi_reduction <add>, %81, %cst_34 [2] : vector<2x8x8xf32> to vector<2x8xf32>
    %83 = vector.shape_cast %82 : vector<2x8xf32> to vector<2x8x1xf32>
    %84 = tpu.reciprocal %83 {approx = true} : vector<2x8x1xf32> -> vector<2x8x1xf32>
    %85 = vector.broadcast %84 : vector<2x8x1xf32> to vector<2x8x8xf32>
    %86 = arith.mulf %81, %85 : vector<2x8x8xf32>
    "tpu.trace_start"() <{level = 10 : i32, message = "bqk,bkd->bqd"}> : () -> ()
    %cst_35 = arith.constant dense<0.000000e+00> : vector<2x8x8xf32>
    %87 = tpu.matmul %86, %73, %cst_35 {dimension_numbers = #tpu.dot_dimension_numbers<[2], [1], [1], [2], [0, 0, 0, 1, 1, 2], [0], [0]>} : vector<2x8x8xf32>, vector<2x8x8xf32>, vector<2x8x8xf32> -> vector<2x8x8xf32>
    "tpu.trace_stop"() : () -> ()
    %88 = vector.shape_cast %87 : vector<2x8x8xf32> to vector<16x8xf32>
    %89 = vector.extract_strided_slice %42 {offsets = [8, 0], sizes = [8, 32], strides = [1, 1]} : vector<32x32xf32> to vector<8x32xf32>
    %cst_36 = arith.constant dense<0.000000e+00> : vector<16x32xf32>
    %90 = tpu.matmul %88, %89, %cst_36 {dimension_numbers = #tpu.dot_dimension_numbers<[1], [0], [0], [1], [0, 0, 1, 1], [], []>} : vector<16x8xf32>, vector<8x32xf32>, vector<16x32xf32> -> vector<16x32xf32>
    %91 = arith.addf %67, %90 : vector<16x32xf32>
    %92 = vector.extract_strided_slice %40 {offsets = [0, 16], sizes = [16, 8], strides = [1, 1]} : vector<16x96xf32> to vector<16x8xf32>
    %93 = vector.shape_cast %92 : vector<16x8xf32> to vector<2x8x8xf32>
    %94 = vector.extract_strided_slice %40 {offsets = [0, 48], sizes = [16, 8], strides = [1, 1]} : vector<16x96xf32> to vector<16x8xf32>
    %95 = vector.shape_cast %94 : vector<16x8xf32> to vector<2x8x8xf32>
    %96 = vector.extract_strided_slice %40 {offsets = [0, 80], sizes = [16, 8], strides = [1, 1]} : vector<16x96xf32> to vector<16x8xf32>
    %97 = vector.shape_cast %96 : vector<16x8xf32> to vector<2x8x8xf32>
    "tpu.trace_start"() <{level = 10 : i32, message = "bqd,bkd->bqk"}> : () -> ()
    %cst_37 = arith.constant dense<0.000000e+00> : vector<2x8x8xf32>
    %98 = tpu.matmul %93, %95, %cst_37 {dimension_numbers = #tpu.dot_dimension_numbers<[2], [2], [1], [1], [0, 0, 0, 1, 1, 1], [0], [0]>} : vector<2x8x8xf32>, vector<2x8x8xf32>, vector<2x8x8xf32> -> vector<2x8x8xf32>
    "tpu.trace_stop"() : () -> ()
    %cst_38 = arith.constant 0.353553385 : f32
    %99 = vector.broadcast %cst_38 : f32 to vector<2x8x8xf32>
    %100 = arith.mulf %98, %99 : vector<2x8x8xf32>
    %cst_39 = arith.constant dense<0xFF800000> : vector<2x8xf32>
    %101 = vector.multi_reduction <maximumf>, %100, %cst_39 [2] : vector<2x8x8xf32> to vector<2x8xf32>
    %102 = vector.shape_cast %101 : vector<2x8xf32> to vector<2x8x1xf32>
    %103 = vector.broadcast %102 : vector<2x8x1xf32> to vector<2x8x8xf32>
    %104 = arith.subf %100, %103 : vector<2x8x8xf32>
    %105 = math.exp %104 : vector<2x8x8xf32>
    %cst_40 = arith.constant dense<0.000000e+00> : vector<2x8xf32>
    %106 = vector.multi_reduction <add>, %105, %cst_40 [2] : vector<2x8x8xf32> to vector<2x8xf32>
    %107 = vector.shape_cast %106 : vector<2x8xf32> to vector<2x8x1xf32>
    %108 = tpu.reciprocal %107 {approx = true} : vector<2x8x1xf32> -> vector<2x8x1xf32>
    %109 = vector.broadcast %108 : vector<2x8x1xf32> to vector<2x8x8xf32>
    %110 = arith.mulf %105, %109 : vector<2x8x8xf32>
    "tpu.trace_start"() <{level = 10 : i32, message = "bqk,bkd->bqd"}> : () -> ()
    %cst_41 = arith.constant dense<0.000000e+00> : vector<2x8x8xf32>
    %111 = tpu.matmul %110, %97, %cst_41 {dimension_numbers = #tpu.dot_dimension_numbers<[2], [1], [1], [2], [0, 0, 0, 1, 1, 2], [0], [0]>} : vector<2x8x8xf32>, vector<2x8x8xf32>, vector<2x8x8xf32> -> vector<2x8x8xf32>
    "tpu.trace_stop"() : () -> ()
    %112 = vector.shape_cast %111 : vector<2x8x8xf32> to vector<16x8xf32>
    %113 = vector.extract_strided_slice %42 {offsets = [16, 0], sizes = [8, 32], strides = [1, 1]} : vector<32x32xf32> to vector<8x32xf32>
    %cst_42 = arith.constant dense<0.000000e+00> : vector<16x32xf32>
    %114 = tpu.matmul %112, %113, %cst_42 {dimension_numbers = #tpu.dot_dimension_numbers<[1], [0], [0], [1], [0, 0, 1, 1], [], []>} : vector<16x8xf32>, vector<8x32xf32>, vector<16x32xf32> -> vector<16x32xf32>
    %115 = arith.addf %91, %114 : vector<16x32xf32>
    %116 = vector.extract_strided_slice %40 {offsets = [0, 24], sizes = [16, 8], strides = [1, 1]} : vector<16x96xf32> to vector<16x8xf32>
    %117 = vector.shape_cast %116 : vector<16x8xf32> to vector<2x8x8xf32>
    %118 = vector.extract_strided_slice %40 {offsets = [0, 56], sizes = [16, 8], strides = [1, 1]} : vector<16x96xf32> to vector<16x8xf32>
    %119 = vector.shape_cast %118 : vector<16x8xf32> to vector<2x8x8xf32>
    %120 = vector.extract_strided_slice %40 {offsets = [0, 88], sizes = [16, 8], strides = [1, 1]} : vector<16x96xf32> to vector<16x8xf32>
    %121 = vector.shape_cast %120 : vector<16x8xf32> to vector<2x8x8xf32>
    "tpu.trace_start"() <{level = 10 : i32, message = "bqd,bkd->bqk"}> : () -> ()
    %cst_43 = arith.constant dense<0.000000e+00> : vector<2x8x8xf32>
    %122 = tpu.matmul %117, %119, %cst_43 {dimension_numbers = #tpu.dot_dimension_numbers<[2], [2], [1], [1], [0, 0, 0, 1, 1, 1], [0], [0]>} : vector<2x8x8xf32>, vector<2x8x8xf32>, vector<2x8x8xf32> -> vector<2x8x8xf32>
    "tpu.trace_stop"() : () -> ()
    %cst_44 = arith.constant 0.353553385 : f32
    %123 = vector.broadcast %cst_44 : f32 to vector<2x8x8xf32>
    %124 = arith.mulf %122, %123 : vector<2x8x8xf32>
    %cst_45 = arith.constant dense<0xFF800000> : vector<2x8xf32>
    %125 = vector.multi_reduction <maximumf>, %124, %cst_45 [2] : vector<2x8x8xf32> to vector<2x8xf32>
    %126 = vector.shape_cast %125 : vector<2x8xf32> to vector<2x8x1xf32>
    %127 = vector.broadcast %126 : vector<2x8x1xf32> to vector<2x8x8xf32>
    %128 = arith.subf %124, %127 : vector<2x8x8xf32>
    %129 = math.exp %128 : vector<2x8x8xf32>
    %cst_46 = arith.constant dense<0.000000e+00> : vector<2x8xf32>
    %130 = vector.multi_reduction <add>, %129, %cst_46 [2] : vector<2x8x8xf32> to vector<2x8xf32>
    %131 = vector.shape_cast %130 : vector<2x8xf32> to vector<2x8x1xf32>
    %132 = tpu.reciprocal %131 {approx = true} : vector<2x8x1xf32> -> vector<2x8x1xf32>
    %133 = vector.broadcast %132 : vector<2x8x1xf32> to vector<2x8x8xf32>
    %134 = arith.mulf %129, %133 : vector<2x8x8xf32>
    "tpu.trace_start"() <{level = 10 : i32, message = "bqk,bkd->bqd"}> : () -> ()
    %cst_47 = arith.constant dense<0.000000e+00> : vector<2x8x8xf32>
    %135 = tpu.matmul %134, %121, %cst_47 {dimension_numbers = #tpu.dot_dimension_numbers<[2], [1], [1], [2], [0, 0, 0, 1, 1, 2], [0], [0]>} : vector<2x8x8xf32>, vector<2x8x8xf32>, vector<2x8x8xf32> -> vector<2x8x8xf32>
    "tpu.trace_stop"() : () -> ()
    %136 = vector.shape_cast %135 : vector<2x8x8xf32> to vector<16x8xf32>
    %137 = vector.extract_strided_slice %42 {offsets = [24, 0], sizes = [8, 32], strides = [1, 1]} : vector<32x32xf32> to vector<8x32xf32>
    %cst_48 = arith.constant dense<0.000000e+00> : vector<16x32xf32>
    %138 = tpu.matmul %136, %137, %cst_48 {dimension_numbers = #tpu.dot_dimension_numbers<[1], [0], [0], [1], [0, 0, 1, 1], [], []>} : vector<16x8xf32>, vector<8x32xf32>, vector<16x32xf32> -> vector<16x32xf32>
    %139 = arith.addf %115, %138 : vector<16x32xf32>
    %140 = arith.addf %7, %139 : vector<16x32xf32>
    %c0_49 = arith.constant 0 : index
    %c0_50 = arith.constant 0 : index
    %c0_51 = arith.constant 0 : index
    %141 = vector.load %arg7[%c0_49, %c0_50, %c0_51] : memref<2x1x32xf32, #tpu.memory_space<vmem>>, vector<1x1x32xf32>
    %142 = vector.shape_cast %141 : vector<1x1x32xf32> to vector<1x32xf32>
    %143 = vector.broadcast %142 : vector<1x32xf32> to vector<16x32xf32>
    %144 = arith.addf %140, %143 : vector<16x32xf32>
    %c0_52 = arith.constant 0 : index
    %c0_53 = arith.constant 0 : index
    %c0_54 = arith.constant 0 : index
    %145 = vector.load %arg8[%c0_52, %c0_53, %c0_54] : memref<2x1x32xf32, #tpu.memory_space<vmem>>, vector<1x1x32xf32>
    %146 = vector.shape_cast %145 : vector<1x1x32xf32> to vector<1x32xf32>
    %c0_55 = arith.constant 0 : index
    %c0_56 = arith.constant 0 : index
    %c0_57 = arith.constant 0 : index
    %147 = vector.load %arg9[%c0_55, %c0_56, %c0_57] : memref<2x1x32xf32, #tpu.memory_space<vmem>>, vector<1x1x32xf32>
    %148 = vector.shape_cast %147 : vector<1x1x32xf32> to vector<1x32xf32>
    %cst_58 = arith.constant dense<0.000000e+00> : vector<16xf32>
    %149 = vector.multi_reduction <add>, %144, %cst_58 [1] : vector<16x32xf32> to vector<16xf32>
    %150 = vector.shape_cast %149 : vector<16xf32> to vector<16x1xf32>
    %cst_59 = arith.constant 3.200000e+01 : f32
    %151 = vector.broadcast %cst_59 : f32 to vector<16x1xf32>
    %152 = arith.divf %150, %151 : vector<16x1xf32>
    %153 = vector.broadcast %152 : vector<16x1xf32> to vector<16x32xf32>
    %154 = arith.subf %144, %153 : vector<16x32xf32>
    %155 = arith.mulf %154, %154 : vector<16x32xf32>
    %cst_60 = arith.constant dense<0.000000e+00> : vector<16xf32>
    %156 = vector.multi_reduction <add>, %155, %cst_60 [1] : vector<16x32xf32> to vector<16xf32>
    %157 = vector.shape_cast %156 : vector<16xf32> to vector<16x1xf32>
    %cst_61 = arith.constant 3.200000e+01 : f32
    %158 = vector.broadcast %cst_61 : f32 to vector<16x1xf32>
    %159 = arith.divf %157, %158 : vector<16x1xf32>
    %160 = vector.broadcast %152 : vector<16x1xf32> to vector<16x32xf32>
    %161 = arith.subf %144, %160 : vector<16x32xf32>
    %cst_62 = arith.constant 9.99999974E-6 : f32
    %162 = vector.broadcast %cst_62 : f32 to vector<16x1xf32>
    %163 = arith.addf %159, %162 : vector<16x1xf32>
    %164 = math.rsqrt %163 : vector<16x1xf32>
    %165 = vector.broadcast %164 : vector<16x1xf32> to vector<16x32xf32>
    %166 = arith.mulf %161, %165 : vector<16x32xf32>
    %167 = vector.broadcast %146 : vector<1x32xf32> to vector<16x32xf32>
    %168 = arith.mulf %166, %167 : vector<16x32xf32>
    %169 = vector.broadcast %148 : vector<1x32xf32> to vector<16x32xf32>
    %170 = arith.addf %168, %169 : vector<16x32xf32>
    %c0_63 = arith.constant 0 : index
    %c0_64 = arith.constant 0 : index
    %c0_65 = arith.constant 0 : index
    %171 = vector.load %arg10[%c0_63, %c0_64, %c0_65] : memref<2x32x64xf32, #tpu.memory_space<vmem>>, vector<1x32x64xf32>
    %172 = vector.shape_cast %171 : vector<1x32x64xf32> to vector<32x64xf32>
    %cst_66 = arith.constant dense<0.000000e+00> : vector<16x64xf32>
    %173 = tpu.matmul %170, %172, %cst_66 {dimension_numbers = #tpu.dot_dimension_numbers<[1], [0], [0], [1], [0, 0, 1, 1], [], []>} : vector<16x32xf32>, vector<32x64xf32>, vector<16x64xf32> -> vector<16x64xf32>
    %c0_67 = arith.constant 0 : index
    %c0_68 = arith.constant 0 : index
    %c0_69 = arith.constant 0 : index
    %174 = vector.load %arg11[%c0_67, %c0_68, %c0_69] : memref<2x1x64xf32, #tpu.memory_space<vmem>>, vector<1x1x64xf32>
    %175 = vector.shape_cast %174 : vector<1x1x64xf32> to vector<1x64xf32>
    %176 = vector.broadcast %175 : vector<1x64xf32> to vector<16x64xf32>
    %177 = arith.addf %173, %176 : vector<16x64xf32>
    %cst_70 = arith.constant 5.000000e-01 : f32
    %178 = vector.broadcast %cst_70 : f32 to vector<16x64xf32>
    %179 = arith.mulf %178, %177 : vector<16x64xf32>
    %cst_71 = arith.constant 0.707106769 : f32
    %180 = vector.broadcast %cst_71 : f32 to vector<16x64xf32>
    %181 = arith.mulf %177, %180 : vector<16x64xf32>
    %182 = math.erf %181 : vector<16x64xf32>
    %cst_72 = arith.constant 1.000000e+00 : f32
    %183 = vector.broadcast %cst_72 : f32 to vector<16x64xf32>
    %184 = arith.addf %183, %182 : vector<16x64xf32>
    %185 = arith.mulf %179, %184 : vector<16x64xf32>
    %c0_73 = arith.constant 0 : index
    %c0_74 = arith.constant 0 : index
    %c0_75 = arith.constant 0 : index
    %186 = vector.load %arg12[%c0_73, %c0_74, %c0_75] : memref<2x64x32xf32, #tpu.memory_space<vmem>>, vector<1x64x32xf32>
    %187 = vector.shape_cast %186 : vector<1x64x32xf32> to vector<64x32xf32>
    %cst_76 = arith.constant dense<0.000000e+00> : vector<16x32xf32>
    %188 = tpu.matmul %185, %187, %cst_76 {dimension_numbers = #tpu.dot_dimension_numbers<[1], [0], [0], [1], [0, 0, 1, 1], [], []>} : vector<16x64xf32>, vector<64x32xf32>, vector<16x32xf32> -> vector<16x32xf32>
    %189 = arith.addf %144, %188 : vector<16x32xf32>
    %c0_77 = arith.constant 0 : index
    %c0_78 = arith.constant 0 : index
    %c0_79 = arith.constant 0 : index
    %190 = vector.load %arg13[%c0_77, %c0_78, %c0_79] : memref<2x1x32xf32, #tpu.memory_space<vmem>>, vector<1x1x32xf32>
    %191 = vector.shape_cast %190 : vector<1x1x32xf32> to vector<1x32xf32>
    %192 = vector.broadcast %191 : vector<1x32xf32> to vector<16x32xf32>
    %193 = arith.addf %189, %192 : vector<16x32xf32>
    %c1 = arith.constant 1 : index
    %c0_80 = arith.constant 0 : index
    %c0_81 = arith.constant 0 : index
    %194 = vector.load %arg2[%c1, %c0_80, %c0_81] : memref<2x1x32xf32, #tpu.memory_space<vmem>>, vector<1x1x32xf32>
    %195 = vector.shape_cast %194 : vector<1x1x32xf32> to vector<1x32xf32>
    %c1_82 = arith.constant 1 : index
    %c0_83 = arith.constant 0 : index
    %c0_84 = arith.constant 0 : index
    %196 = vector.load %arg3[%c1_82, %c0_83, %c0_84] : memref<2x1x32xf32, #tpu.memory_space<vmem>>, vector<1x1x32xf32>
    %197 = vector.shape_cast %196 : vector<1x1x32xf32> to vector<1x32xf32>
    %cst_85 = arith.constant dense<0.000000e+00> : vector<16xf32>
    %198 = vector.multi_reduction <add>, %193, %cst_85 [1] : vector<16x32xf32> to vector<16xf32>
    %199 = vector.shape_cast %198 : vector<16xf32> to vector<16x1xf32>
    %cst_86 = arith.constant 3.200000e+01 : f32
    %200 = vector.broadcast %cst_86 : f32 to vector<16x1xf32>
    %201 = arith.divf %199, %200 : vector<16x1xf32>
    %202 = vector.broadcast %201 : vector<16x1xf32> to vector<16x32xf32>
    %203 = arith.subf %193, %202 : vector<16x32xf32>
    %204 = arith.mulf %203, %203 : vector<16x32xf32>
    %cst_87 = arith.constant dense<0.000000e+00> : vector<16xf32>
    %205 = vector.multi_reduction <add>, %204, %cst_87 [1] : vector<16x32xf32> to vector<16xf32>
    %206 = vector.shape_cast %205 : vector<16xf32> to vector<16x1xf32>
    %cst_88 = arith.constant 3.200000e+01 : f32
    %207 = vector.broadcast %cst_88 : f32 to vector<16x1xf32>
    %208 = arith.divf %206, %207 : vector<16x1xf32>
    %209 = vector.broadcast %201 : vector<16x1xf32> to vector<16x32xf32>
    %210 = arith.subf %193, %209 : vector<16x32xf32>
    %cst_89 = arith.constant 9.99999974E-6 : f32
    %211 = vector.broadcast %cst_89 : f32 to vector<16x1xf32>
    %212 = arith.addf %208, %211 : vector<16x1xf32>
    %213 = math.rsqrt %212 : vector<16x1xf32>
    %214 = vector.broadcast %213 : vector<16x1xf32> to vector<16x32xf32>
    %215 = arith.mulf %210, %214 : vector<16x32xf32>
    %216 = vector.broadcast %195 : vector<1x32xf32> to vector<16x32xf32>
    %217 = arith.mulf %215, %216 : vector<16x32xf32>
    %218 = vector.broadcast %197 : vector<1x32xf32> to vector<16x32xf32>
    %219 = arith.addf %217, %218 : vector<16x32xf32>
    %c1_90 = arith.constant 1 : index
    %c0_91 = arith.constant 0 : index
    %c0_92 = arith.constant 0 : index
    %220 = vector.load %arg4[%c1_90, %c0_91, %c0_92] : memref<2x32x96xf32, #tpu.memory_space<vmem>>, vector<1x32x96xf32>
    %221 = vector.shape_cast %220 : vector<1x32x96xf32> to vector<32x96xf32>
    %cst_93 = arith.constant dense<0.000000e+00> : vector<16x96xf32>
    %222 = tpu.matmul %219, %221, %cst_93 {dimension_numbers = #tpu.dot_dimension_numbers<[1], [0], [0], [1], [0, 0, 1, 1], [], []>} : vector<16x32xf32>, vector<32x96xf32>, vector<16x96xf32> -> vector<16x96xf32>
    %c1_94 = arith.constant 1 : index
    %c0_95 = arith.constant 0 : index
    %c0_96 = arith.constant 0 : index
    %223 = vector.load %arg5[%c1_94, %c0_95, %c0_96] : memref<2x1x96xf32, #tpu.memory_space<vmem>>, vector<1x1x96xf32>
    %224 = vector.shape_cast %223 : vector<1x1x96xf32> to vector<1x96xf32>
    %225 = vector.broadcast %224 : vector<1x96xf32> to vector<16x96xf32>
    %226 = arith.addf %222, %225 : vector<16x96xf32>
    %c1_97 = arith.constant 1 : index
    %c0_98 = arith.constant 0 : index
    %c0_99 = arith.constant 0 : index
    %227 = vector.load %arg6[%c1_97, %c0_98, %c0_99] : memref<2x32x32xf32, #tpu.memory_space<vmem>>, vector<1x32x32xf32>
    %228 = vector.shape_cast %227 : vector<1x32x32xf32> to vector<32x32xf32>
    %cst_100 = arith.constant 0.000000e+00 : f32
    %229 = vector.broadcast %cst_100 : f32 to vector<16x32xf32>
    %230 = vector.extract_strided_slice %226 {offsets = [0, 0], sizes = [16, 8], strides = [1, 1]} : vector<16x96xf32> to vector<16x8xf32>
    %231 = vector.shape_cast %230 : vector<16x8xf32> to vector<2x8x8xf32>
    %232 = vector.extract_strided_slice %226 {offsets = [0, 32], sizes = [16, 8], strides = [1, 1]} : vector<16x96xf32> to vector<16x8xf32>
    %233 = vector.shape_cast %232 : vector<16x8xf32> to vector<2x8x8xf32>
    %234 = vector.extract_strided_slice %226 {offsets = [0, 64], sizes = [16, 8], strides = [1, 1]} : vector<16x96xf32> to vector<16x8xf32>
    %235 = vector.shape_cast %234 : vector<16x8xf32> to vector<2x8x8xf32>
    "tpu.trace_start"() <{level = 10 : i32, message = "bqd,bkd->bqk"}> : () -> ()
    %cst_101 = arith.constant dense<0.000000e+00> : vector<2x8x8xf32>
    %236 = tpu.matmul %231, %233, %cst_101 {dimension_numbers = #tpu.dot_dimension_numbers<[2], [2], [1], [1], [0, 0, 0, 1, 1, 1], [0], [0]>} : vector<2x8x8xf32>, vector<2x8x8xf32>, vector<2x8x8xf32> -> vector<2x8x8xf32>
    "tpu.trace_stop"() : () -> ()
    %cst_102 = arith.constant 0.353553385 : f32
    %237 = vector.broadcast %cst_102 : f32 to vector<2x8x8xf32>
    %238 = arith.mulf %236, %237 : vector<2x8x8xf32>
    %cst_103 = arith.constant dense<0xFF800000> : vector<2x8xf32>
    %239 = vector.multi_reduction <maximumf>, %238, %cst_103 [2] : vector<2x8x8xf32> to vector<2x8xf32>
    %240 = vector.shape_cast %239 : vector<2x8xf32> to vector<2x8x1xf32>
    %241 = vector.broadcast %240 : vector<2x8x1xf32> to vector<2x8x8xf32>
    %242 = arith.subf %238, %241 : vector<2x8x8xf32>
    %243 = math.exp %242 : vector<2x8x8xf32>
    %cst_104 = arith.constant dense<0.000000e+00> : vector<2x8xf32>
    %244 = vector.multi_reduction <add>, %243, %cst_104 [2] : vector<2x8x8xf32> to vector<2x8xf32>
    %245 = vector.shape_cast %244 : vector<2x8xf32> to vector<2x8x1xf32>
    %246 = tpu.reciprocal %245 {approx = true} : vector<2x8x1xf32> -> vector<2x8x1xf32>
    %247 = vector.broadcast %246 : vector<2x8x1xf32> to vector<2x8x8xf32>
    %248 = arith.mulf %243, %247 : vector<2x8x8xf32>
    "tpu.trace_start"() <{level = 10 : i32, message = "bqk,bkd->bqd"}> : () -> ()
    %cst_105 = arith.constant dense<0.000000e+00> : vector<2x8x8xf32>
    %249 = tpu.matmul %248, %235, %cst_105 {dimension_numbers = #tpu.dot_dimension_numbers<[2], [1], [1], [2], [0, 0, 0, 1, 1, 2], [0], [0]>} : vector<2x8x8xf32>, vector<2x8x8xf32>, vector<2x8x8xf32> -> vector<2x8x8xf32>
    "tpu.trace_stop"() : () -> ()
    %250 = vector.shape_cast %249 : vector<2x8x8xf32> to vector<16x8xf32>
    %251 = vector.extract_strided_slice %228 {offsets = [0, 0], sizes = [8, 32], strides = [1, 1]} : vector<32x32xf32> to vector<8x32xf32>
    %cst_106 = arith.constant dense<0.000000e+00> : vector<16x32xf32>
    %252 = tpu.matmul %250, %251, %cst_106 {dimension_numbers = #tpu.dot_dimension_numbers<[1], [0], [0], [1], [0, 0, 1, 1], [], []>} : vector<16x8xf32>, vector<8x32xf32>, vector<16x32xf32> -> vector<16x32xf32>
    %253 = arith.addf %229, %252 : vector<16x32xf32>
    %254 = vector.extract_strided_slice %226 {offsets = [0, 8], sizes = [16, 8], strides = [1, 1]} : vector<16x96xf32> to vector<16x8xf32>
    %255 = vector.shape_cast %254 : vector<16x8xf32> to vector<2x8x8xf32>
    %256 = vector.extract_strided_slice %226 {offsets = [0, 40], sizes = [16, 8], strides = [1, 1]} : vector<16x96xf32> to vector<16x8xf32>
    %257 = vector.shape_cast %256 : vector<16x8xf32> to vector<2x8x8xf32>
    %258 = vector.extract_strided_slice %226 {offsets = [0, 72], sizes = [16, 8], strides = [1, 1]} : vector<16x96xf32> to vector<16x8xf32>
    %259 = vector.shape_cast %258 : vector<16x8xf32> to vector<2x8x8xf32>
    "tpu.trace_start"() <{level = 10 : i32, message = "bqd,bkd->bqk"}> : () -> ()
    %cst_107 = arith.constant dense<0.000000e+00> : vector<2x8x8xf32>
    %260 = tpu.matmul %255, %257, %cst_107 {dimension_numbers = #tpu.dot_dimension_numbers<[2], [2], [1], [1], [0, 0, 0, 1, 1, 1], [0], [0]>} : vector<2x8x8xf32>, vector<2x8x8xf32>, vector<2x8x8xf32> -> vector<2x8x8xf32>
    "tpu.trace_stop"() : () -> ()
    %cst_108 = arith.constant 0.353553385 : f32
    %261 = vector.broadcast %cst_108 : f32 to vector<2x8x8xf32>
    %262 = arith.mulf %260, %261 : vector<2x8x8xf32>
    %cst_109 = arith.constant dense<0xFF800000> : vector<2x8xf32>
    %263 = vector.multi_reduction <maximumf>, %262, %cst_109 [2] : vector<2x8x8xf32> to vector<2x8xf32>
    %264 = vector.shape_cast %263 : vector<2x8xf32> to vector<2x8x1xf32>
    %265 = vector.broadcast %264 : vector<2x8x1xf32> to vector<2x8x8xf32>
    %266 = arith.subf %262, %265 : vector<2x8x8xf32>
    %267 = math.exp %266 : vector<2x8x8xf32>
    %cst_110 = arith.constant dense<0.000000e+00> : vector<2x8xf32>
    %268 = vector.multi_reduction <add>, %267, %cst_110 [2] : vector<2x8x8xf32> to vector<2x8xf32>
    %269 = vector.shape_cast %268 : vector<2x8xf32> to vector<2x8x1xf32>
    %270 = tpu.reciprocal %269 {approx = true} : vector<2x8x1xf32> -> vector<2x8x1xf32>
    %271 = vector.broadcast %270 : vector<2x8x1xf32> to vector<2x8x8xf32>
    %272 = arith.mulf %267, %271 : vector<2x8x8xf32>
    "tpu.trace_start"() <{level = 10 : i32, message = "bqk,bkd->bqd"}> : () -> ()
    %cst_111 = arith.constant dense<0.000000e+00> : vector<2x8x8xf32>
    %273 = tpu.matmul %272, %259, %cst_111 {dimension_numbers = #tpu.dot_dimension_numbers<[2], [1], [1], [2], [0, 0, 0, 1, 1, 2], [0], [0]>} : vector<2x8x8xf32>, vector<2x8x8xf32>, vector<2x8x8xf32> -> vector<2x8x8xf32>
    "tpu.trace_stop"() : () -> ()
    %274 = vector.shape_cast %273 : vector<2x8x8xf32> to vector<16x8xf32>
    %275 = vector.extract_strided_slice %228 {offsets = [8, 0], sizes = [8, 32], strides = [1, 1]} : vector<32x32xf32> to vector<8x32xf32>
    %cst_112 = arith.constant dense<0.000000e+00> : vector<16x32xf32>
    %276 = tpu.matmul %274, %275, %cst_112 {dimension_numbers = #tpu.dot_dimension_numbers<[1], [0], [0], [1], [0, 0, 1, 1], [], []>} : vector<16x8xf32>, vector<8x32xf32>, vector<16x32xf32> -> vector<16x32xf32>
    %277 = arith.addf %253, %276 : vector<16x32xf32>
    %278 = vector.extract_strided_slice %226 {offsets = [0, 16], sizes = [16, 8], strides = [1, 1]} : vector<16x96xf32> to vector<16x8xf32>
    %279 = vector.shape_cast %278 : vector<16x8xf32> to vector<2x8x8xf32>
    %280 = vector.extract_strided_slice %226 {offsets = [0, 48], sizes = [16, 8], strides = [1, 1]} : vector<16x96xf32> to vector<16x8xf32>
    %281 = vector.shape_cast %280 : vector<16x8xf32> to vector<2x8x8xf32>
    %282 = vector.extract_strided_slice %226 {offsets = [0, 80], sizes = [16, 8], strides = [1, 1]} : vector<16x96xf32> to vector<16x8xf32>
    %283 = vector.shape_cast %282 : vector<16x8xf32> to vector<2x8x8xf32>
    "tpu.trace_start"() <{level = 10 : i32, message = "bqd,bkd->bqk"}> : () -> ()
    %cst_113 = arith.constant dense<0.000000e+00> : vector<2x8x8xf32>
    %284 = tpu.matmul %279, %281, %cst_113 {dimension_numbers = #tpu.dot_dimension_numbers<[2], [2], [1], [1], [0, 0, 0, 1, 1, 1], [0], [0]>} : vector<2x8x8xf32>, vector<2x8x8xf32>, vector<2x8x8xf32> -> vector<2x8x8xf32>
    "tpu.trace_stop"() : () -> ()
    %cst_114 = arith.constant 0.353553385 : f32
    %285 = vector.broadcast %cst_114 : f32 to vector<2x8x8xf32>
    %286 = arith.mulf %284, %285 : vector<2x8x8xf32>
    %cst_115 = arith.constant dense<0xFF800000> : vector<2x8xf32>
    %287 = vector.multi_reduction <maximumf>, %286, %cst_115 [2] : vector<2x8x8xf32> to vector<2x8xf32>
    %288 = vector.shape_cast %287 : vector<2x8xf32> to vector<2x8x1xf32>
    %289 = vector.broadcast %288 : vector<2x8x1xf32> to vector<2x8x8xf32>
    %290 = arith.subf %286, %289 : vector<2x8x8xf32>
    %291 = math.exp %290 : vector<2x8x8xf32>
    %cst_116 = arith.constant dense<0.000000e+00> : vector<2x8xf32>
    %292 = vector.multi_reduction <add>, %291, %cst_116 [2] : vector<2x8x8xf32> to vector<2x8xf32>
    %293 = vector.shape_cast %292 : vector<2x8xf32> to vector<2x8x1xf32>
    %294 = tpu.reciprocal %293 {approx = true} : vector<2x8x1xf32> -> vector<2x8x1xf32>
    %295 = vector.broadcast %294 : vector<2x8x1xf32> to vector<2x8x8xf32>
    %296 = arith.mulf %291, %295 : vector<2x8x8xf32>
    "tpu.trace_start"() <{level = 10 : i32, message = "bqk,bkd->bqd"}> : () -> ()
    %cst_117 = arith.constant dense<0.000000e+00> : vector<2x8x8xf32>
    %297 = tpu.matmul %296, %283, %cst_117 {dimension_numbers = #tpu.dot_dimension_numbers<[2], [1], [1], [2], [0, 0, 0, 1, 1, 2], [0], [0]>} : vector<2x8x8xf32>, vector<2x8x8xf32>, vector<2x8x8xf32> -> vector<2x8x8xf32>
    "tpu.trace_stop"() : () -> ()
    %298 = vector.shape_cast %297 : vector<2x8x8xf32> to vector<16x8xf32>
    %299 = vector.extract_strided_slice %228 {offsets = [16, 0], sizes = [8, 32], strides = [1, 1]} : vector<32x32xf32> to vector<8x32xf32>
    %cst_118 = arith.constant dense<0.000000e+00> : vector<16x32xf32>
    %300 = tpu.matmul %298, %299, %cst_118 {dimension_numbers = #tpu.dot_dimension_numbers<[1], [0], [0], [1], [0, 0, 1, 1], [], []>} : vector<16x8xf32>, vector<8x32xf32>, vector<16x32xf32> -> vector<16x32xf32>
    %301 = arith.addf %277, %300 : vector<16x32xf32>
    %302 = vector.extract_strided_slice %226 {offsets = [0, 24], sizes = [16, 8], strides = [1, 1]} : vector<16x96xf32> to vector<16x8xf32>
    %303 = vector.shape_cast %302 : vector<16x8xf32> to vector<2x8x8xf32>
    %304 = vector.extract_strided_slice %226 {offsets = [0, 56], sizes = [16, 8], strides = [1, 1]} : vector<16x96xf32> to vector<16x8xf32>
    %305 = vector.shape_cast %304 : vector<16x8xf32> to vector<2x8x8xf32>
    %306 = vector.extract_strided_slice %226 {offsets = [0, 88], sizes = [16, 8], strides = [1, 1]} : vector<16x96xf32> to vector<16x8xf32>
    %307 = vector.shape_cast %306 : vector<16x8xf32> to vector<2x8x8xf32>
    "tpu.trace_start"() <{level = 10 : i32, message = "bqd,bkd->bqk"}> : () -> ()
    %cst_119 = arith.constant dense<0.000000e+00> : vector<2x8x8xf32>
    %308 = tpu.matmul %303, %305, %cst_119 {dimension_numbers = #tpu.dot_dimension_numbers<[2], [2], [1], [1], [0, 0, 0, 1, 1, 1], [0], [0]>} : vector<2x8x8xf32>, vector<2x8x8xf32>, vector<2x8x8xf32> -> vector<2x8x8xf32>
    "tpu.trace_stop"() : () -> ()
    %cst_120 = arith.constant 0.353553385 : f32
    %309 = vector.broadcast %cst_120 : f32 to vector<2x8x8xf32>
    %310 = arith.mulf %308, %309 : vector<2x8x8xf32>
    %cst_121 = arith.constant dense<0xFF800000> : vector<2x8xf32>
    %311 = vector.multi_reduction <maximumf>, %310, %cst_121 [2] : vector<2x8x8xf32> to vector<2x8xf32>
    %312 = vector.shape_cast %311 : vector<2x8xf32> to vector<2x8x1xf32>
    %313 = vector.broadcast %312 : vector<2x8x1xf32> to vector<2x8x8xf32>
    %314 = arith.subf %310, %313 : vector<2x8x8xf32>
    %315 = math.exp %314 : vector<2x8x8xf32>
    %cst_122 = arith.constant dense<0.000000e+00> : vector<2x8xf32>
    %316 = vector.multi_reduction <add>, %315, %cst_122 [2] : vector<2x8x8xf32> to vector<2x8xf32>
    %317 = vector.shape_cast %316 : vector<2x8xf32> to vector<2x8x1xf32>
    %318 = tpu.reciprocal %317 {approx = true} : vector<2x8x1xf32> -> vector<2x8x1xf32>
    %319 = vector.broadcast %318 : vector<2x8x1xf32> to vector<2x8x8xf32>
    %320 = arith.mulf %315, %319 : vector<2x8x8xf32>
    "tpu.trace_start"() <{level = 10 : i32, message = "bqk,bkd->bqd"}> : () -> ()
    %cst_123 = arith.constant dense<0.000000e+00> : vector<2x8x8xf32>
    %321 = tpu.matmul %320, %307, %cst_123 {dimension_numbers = #tpu.dot_dimension_numbers<[2], [1], [1], [2], [0, 0, 0, 1, 1, 2], [0], [0]>} : vector<2x8x8xf32>, vector<2x8x8xf32>, vector<2x8x8xf32> -> vector<2x8x8xf32>
    "tpu.trace_stop"() : () -> ()
    %322 = vector.shape_cast %321 : vector<2x8x8xf32> to vector<16x8xf32>
    %323 = vector.extract_strided_slice %228 {offsets = [24, 0], sizes = [8, 32], strides = [1, 1]} : vector<32x32xf32> to vector<8x32xf32>
    %cst_124 = arith.constant dense<0.000000e+00> : vector<16x32xf32>
    %324 = tpu.matmul %322, %323, %cst_124 {dimension_numbers = #tpu.dot_dimension_numbers<[1], [0], [0], [1], [0, 0, 1, 1], [], []>} : vector<16x8xf32>, vector<8x32xf32>, vector<16x32xf32> -> vector<16x32xf32>
    %325 = arith.addf %301, %324 : vector<16x32xf32>
    %326 = arith.addf %193, %325 : vector<16x32xf32>
    %c1_125 = arith.constant 1 : index
    %c0_126 = arith.constant 0 : index
    %c0_127 = arith.constant 0 : index
    %327 = vector.load %arg7[%c1_125, %c0_126, %c0_127] : memref<2x1x32xf32, #tpu.memory_space<vmem>>, vector<1x1x32xf32>
    %328 = vector.shape_cast %327 : vector<1x1x32xf32> to vector<1x32xf32>
    %329 = vector.broadcast %328 : vector<1x32xf32> to vector<16x32xf32>
    %330 = arith.addf %326, %329 : vector<16x32xf32>
    %c1_128 = arith.constant 1 : index
    %c0_129 = arith.constant 0 : index
    %c0_130 = arith.constant 0 : index
    %331 = vector.load %arg8[%c1_128, %c0_129, %c0_130] : memref<2x1x32xf32, #tpu.memory_space<vmem>>, vector<1x1x32xf32>
    %332 = vector.shape_cast %331 : vector<1x1x32xf32> to vector<1x32xf32>
    %c1_131 = arith.constant 1 : index
    %c0_132 = arith.constant 0 : index
    %c0_133 = arith.constant 0 : index
    %333 = vector.load %arg9[%c1_131, %c0_132, %c0_133] : memref<2x1x32xf32, #tpu.memory_space<vmem>>, vector<1x1x32xf32>
    %334 = vector.shape_cast %333 : vector<1x1x32xf32> to vector<1x32xf32>
    %cst_134 = arith.constant dense<0.000000e+00> : vector<16xf32>
    %335 = vector.multi_reduction <add>, %330, %cst_134 [1] : vector<16x32xf32> to vector<16xf32>
    %336 = vector.shape_cast %335 : vector<16xf32> to vector<16x1xf32>
    %cst_135 = arith.constant 3.200000e+01 : f32
    %337 = vector.broadcast %cst_135 : f32 to vector<16x1xf32>
    %338 = arith.divf %336, %337 : vector<16x1xf32>
    %339 = vector.broadcast %338 : vector<16x1xf32> to vector<16x32xf32>
    %340 = arith.subf %330, %339 : vector<16x32xf32>
    %341 = arith.mulf %340, %340 : vector<16x32xf32>
    %cst_136 = arith.constant dense<0.000000e+00> : vector<16xf32>
    %342 = vector.multi_reduction <add>, %341, %cst_136 [1] : vector<16x32xf32> to vector<16xf32>
    %343 = vector.shape_cast %342 : vector<16xf32> to vector<16x1xf32>
    %cst_137 = arith.constant 3.200000e+01 : f32
    %344 = vector.broadcast %cst_137 : f32 to vector<16x1xf32>
    %345 = arith.divf %343, %344 : vector<16x1xf32>
    %346 = vector.broadcast %338 : vector<16x1xf32> to vector<16x32xf32>
    %347 = arith.subf %330, %346 : vector<16x32xf32>
    %cst_138 = arith.constant 9.99999974E-6 : f32
    %348 = vector.broadcast %cst_138 : f32 to vector<16x1xf32>
    %349 = arith.addf %345, %348 : vector<16x1xf32>
    %350 = math.rsqrt %349 : vector<16x1xf32>
    %351 = vector.broadcast %350 : vector<16x1xf32> to vector<16x32xf32>
    %352 = arith.mulf %347, %351 : vector<16x32xf32>
    %353 = vector.broadcast %332 : vector<1x32xf32> to vector<16x32xf32>
    %354 = arith.mulf %352, %353 : vector<16x32xf32>
    %355 = vector.broadcast %334 : vector<1x32xf32> to vector<16x32xf32>
    %356 = arith.addf %354, %355 : vector<16x32xf32>
    %c1_139 = arith.constant 1 : index
    %c0_140 = arith.constant 0 : index
    %c0_141 = arith.constant 0 : index
    %357 = vector.load %arg10[%c1_139, %c0_140, %c0_141] : memref<2x32x64xf32, #tpu.memory_space<vmem>>, vector<1x32x64xf32>
    %358 = vector.shape_cast %357 : vector<1x32x64xf32> to vector<32x64xf32>
    %cst_142 = arith.constant dense<0.000000e+00> : vector<16x64xf32>
    %359 = tpu.matmul %356, %358, %cst_142 {dimension_numbers = #tpu.dot_dimension_numbers<[1], [0], [0], [1], [0, 0, 1, 1], [], []>} : vector<16x32xf32>, vector<32x64xf32>, vector<16x64xf32> -> vector<16x64xf32>
    %c1_143 = arith.constant 1 : index
    %c0_144 = arith.constant 0 : index
    %c0_145 = arith.constant 0 : index
    %360 = vector.load %arg11[%c1_143, %c0_144, %c0_145] : memref<2x1x64xf32, #tpu.memory_space<vmem>>, vector<1x1x64xf32>
    %361 = vector.shape_cast %360 : vector<1x1x64xf32> to vector<1x64xf32>
    %362 = vector.broadcast %361 : vector<1x64xf32> to vector<16x64xf32>
    %363 = arith.addf %359, %362 : vector<16x64xf32>
    %cst_146 = arith.constant 5.000000e-01 : f32
    %364 = vector.broadcast %cst_146 : f32 to vector<16x64xf32>
    %365 = arith.mulf %364, %363 : vector<16x64xf32>
    %cst_147 = arith.constant 0.707106769 : f32
    %366 = vector.broadcast %cst_147 : f32 to vector<16x64xf32>
    %367 = arith.mulf %363, %366 : vector<16x64xf32>
    %368 = math.erf %367 : vector<16x64xf32>
    %cst_148 = arith.constant 1.000000e+00 : f32
    %369 = vector.broadcast %cst_148 : f32 to vector<16x64xf32>
    %370 = arith.addf %369, %368 : vector<16x64xf32>
    %371 = arith.mulf %365, %370 : vector<16x64xf32>
    %c1_149 = arith.constant 1 : index
    %c0_150 = arith.constant 0 : index
    %c0_151 = arith.constant 0 : index
    %372 = vector.load %arg12[%c1_149, %c0_150, %c0_151] : memref<2x64x32xf32, #tpu.memory_space<vmem>>, vector<1x64x32xf32>
    %373 = vector.shape_cast %372 : vector<1x64x32xf32> to vector<64x32xf32>
    %cst_152 = arith.constant dense<0.000000e+00> : vector<16x32xf32>
    %374 = tpu.matmul %371, %373, %cst_152 {dimension_numbers = #tpu.dot_dimension_numbers<[1], [0], [0], [1], [0, 0, 1, 1], [], []>} : vector<16x64xf32>, vector<64x32xf32>, vector<16x32xf32> -> vector<16x32xf32>
    %375 = arith.addf %330, %374 : vector<16x32xf32>
    %c1_153 = arith.constant 1 : index
    %c0_154 = arith.constant 0 : index
    %c0_155 = arith.constant 0 : index
    %376 = vector.load %arg13[%c1_153, %c0_154, %c0_155] : memref<2x1x32xf32, #tpu.memory_space<vmem>>, vector<1x1x32xf32>
    %377 = vector.shape_cast %376 : vector<1x1x32xf32> to vector<1x32xf32>
    %378 = vector.broadcast %377 : vector<1x32xf32> to vector<16x32xf32>
    %379 = arith.addf %375, %378 : vector<16x32xf32>
    %c0_156 = arith.constant 0 : index
    %c0_157 = arith.constant 0 : index
    %380 = vector.load %arg14[%c0_156, %c0_157] : memref<1x32xf32, #tpu.memory_space<vmem>>, vector<1x32xf32>
    %c0_158 = arith.constant 0 : index
    %c0_159 = arith.constant 0 : index
    %381 = vector.load %arg15[%c0_158, %c0_159] : memref<1x32xf32, #tpu.memory_space<vmem>>, vector<1x32xf32>
    %cst_160 = arith.constant dense<0.000000e+00> : vector<16xf32>
    %382 = vector.multi_reduction <add>, %379, %cst_160 [1] : vector<16x32xf32> to vector<16xf32>
    %383 = vector.shape_cast %382 : vector<16xf32> to vector<16x1xf32>
    %cst_161 = arith.constant 3.200000e+01 : f32
    %384 = vector.broadcast %cst_161 : f32 to vector<16x1xf32>
    %385 = arith.divf %383, %384 : vector<16x1xf32>
    %386 = vector.broadcast %385 : vector<16x1xf32> to vector<16x32xf32>
    %387 = arith.subf %379, %386 : vector<16x32xf32>
    %388 = arith.mulf %387, %387 : vector<16x32xf32>
    %cst_162 = arith.constant dense<0.000000e+00> : vector<16xf32>
    %389 = vector.multi_reduction <add>, %388, %cst_162 [1] : vector<16x32xf32> to vector<16xf32>
    %390 = vector.shape_cast %389 : vector<16xf32> to vector<16x1xf32>
    %cst_163 = arith.constant 3.200000e+01 : f32
    %391 = vector.broadcast %cst_163 : f32 to vector<16x1xf32>
    %392 = arith.divf %390, %391 : vector<16x1xf32>
    %393 = vector.broadcast %385 : vector<16x1xf32> to vector<16x32xf32>
    %394 = arith.subf %379, %393 : vector<16x32xf32>
    %cst_164 = arith.constant 9.99999974E-6 : f32
    %395 = vector.broadcast %cst_164 : f32 to vector<16x1xf32>
    %396 = arith.addf %392, %395 : vector<16x1xf32>
    %397 = math.rsqrt %396 : vector<16x1xf32>
    %398 = vector.broadcast %397 : vector<16x1xf32> to vector<16x32xf32>
    %399 = arith.mulf %394, %398 : vector<16x32xf32>
    %400 = vector.broadcast %380 : vector<1x32xf32> to vector<16x32xf32>
    %401 = arith.mulf %399, %400 : vector<16x32xf32>
    %402 = vector.broadcast %381 : vector<1x32xf32> to vector<16x32xf32>
    %403 = arith.addf %401, %402 : vector<16x32xf32>
    %c0_165 = arith.constant 0 : index
    %c0_166 = arith.constant 0 : index
    %404 = vector.load %arg16[%c0_165, %c0_166] : memref<32x128xf32, #tpu.memory_space<vmem>>, vector<32x128xf32>
    %cst_167 = arith.constant dense<0.000000e+00> : vector<16x128xf32>
    %405 = tpu.matmul %403, %404, %cst_167 {dimension_numbers = #tpu.dot_dimension_numbers<[1], [0], [0], [1], [0, 0, 1, 1], [], []>} : vector<16x32xf32>, vector<32x128xf32>, vector<16x128xf32> -> vector<16x128xf32>
    %c0_168 = arith.constant 0 : index
    %c0_169 = arith.constant 0 : index
    %406 = vector.load %arg17[%c0_168, %c0_169] : memref<1x128xf32, #tpu.memory_space<vmem>>, vector<1x128xf32>
    %407 = vector.broadcast %406 : vector<1x128xf32> to vector<16x128xf32>
    %408 = arith.addf %405, %407 : vector<16x128xf32>
    %c0_170 = arith.constant 0 : index
    %c0_171 = arith.constant 0 : index
    %409 = vector.load %arg18[%c0_170, %c0_171] : memref<16x128xf32, #tpu.memory_space<vmem>>, vector<16x128xf32>
    tpu.vector_store %arg18[%c0_170, %c0_171], %408 {strides = array<i32>} : memref<16x128xf32, #tpu.memory_space<vmem>>, vector<16x128xf32>,
    return
  }
}

</mosaic_0001>

<llo_original>
// kernel: tpu_custom_call.1
$region0: #{tpu_custom_call.1}
  #allocation0 [shape = 'u32[]', space=smem, size = 0x4, offset = 0x4, fixed_abs, tag = 'smem constant byte address 0x4 - core index']
  #allocation1 [shape = 'u32[144,128]{1,0:T(1,128)}', space=vmem, size = 0x12000, scoped, tag = 'internal scratch']
  %s0 = inlined_call_operand.vmem [shape: s32[16,1], index: 0, kind: input, shape index: {}]
  %s1 = inlined_call_operand.vmem [shape: f32[64,32], index: 1, kind: input, shape index: {}]
  %s2 = inlined_call_operand.vmem [shape: f32[2,1,32], index: 2, kind: input, shape index: {}]
  %s3 = inlined_call_operand.vmem [shape: f32[2,1,32], index: 3, kind: input, shape index: {}]
  %s4 = inlined_call_operand.vmem [shape: f32[2,32,96], index: 4, kind: input, shape index: {}]
  %s5 = inlined_call_operand.vmem [shape: f32[2,1,96], index: 5, kind: input, shape index: {}]
  %s6 = inlined_call_operand.vmem [shape: f32[2,32,32], index: 6, kind: input, shape index: {}]
  %s7 = inlined_call_operand.vmem [shape: f32[2,1,32], index: 7, kind: input, shape index: {}]
  %s8 = inlined_call_operand.vmem [shape: f32[2,1,32], index: 8, kind: input, shape index: {}]
  %s9 = inlined_call_operand.vmem [shape: f32[2,1,32], index: 9, kind: input, shape index: {}]
  %s10 = inlined_call_operand.vmem [shape: f32[2,32,64], index: 10, kind: input, shape index: {}]
  %s11 = inlined_call_operand.vmem [shape: f32[2,1,64], index: 11, kind: input, shape index: {}]
  %s12 = inlined_call_operand.vmem [shape: f32[2,64,32], index: 12, kind: input, shape index: {}]
  %s13 = inlined_call_operand.vmem [shape: f32[2,1,32], index: 13, kind: input, shape index: {}]
  %s14 = inlined_call_operand.vmem [shape: f32[1,32], index: 14, kind: input, shape index: {}]
  %s15 = inlined_call_operand.vmem [shape: f32[1,32], index: 15, kind: input, shape index: {}]
  %s16 = inlined_call_operand.vmem [shape: f32[32,128], index: 16, kind: input, shape index: {}]
  %s17 = inlined_call_operand.vmem [shape: f32[1,128], index: 17, kind: input, shape index: {}]
  %s18 = inlined_call_operand.hbm [shape: f32[16,128], index: 18, kind: output, shape index: {}]
  %s19 = sld [smem:[#allocation0]]
  $region82: #{tpu_custom_call.1} parent=0
    _
  %s21 = ssub.s32 1, %s19
  %s22 = scalar_select 0, %s21, %s19
  $region1: #{tpu_custom_call.1} parent=0
    #allocation2 [shape = 'u8[8192]{0}', space=vmem, size = 0x2000, scoped, tag = 'output window, operand 0, single buffered']
    #allocation3 [shape = 's32[1]{0}', space=sflag, size = 0x4, scoped, tag = 'scoped memory for tpu_custom_call.1']
    %23 = vsyncpa [#allocation3], 0
    // Predicated region
    $region2: #{tpu_custom_call.1} parent=1 // pred_check
      _
    $region3: #{tpu_custom_call.1} parent=1 // pred_check_branch
      %25 = sbr.rel (0) target = $region5
    $region4: #{tpu_custom_call.1} parent=1 // pred_region
      _
    $region5: #{tpu_custom_call.1} parent=1 // pred_fallthru
      _
    // Predicated region
    $region6: #{tpu_custom_call.1} parent=1 // pred_check
      _
    $region7: #{tpu_custom_call.1} parent=1 // pred_check_branch
      %27 = sbr.rel (0) target = $region9
    $region8: #{tpu_custom_call.1} parent=1 // pred_region
      _
    $region9: #{tpu_custom_call.1} parent=1 // pred_fallthru
      _
    // Predicated region
    $region10: #{tpu_custom_call.1} parent=1 // pred_check
      _
    $region11: #{tpu_custom_call.1} parent=1 // pred_check_branch
      %29 = sbr.rel (0) target = $region13
    $region12: #{tpu_custom_call.1} parent=1 // pred_region
      _
    $region13: #{tpu_custom_call.1} parent=1 // pred_fallthru
      _
    // Predicated region
    $region14: #{tpu_custom_call.1} parent=1 // pred_check
      _
    $region15: #{tpu_custom_call.1} parent=1 // pred_check_branch
      %31 = sbr.rel (0) target = $region17
    $region16: #{tpu_custom_call.1} parent=1 // pred_region
      _
    $region17: #{tpu_custom_call.1} parent=1 // pred_fallthru
      _
    // Predicated region
    $region18: #{tpu_custom_call.1} parent=1 // pred_check
      _
    $region19: #{tpu_custom_call.1} parent=1 // pred_check_branch
      %33 = sbr.rel (0) target = $region21
    $region20: #{tpu_custom_call.1} parent=1 // pred_region
      _
    $region21: #{tpu_custom_call.1} parent=1 // pred_fallthru
      _
    // Predicated region
    $region22: #{tpu_custom_call.1} parent=1 // pred_check
      _
    $region23: #{tpu_custom_call.1} parent=1 // pred_check_branch
      %35 = sbr.rel (0) target = $region25
    $region24: #{tpu_custom_call.1} parent=1 // pred_region
      _
    $region25: #{tpu_custom_call.1} parent=1 // pred_fallthru
      _
    // Predicated region
    $region26: #{tpu_custom_call.1} parent=1 // pred_check
      _
    $region27: #{tpu_custom_call.1} parent=1 // pred_check_branch
      %37 = sbr.rel (0) target = $region29
    $region28: #{tpu_custom_call.1} parent=1 // pred_region
      _
    $region29: #{tpu_custom_call.1} parent=1 // pred_fallthru
      _
    // Predicated region
    $region30: #{tpu_custom_call.1} parent=1 // pred_check
      _
    $region31: #{tpu_custom_call.1} parent=1 // pred_check_branch
      %39 = sbr.rel (0) target = $region33
    $region32: #{tpu_custom_call.1} parent=1 // pred_region
      _
    $region33: #{tpu_custom_call.1} parent=1 // pred_fallthru
      _
    // Predicated region
    $region34: #{tpu_custom_call.1} parent=1 // pred_check
      _
    $region35: #{tpu_custom_call.1} parent=1 // pred_check_branch
      %41 = sbr.rel (0) target = $region37
    $region36: #{tpu_custom_call.1} parent=1 // pred_region
      _
    $region37: #{tpu_custom_call.1} parent=1 // pred_fallthru
      _
    // Predicated region
    $region38: #{tpu_custom_call.1} parent=1 // pred_check
      _
    $region39: #{tpu_custom_call.1} parent=1 // pred_check_branch
      %43 = sbr.rel (0) target = $region41
    $region40: #{tpu_custom_call.1} parent=1 // pred_region
      _
    $region41: #{tpu_custom_call.1} parent=1 // pred_fallthru
      _
    // Predicated region
    $region42: #{tpu_custom_call.1} parent=1 // pred_check
      _
    $region43: #{tpu_custom_call.1} parent=1 // pred_check_branch
      %45 = sbr.rel (0) target = $region45
    $region44: #{tpu_custom_call.1} parent=1 // pred_region
      _
    $region45: #{tpu_custom_call.1} parent=1 // pred_fallthru
      _
    // Predicated region
    $region46: #{tpu_custom_call.1} parent=1 // pred_check
      _
    $region47: #{tpu_custom_call.1} parent=1 // pred_check_branch
      %47 = sbr.rel (0) target = $region49
    $region48: #{tpu_custom_call.1} parent=1 // pred_region
      _
    $region49: #{tpu_custom_call.1} parent=1 // pred_fallthru
      _
    // Predicated region
    $region50: #{tpu_custom_call.1} parent=1 // pred_check
      _
    $region51: #{tpu_custom_call.1} parent=1 // pred_check_branch
      %49 = sbr.rel (0) target = $region53
    $region52: #{tpu_custom_call.1} parent=1 // pred_region
      _
    $region53: #{tpu_custom_call.1} parent=1 // pred_fallthru
      _
    // Predicated region
    $region54: #{tpu_custom_call.1} parent=1 // pred_check
      _
    $region55: #{tpu_custom_call.1} parent=1 // pred_check_branch
      %51 = sbr.rel (0) target = $region57
    $region56: #{tpu_custom_call.1} parent=1 // pred_region
      _
    $region57: #{tpu_custom_call.1} parent=1 // pred_fallthru
      _
    // Predicated region
    $region58: #{tpu_custom_call.1} parent=1 // pred_check
      _
    $region59: #{tpu_custom_call.1} parent=1 // pred_check_branch
      %53 = sbr.rel (0) target = $region61
    $region60: #{tpu_custom_call.1} parent=1 // pred_region
      _
    $region61: #{tpu_custom_call.1} parent=1 // pred_fallthru
      _
    // Predicated region
    $region62: #{tpu_custom_call.1} parent=1 // pred_check
      _
    $region63: #{tpu_custom_call.1} parent=1 // pred_check_branch
      %55 = sbr.rel (0) target = $region65
    $region64: #{tpu_custom_call.1} parent=1 // pred_region
      _
    $region65: #{tpu_custom_call.1} parent=1 // pred_fallthru
      _
    // Predicated region
    $region66: #{tpu_custom_call.1} parent=1 // pred_check
      _
    $region67: #{tpu_custom_call.1} parent=1 // pred_check_branch
      %57 = sbr.rel (0) target = $region69
    $region68: #{tpu_custom_call.1} parent=1 // pred_region
      _
    $region69: #{tpu_custom_call.1} parent=1 // pred_fallthru
      _
    // Predicated region
    $region70: #{tpu_custom_call.1} parent=1 // pred_check
      _
    $region71: #{tpu_custom_call.1} parent=1 // pred_check_branch
      %59 = sbr.rel (0) target = $region73
    $region72: #{tpu_custom_call.1} parent=1 // pred_region
      _
    $region73: #{tpu_custom_call.1} parent=1 // pred_fallthru
      _
    %v60 = vld [vmem:[%s0] sm:$0xff]
    %v61 = vld [vmem:[%s0 + $0x8] sm:$0xff]
    %v62 = vlaneseq
    %v63 = vand.u32 %v62, 127
    %64 = vset.pattern.permute.xlu0 0
    %65 = vperm.xlu0 %64, %v60
    %v66 = vpop.permute.xlu0 %65
    %67 = vset.pattern.permute.xlu0 0
    %68 = vperm.xlu0 %67, %v61
    %v69 = vpop.permute.xlu0 %68
    %vm70 = vcmp.eq.s32.totalorder %v63, %v66
    %vm71 = vcmp.eq.s32.totalorder %v63, %v69
    %v72 = vsel %vm70, 1, 0
    %v73 = vsel %vm71, 1, 0
    %v74 = vcvt.s32.f32 %v72
    %v75 = vcvt.s32.f32 %v73
    %v76 = vld [vmem:[%s1] sm:$0xff]
    %v77 = vld [vmem:[%s1 + $0x8] sm:$0xff]
    %v78 = vld [vmem:[%s1 + $0x10] sm:$0xff]
    %v79 = vld [vmem:[%s1 + $0x18] sm:$0xff]
    %v80 = vld [vmem:[%s1 + $0x20] sm:$0xff]
    %v81 = vld [vmem:[%s1 + $0x28] sm:$0xff]
    %v82 = vld [vmem:[%s1 + $0x30] sm:$0xff]
    %v83 = vld [vmem:[%s1 + $0x38] sm:$0xff]
    %vm84 = vcmask 523264
    %v86 = vsel %vm84, %v74, 0
    %v89 = vsel %vm84, %v75, 0
    %91 = vmatprep.subr.mxu0 0.0
    %92 = vmatpush1.msra.mxu0 %v76
    %93 = vmatprep.subr.mxu0 0.0
    %94 = vmatpush1.msra.mxu0 %v77
    %95 = vmatprep.subr.mxu0 0.0
    %96 = vmatpush1.msra.mxu0 %v78
    %97 = vmatprep.subr.mxu0 0.0
    %98 = vmatpush1.msra.mxu0 %v79
    %99 = vmatprep.subr.mxu0 0.0
    %100 = vmatpush1.msra.mxu0 %v80
    %101 = vmatprep.subr.mxu0 0.0
    %102 = vmatpush1.msra.mxu0 %v81
    %103 = vmatprep.subr.mxu0 0.0
    %104 = vmatpush1.msra.mxu0 %v82
    %105 = vmatprep.subr.mxu0 0.0
    %106 = vmatpush1.msra.mxu0 %v83
    %107 = vmatprep.subr.mxu0 0.0
    %108 = vmatpush1.msra.mxu0 0.0
    %109 = vmatprep.subr.mxu0 0.0
    %110 = vmatpush1.msra.mxu0 0.0
    %111 = vmatprep.subr.mxu0 0.0
    %112 = vmatpush1.msra.mxu0 0.0
    %113 = vmatprep.subr.mxu0 0.0
    %114 = vmatpush1.msra.mxu0 0.0
    %115 = vmatprep.subr.mxu0 0.0
    %116 = vmatpush1.msra.mxu0 0.0
    %117 = vmatprep.subr.mxu0 0.0
    %118 = vmatpush1.msra.mxu0 0.0
    %119 = vmatprep.subr.mxu0 0.0
    %120 = vmatpush1.msra.mxu0 0.0
    %121 = vmatprep.subr.mxu0 0.0
    %122 = vmatpush1.msra.mxu0 0.0
    %123 = vmatprep.subr.mxu0 0.0
    %124 = vmatpush1.msra.mxu0 0.0
    %125 = vmatprep.subr.mxu0 0.0
    %126 = vmatpush1.msra.mxu0 0.0
    %127 = vmatprep.subr.mxu0 0.0
    %128 = vmatpush1.msra.mxu0 0.0
    %129 = vmatprep.subr.mxu0 0.0
    %130 = vmatpush1.msra.mxu0 0.0
    %131 = vmatprep.subr.mxu0 0.0
    %132 = vmatpush1.msra.mxu0 0.0
    %133 = vmatprep.subr.mxu0 0.0
    %134 = vmatpush1.msra.mxu0 0.0
    %135 = vmatprep.subr.mxu0 0.0
    %136 = vmatpush1.msra.mxu0 0.0
    %137 = vmatprep.subr.mxu0 0.0
    %138 = vmatpush1.msra.mxu0 0.0
    %139 = vmatprep.subr.mxu0 0.0
    %140 = vmatpush1.msra.mxu0 0.0
    %141 = vmatprep.subr.mxu0 0.0
    %142 = vmatpush1.msra.mxu0 0.0
    %143 = vmatprep.subr.mxu0 0.0
    %144 = vmatpush1.msra.mxu0 0.0
    %145 = vmatprep.subr.mxu0 0.0
    %146 = vmatpush1.msra.mxu0 0.0
    %147 = vmatprep.subr.mxu0 0.0
    %148 = vmatpush1.msra.mxu0 0.0
    %149 = vmatprep.subr.mxu0 0.0
    %150 = vmatpush1.msra.mxu0 0.0
    %151 = vmatprep.subr.mxu0 0.0
    %152 = vmatpush1.msra.mxu0 0.0
    %153 = vmatprep.subr.mxu0 0.0
    %154 = vmatpush1.msra.mxu0 0.0
    %155 = vmatprep.mubr.f32.mxu0 0.0
    %156 = vmatmul.mubr.f32.gmra.mrb[0].mxu0 %v86
    %v157 = vpop.f32.mrb[0].mxu0
    %v158 = vadd.f32 0.0, %v157
    %v159 = vpop.f32.mrb[0].mxu0
    %160 = vmatprep.mubr.f32.mxu0 0.0
    %161 = vmatmul.mubr.f32.gmra.mrb[0].mxu0 %v89
    %v162 = vpop.f32.mrb[0].mxu0
    %v163 = vadd.f32 0.0, %v162
    %v164 = vpop.f32.mrb[0].mxu0
    %165 = vdwg.mxu0
    %v166 = vld [vmem:[%s2] sm:$0x1]
    %v167 = vld [vmem:[%s3] sm:$0x1]
    %vm168 = vcmask 261120
    %v169 = vsel %vm168, %v158, 0.0
    %170 = vadd.xlane.f32.xlu0 %v169
    %v171 = vpop.xlane.xlu0 %170
    %v172 = vsel %vm168, %v163, 0.0
    %173 = vadd.xlane.f32.xlu0 %v172
    %v174 = vpop.xlane.xlu0 %173
    %v175 = vrcp.pop 32.0
    %v176 = vmul.f32 %v171, %v175
    %v177 = vmul.f32 %v174, %v175
    %v178 = vsub.f32 %v158, %v176
    %v179 = vsub.f32 %v163, %v177
    %v180 = vmul.f32 %v178, %v178
    %v181 = vmul.f32 %v179, %v179
    %v182 = vsel %vm168, %v180, 0.0
    %183 = vadd.xlane.f32.xlu0 %v182
    %v184 = vpop.xlane.xlu0 %183
    %v185 = vsel %vm168, %v181, 0.0
    %186 = vadd.xlane.f32.xlu0 %v185
    %v187 = vpop.xlane.xlu0 %186
    %v188 = vmul.f32 %v184, %v175
    %v189 = vmul.f32 %v187, %v175
    %v190 = vadd.f32 %v188, 1e-05
    %v191 = vadd.f32 %v189, 1e-05
    %v192 = vrsqrt.pop %v190
    %v193 = vrsqrt.pop %v191
    %v194 = vmul.f32 %v178, %v192
    %v195 = vmul.f32 %v179, %v193
    %v197 = vlaneseq
    %v198 = vshrl.u32 %v197, 7
    %v199 = vsub.s32 0, %v198
    %v200 = vrot.slane %v166, %v199
    %v202 = vmul.f32 %v194, %v200
    %v203 = vmul.f32 %v195, %v200
    %v205 = vlaneseq
    %v206 = vshrl.u32 %v205, 7
    %v207 = vsub.s32 0, %v206
    %v208 = vrot.slane %v167, %v207
    %v210 = vadd.f32 %v202, %v208
    %v211 = vadd.f32 %v203, %v208
    %v212 = vld [vmem:[%s4] sm:$0xff]
    %v213 = vld [vmem:[%s4 + $0x8] sm:$0xff]
    %v214 = vld [vmem:[%s4 + $0x10] sm:$0xff]
    %v215 = vld [vmem:[%s4 + $0x18] sm:$0xff]
    %v216 = vld [vmem:[%s5] sm:$0x1]
    %v218 = vlaneseq
    %v219 = vshrl.u32 %v218, 7
    %v220 = vsub.s32 0, %v219
    %v221 = vrot.slane %v216, %v220
    %v224 = vsel %vm168, %v210, 0
    %v227 = vsel %vm168, %v211, 0
    %229 = vmatprep.subr.mxu0 0.0
    %230 = vmatpush1.msra.mxu0 %v212
    %231 = vmatprep.subr.mxu0 0.0
    %232 = vmatpush1.msra.mxu0 %v213
    %233 = vmatprep.subr.mxu0 0.0
    %234 = vmatpush1.msra.mxu0 %v214
    %235 = vmatprep.subr.mxu0 0.0
    %236 = vmatpush1.msra.mxu0 %v215
    %237 = vmatprep.subr.mxu0 0.0
    %238 = vmatpush1.msra.mxu0 0.0
    %239 = vmatprep.subr.mxu0 0.0
    %240 = vmatpush1.msra.mxu0 0.0
    %241 = vmatprep.subr.mxu0 0.0
    %242 = vmatpush1.msra.mxu0 0.0
    %243 = vmatprep.subr.mxu0 0.0
    %244 = vmatpush1.msra.mxu0 0.0
    %245 = vmatprep.subr.mxu0 0.0
    %246 = vmatpush1.msra.mxu0 0.0
    %247 = vmatprep.subr.mxu0 0.0
    %248 = vmatpush1.msra.mxu0 0.0
    %249 = vmatprep.subr.mxu0 0.0
    %250 = vmatpush1.msra.mxu0 0.0
    %251 = vmatprep.subr.mxu0 0.0
    %252 = vmatpush1.msra.mxu0 0.0
    %253 = vmatprep.subr.mxu0 0.0
    %254 = vmatpush1.msra.mxu0 0.0
    %255 = vmatprep.subr.mxu0 0.0
    %256 = vmatpush1.msra.mxu0 0.0
    %257 = vmatprep.subr.mxu0 0.0
    %258 = vmatpush1.msra.mxu0 0.0
    %259 = vmatprep.subr.mxu0 0.0
    %260 = vmatpush1.msra.mxu0 0.0
    %261 = vmatprep.subr.mxu0 0.0
    %262 = vmatpush1.msra.mxu0 0.0
    %263 = vmatprep.subr.mxu0 0.0
    %264 = vmatpush1.msra.mxu0 0.0
    %265 = vmatprep.subr.mxu0 0.0
    %266 = vmatpush1.msra.mxu0 0.0
    %267 = vmatprep.subr.mxu0 0.0
    %268 = vmatpush1.msra.mxu0 0.0
    %269 = vmatprep.subr.mxu0 0.0
    %270 = vmatpush1.msra.mxu0 0.0
    %271 = vmatprep.subr.mxu0 0.0
    %272 = vmatpush1.msra.mxu0 0.0
    %273 = vmatprep.subr.mxu0 0.0
    %274 = vmatpush1.msra.mxu0 0.0
    %275 = vmatprep.subr.mxu0 0.0
    %276 = vmatpush1.msra.mxu0 0.0
    %277 = vmatprep.subr.mxu0 0.0
    %278 = vmatpush1.msra.mxu0 0.0
    %279 = vmatprep.subr.mxu0 0.0
    %280 = vmatpush1.msra.mxu0 0.0
    %281 = vmatprep.subr.mxu0 0.0
    %282 = vmatpush1.msra.mxu0 0.0
    %283 = vmatprep.subr.mxu0 0.0
    %284 = vmatpush1.msra.mxu0 0.0
    %285 = vmatprep.subr.mxu0 0.0
    %286 = vmatpush1.msra.mxu0 0.0
    %287 = vmatprep.subr.mxu0 0.0
    %288 = vmatpush1.msra.mxu0 0.0
    %289 = vmatprep.subr.mxu0 0.0
    %290 = vmatpush1.msra.mxu0 0.0
    %291 = vmatprep.subr.mxu0 0.0
    %292 = vmatpush1.msra.mxu0 0.0
    %293 = vmatprep.mubr.f32.mxu0 0.0
    %294 = vmatmul.mubr.f32.gmra.mrb[0].mxu0 %v224
    %v295 = vpop.f32.mrb[0].mxu0
    %v296 = vadd.f32 %v221, %v295
    %v297 = vpop.f32.mrb[0].mxu0
    %298 = vmatprep.mubr.f32.mxu0 0.0
    %299 = vmatmul.mubr.f32.gmra.mrb[0].mxu0 %v227
    %v300 = vpop.f32.mrb[0].mxu0
    %v301 = vadd.f32 %v221, %v300
    %v302 = vpop.f32.mrb[0].mxu0
    %303 = vdwg.mxu0
    %v304 = vld [vmem:[%s6] sm:$0xff]
    %v305 = vld [vmem:[%s6 + $0x8] sm:$0xff]
    %v306 = vld [vmem:[%s6 + $0x10] sm:$0xff]
    %v307 = vld [vmem:[%s6 + $0x18] sm:$0xff]
    %309 = vrot.lane.b32.xlu0 %v296, 96
    %v310 = vpop.permute.xlu0 %309
    %vm311 = vcmask 64512
    %v312 = vsel %vm311, %v296, 0
    %v314 = vsel %vm311, %v310, 0
    %316 = vmatprep.subr.mxu0 0.0
    %317 = vmatpush1.xpose.msra.mxu0 %v314
    %318 = vmatprep.subr.mxu0 0.0
    %319 = vmatpush1.xpose.msra.mxu0 0.0
    %320 = vmatprep.subr.mxu0 0.0
    %321 = vmatpush1.xpose.msra.mxu0 0.0
    %322 = vmatprep.subr.mxu0 0.0
    %323 = vmatpush1.xpose.msra.mxu0 0.0
    %324 = vmatprep.subr.mxu0 0.0
    %325 = vmatpush1.xpose.msra.mxu0 0.0
    %326 = vmatprep.subr.mxu0 0.0
    %327 = vmatpush1.xpose.msra.mxu0 0.0
    %328 = vmatprep.subr.mxu0 0.0
    %329 = vmatpush1.xpose.msra.mxu0 0.0
    %330 = vmatprep.subr.mxu0 0.0
    %331 = vmatpush1.xpose.msra.mxu0 0.0
    %332 = vmatprep.subr.mxu0 0.0
    %333 = vmatpush1.xpose.msra.mxu0 0.0
    %334 = vmatprep.subr.mxu0 0.0
    %335 = vmatpush1.xpose.msra.mxu0 0.0
    %336 = vmatprep.subr.mxu0 0.0
    %337 = vmatpush1.xpose.msra.mxu0 0.0
    %338 = vmatprep.subr.mxu0 0.0
    %339 = vmatpush1.xpose.msra.mxu0 0.0
    %340 = vmatprep.subr.mxu0 0.0
    %341 = vmatpush1.xpose.msra.mxu0 0.0
    %342 = vmatprep.subr.mxu0 0.0
    %343 = vmatpush1.xpose.msra.mxu0 0.0
    %344 = vmatprep.subr.mxu0 0.0
    %345 = vmatpush1.xpose.msra.mxu0 0.0
    %346 = vmatprep.subr.mxu0 0.0
    %347 = vmatpush1.xpose.msra.mxu0 0.0
    %348 = vmatprep.subr.mxu0 0.0
    %349 = vmatpush1.xpose.msra.mxu0 0.0
    %350 = vmatprep.subr.mxu0 0.0
    %351 = vmatpush1.xpose.msra.mxu0 0.0
    %352 = vmatprep.subr.mxu0 0.0
    %353 = vmatpush1.xpose.msra.mxu0 0.0
    %354 = vmatprep.subr.mxu0 0.0
    %355 = vmatpush1.xpose.msra.mxu0 0.0
    %356 = vmatprep.subr.mxu0 0.0
    %357 = vmatpush1.xpose.msra.mxu0 0.0
    %358 = vmatprep.subr.mxu0 0.0
    %359 = vmatpush1.xpose.msra.mxu0 0.0
    %360 = vmatprep.subr.mxu0 0.0
    %361 = vmatpush1.xpose.msra.mxu0 0.0
    %362 = vmatprep.subr.mxu0 0.0
    %363 = vmatpush1.xpose.msra.mxu0 0.0
    %364 = vmatprep.subr.mxu0 0.0
    %365 = vmatpush1.xpose.msra.mxu0 0.0
    %366 = vmatprep.subr.mxu0 0.0
    %367 = vmatpush1.xpose.msra.mxu0 0.0
    %368 = vmatprep.subr.mxu0 0.0
    %369 = vmatpush1.xpose.msra.mxu0 0.0
    %370 = vmatprep.subr.mxu0 0.0
    %371 = vmatpush1.xpose.msra.mxu0 0.0
    %372 = vmatprep.subr.mxu0 0.0
    %373 = vmatpush1.xpose.msra.mxu0 0.0
    %374 = vmatprep.subr.mxu0 0.0
    %375 = vmatpush1.xpose.msra.mxu0 0.0
    %376 = vmatprep.subr.mxu0 0.0
    %377 = vmatpush1.xpose.msra.mxu0 0.0
    %378 = vmatprep.subr.mxu0 0.0
    %379 = vmatpush1.xpose.msra.mxu0 0.0
    %380 = vmatprep.mubr.f32.mxu0 0.0
    %381 = vmatmul.mubr.f32.gmra.mrb[0].mxu0 %v312
    %v382 = vpop.f32.mrb[0].mxu0
    %v383 = vadd.f32 0.0, %v382
    %v384 = vpop.f32.mrb[0].mxu0
    %385 = vdwg.mxu0
    %387 = vrot.lane.b32.xlu0 %v301, 96
    %v388 = vpop.permute.xlu0 %387
    %v389 = vsel %vm311, %v301, 0
    %v391 = vsel %vm311, %v388, 0
    %393 = vmatprep.subr.mxu0 0.0
    %394 = vmatpush1.xpose.msra.mxu0 %v391
    %395 = vmatprep.subr.mxu0 0.0
    %396 = vmatpush1.xpose.msra.mxu0 0.0
    %397 = vmatprep.subr.mxu0 0.0
    %398 = vmatpush1.xpose.msra.mxu0 0.0
    %399 = vmatprep.subr.mxu0 0.0
    %400 = vmatpush1.xpose.msra.mxu0 0.0
    %401 = vmatprep.subr.mxu0 0.0
    %402 = vmatpush1.xpose.msra.mxu0 0.0
    %403 = vmatprep.subr.mxu0 0.0
    %404 = vmatpush1.xpose.msra.mxu0 0.0
    %405 = vmatprep.subr.mxu0 0.0
    %406 = vmatpush1.xpose.msra.mxu0 0.0
    %407 = vmatprep.subr.mxu0 0.0
    %408 = vmatpush1.xpose.msra.mxu0 0.0
    %409 = vmatprep.subr.mxu0 0.0
    %410 = vmatpush1.xpose.msra.mxu0 0.0
    %411 = vmatprep.subr.mxu0 0.0
    %412 = vmatpush1.xpose.msra.mxu0 0.0
    %413 = vmatprep.subr.mxu0 0.0
    %414 = vmatpush1.xpose.msra.mxu0 0.0
    %415 = vmatprep.subr.mxu0 0.0
    %416 = vmatpush1.xpose.msra.mxu0 0.0
    %417 = vmatprep.subr.mxu0 0.0
    %418 = vmatpush1.xpose.msra.mxu0 0.0
    %419 = vmatprep.subr.mxu0 0.0
    %420 = vmatpush1.xpose.msra.mxu0 0.0
    %421 = vmatprep.subr.mxu0 0.0
    %422 = vmatpush1.xpose.msra.mxu0 0.0
    %423 = vmatprep.subr.mxu0 0.0
    %424 = vmatpush1.xpose.msra.mxu0 0.0
    %425 = vmatprep.subr.mxu0 0.0
    %426 = vmatpush1.xpose.msra.mxu0 0.0
    %427 = vmatprep.subr.mxu0 0.0
    %428 = vmatpush1.xpose.msra.mxu0 0.0
    %429 = vmatprep.subr.mxu0 0.0
    %430 = vmatpush1.xpose.msra.mxu0 0.0
    %431 = vmatprep.subr.mxu0 0.0
    %432 = vmatpush1.xpose.msra.mxu0 0.0
    %433 = vmatprep.subr.mxu0 0.0
    %434 = vmatpush1.xpose.msra.mxu0 0.0
    %435 = vmatprep.subr.mxu0 0.0
    %436 = vmatpush1.xpose.msra.mxu0 0.0
    %437 = vmatprep.subr.mxu0 0.0
    %438 = vmatpush1.xpose.msra.mxu0 0.0
    %439 = vmatprep.subr.mxu0 0.0
    %440 = vmatpush1.xpose.msra.mxu0 0.0
    %441 = vmatprep.subr.mxu0 0.0
    %442 = vmatpush1.xpose.msra.mxu0 0.0
    %443 = vmatprep.subr.mxu0 0.0
    %444 = vmatpush1.xpose.msra.mxu0 0.0
    %445 = vmatprep.subr.mxu0 0.0
    %446 = vmatpush1.xpose.msra.mxu0 0.0
    %447 = vmatprep.subr.mxu0 0.0
    %448 = vmatpush1.xpose.msra.mxu0 0.0
    %449 = vmatprep.subr.mxu0 0.0
    %450 = vmatpush1.xpose.msra.mxu0 0.0
    %451 = vmatprep.subr.mxu0 0.0
    %452 = vmatpush1.xpose.msra.mxu0 0.0
    %453 = vmatprep.subr.mxu0 0.0
    %454 = vmatpush1.xpose.msra.mxu0 0.0
    %455 = vmatprep.subr.mxu0 0.0
    %456 = vmatpush1.xpose.msra.mxu0 0.0
    %457 = vmatprep.mubr.f32.mxu0 0.0
    %458 = vmatmul.mubr.f32.gmra.mrb[0].mxu0 %v389
    %v459 = vpop.f32.mrb[0].mxu0
    %v460 = vadd.f32 0.0, %v459
    %v461 = vpop.f32.mrb[0].mxu0
    %462 = vdwg.mxu0
    %v463 = vmul.f32 %v383, 0.35355338
    %v464 = vmul.f32 %v460, 0.35355338
    %v465 = vsel %vm311, %v463, -inf
    %466 = vmax.xlane.f32.xlu0 %v465
    %v467 = vpop.xlane.xlu0 %466
    %v468 = vsel %vm311, %v464, -inf
    %469 = vmax.xlane.f32.xlu0 %v468
    %v470 = vpop.xlane.xlu0 %469
    %v471 = vsub.f32 %v463, %v467
    %v472 = vsub.f32 %v464, %v470
    %v473 = vmul.f32 %v471, 1.442695
    %v474 = vpow.pop %v473
    %v475 = vmul.f32 %v472, 1.442695
    %v476 = vpow.pop %v475
    %v477 = vsel %vm311, %v474, 0.0
    %478 = vadd.xlane.f32.xlu0 %v477
    %v479 = vpop.xlane.xlu0 %478
    %v480 = vsel %vm311, %v476, 0.0
    %481 = vadd.xlane.f32.xlu0 %v480
    %v482 = vpop.xlane.xlu0 %481
    %v483 = vrcp.pop %v479
    %v484 = vrcp.pop %v482
    %v485 = vmul.f32 %v474, %v483
    %v486 = vmul.f32 %v476, %v484
    %487 = vrot.lane.b32.xlu0 %v296, 64
    %v488 = vpop.permute.xlu0 %487
    %v491 = vsel %vm311, %v485, 0
    %493 = vmatprep.subr.mxu0 0.0
    %494 = vmatpush1.msra.mxu0 %v488
    %495 = vmatprep.subr.mxu0 0.0
    %496 = vmatpush1.msra.mxu0 0.0
    %497 = vmatprep.subr.mxu0 0.0
    %498 = vmatpush1.msra.mxu0 0.0
    %499 = vmatprep.subr.mxu0 0.0
    %500 = vmatpush1.msra.mxu0 0.0
    %501 = vmatprep.subr.mxu0 0.0
    %502 = vmatpush1.msra.mxu0 0.0
    %503 = vmatprep.subr.mxu0 0.0
    %504 = vmatpush1.msra.mxu0 0.0
    %505 = vmatprep.subr.mxu0 0.0
    %506 = vmatpush1.msra.mxu0 0.0
    %507 = vmatprep.subr.mxu0 0.0
    %508 = vmatpush1.msra.mxu0 0.0
    %509 = vmatprep.subr.mxu0 0.0
    %510 = vmatpush1.msra.mxu0 0.0
    %511 = vmatprep.subr.mxu0 0.0
    %512 = vmatpush1.msra.mxu0 0.0
    %513 = vmatprep.subr.mxu0 0.0
    %514 = vmatpush1.msra.mxu0 0.0
    %515 = vmatprep.subr.mxu0 0.0
    %516 = vmatpush1.msra.mxu0 0.0
    %517 = vmatprep.subr.mxu0 0.0
    %518 = vmatpush1.msra.mxu0 0.0
    %519 = vmatprep.subr.mxu0 0.0
    %520 = vmatpush1.msra.mxu0 0.0
    %521 = vmatprep.subr.mxu0 0.0
    %522 = vmatpush1.msra.mxu0 0.0
    %523 = vmatprep.subr.mxu0 0.0
    %524 = vmatpush1.msra.mxu0 0.0
    %525 = vmatprep.subr.mxu0 0.0
    %526 = vmatpush1.msra.mxu0 0.0
    %527 = vmatprep.subr.mxu0 0.0
    %528 = vmatpush1.msra.mxu0 0.0
    %529 = vmatprep.subr.mxu0 0.0
    %530 = vmatpush1.msra.mxu0 0.0
    %531 = vmatprep.subr.mxu0 0.0
    %532 = vmatpush1.msra.mxu0 0.0
    %533 = vmatprep.subr.mxu0 0.0
    %534 = vmatpush1.msra.mxu0 0.0
    %535 = vmatprep.subr.mxu0 0.0
    %536 = vmatpush1.msra.mxu0 0.0
    %537 = vmatprep.subr.mxu0 0.0
    %538 = vmatpush1.msra.mxu0 0.0
    %539 = vmatprep.subr.mxu0 0.0
    %540 = vmatpush1.msra.mxu0 0.0
    %541 = vmatprep.subr.mxu0 0.0
    %542 = vmatpush1.msra.mxu0 0.0
    %543 = vmatprep.subr.mxu0 0.0
    %544 = vmatpush1.msra.mxu0 0.0
    %545 = vmatprep.subr.mxu0 0.0
    %546 = vmatpush1.msra.mxu0 0.0
    %547 = vmatprep.subr.mxu0 0.0
    %548 = vmatpush1.msra.mxu0 0.0
    %549 = vmatprep.subr.mxu0 0.0
    %550 = vmatpush1.msra.mxu0 0.0
    %551 = vmatprep.subr.mxu0 0.0
    %552 = vmatpush1.msra.mxu0 0.0
    %553 = vmatprep.subr.mxu0 0.0
    %554 = vmatpush1.msra.mxu0 0.0
    %555 = vmatprep.subr.mxu0 0.0
    %556 = vmatpush1.msra.mxu0 0.0
    %557 = vmatprep.mubr.f32.mxu0 0.0
    %558 = vmatmul.mubr.f32.gmra.mrb[0].mxu0 %v491
    %v559 = vpop.f32.mrb[0].mxu0
    %v560 = vadd.f32 0.0, %v559
    %v561 = vpop.f32.mrb[0].mxu0
    %562 = vdwg.mxu0
    %563 = vrot.lane.b32.xlu0 %v301, 64
    %v564 = vpop.permute.xlu0 %563
    %v567 = vsel %vm311, %v486, 0
    %569 = vmatprep.subr.mxu0 0.0
    %570 = vmatpush1.msra.mxu0 %v564
    %571 = vmatprep.subr.mxu0 0.0
    %572 = vmatpush1.msra.mxu0 0.0
    %573 = vmatprep.subr.mxu0 0.0
    %574 = vmatpush1.msra.mxu0 0.0
    %575 = vmatprep.subr.mxu0 0.0
    %576 = vmatpush1.msra.mxu0 0.0
    %577 = vmatprep.subr.mxu0 0.0
    %578 = vmatpush1.msra.mxu0 0.0
    %579 = vmatprep.subr.mxu0 0.0
    %580 = vmatpush1.msra.mxu0 0.0
    %581 = vmatprep.subr.mxu0 0.0
    %582 = vmatpush1.msra.mxu0 0.0
    %583 = vmatprep.subr.mxu0 0.0
    %584 = vmatpush1.msra.mxu0 0.0
    %585 = vmatprep.subr.mxu0 0.0
    %586 = vmatpush1.msra.mxu0 0.0
    %587 = vmatprep.subr.mxu0 0.0
    %588 = vmatpush1.msra.mxu0 0.0
    %589 = vmatprep.subr.mxu0 0.0
    %590 = vmatpush1.msra.mxu0 0.0
    %591 = vmatprep.subr.mxu0 0.0
    %592 = vmatpush1.msra.mxu0 0.0
    %593 = vmatprep.subr.mxu0 0.0
    %594 = vmatpush1.msra.mxu0 0.0
    %595 = vmatprep.subr.mxu0 0.0
    %596 = vmatpush1.msra.mxu0 0.0
    %597 = vmatprep.subr.mxu0 0.0
    %598 = vmatpush1.msra.mxu0 0.0
    %599 = vmatprep.subr.mxu0 0.0
    %600 = vmatpush1.msra.mxu0 0.0
    %601 = vmatprep.subr.mxu0 0.0
    %602 = vmatpush1.msra.mxu0 0.0
    %603 = vmatprep.subr.mxu0 0.0
    %604 = vmatpush1.msra.mxu0 0.0
    %605 = vmatprep.subr.mxu0 0.0
    %606 = vmatpush1.msra.mxu0 0.0
    %607 = vmatprep.subr.mxu0 0.0
    %608 = vmatpush1.msra.mxu0 0.0
    %609 = vmatprep.subr.mxu0 0.0
    %610 = vmatpush1.msra.mxu0 0.0
    %611 = vmatprep.subr.mxu0 0.0
    %612 = vmatpush1.msra.mxu0 0.0
    %613 = vmatprep.subr.mxu0 0.0
    %614 = vmatpush1.msra.mxu0 0.0
    %615 = vmatprep.subr.mxu0 0.0
    %616 = vmatpush1.msra.mxu0 0.0
    %617 = vmatprep.subr.mxu0 0.0
    %618 = vmatpush1.msra.mxu0 0.0
    %619 = vmatprep.subr.mxu0 0.0
    %620 = vmatpush1.msra.mxu0 0.0
    %621 = vmatprep.subr.mxu0 0.0
    %622 = vmatpush1.msra.mxu0 0.0
    %623 = vmatprep.subr.mxu0 0.0
    %624 = vmatpush1.msra.mxu0 0.0
    %625 = vmatprep.subr.mxu0 0.0
    %626 = vmatpush1.msra.mxu0 0.0
    %627 = vmatprep.subr.mxu0 0.0
    %628 = vmatpush1.msra.mxu0 0.0
    %629 = vmatprep.subr.mxu0 0.0
    %630 = vmatpush1.msra.mxu0 0.0
    %631 = vmatprep.subr.mxu0 0.0
    %632 = vmatpush1.msra.mxu0 0.0
    %633 = vmatprep.mubr.f32.mxu0 0.0
    %634 = vmatmul.mubr.f32.gmra.mrb[0].mxu0 %v567
    %v635 = vpop.f32.mrb[0].mxu0
    %v636 = vadd.f32 0.0, %v635
    %v637 = vpop.f32.mrb[0].mxu0
    %638 = vdwg.mxu0
    %639 = vrot.lane.b32.xlu0 %v296, 120
    %v640 = vpop.permute.xlu0 %639
    %641 = vrot.lane.b32.xlu0 %v296, 88
    %v642 = vpop.permute.xlu0 %641
    %v643 = vsel %vm311, %v640, 0
    %v645 = vsel %vm311, %v642, 0
    %647 = vmatprep.subr.mxu0 0.0
    %648 = vmatpush1.xpose.msra.mxu0 %v645
    %649 = vmatprep.subr.mxu0 0.0
    %650 = vmatpush1.xpose.msra.mxu0 0.0
    %651 = vmatprep.subr.mxu0 0.0
    %652 = vmatpush1.xpose.msra.mxu0 0.0
    %653 = vmatprep.subr.mxu0 0.0
    %654 = vmatpush1.xpose.msra.mxu0 0.0
    %655 = vmatprep.subr.mxu0 0.0
    %656 = vmatpush1.xpose.msra.mxu0 0.0
    %657 = vmatprep.subr.mxu0 0.0
    %658 = vmatpush1.xpose.msra.mxu0 0.0
    %659 = vmatprep.subr.mxu0 0.0
    %660 = vmatpush1.xpose.msra.mxu0 0.0
    %661 = vmatprep.subr.mxu0 0.0
    %662 = vmatpush1.xpose.msra.mxu0 0.0
    %663 = vmatprep.subr.mxu0 0.0
    %664 = vmatpush1.xpose.msra.mxu0 0.0
    %665 = vmatprep.subr.mxu0 0.0
    %666 = vmatpush1.xpose.msra.mxu0 0.0
    %667 = vmatprep.subr.mxu0 0.0
    %668 = vmatpush1.xpose.msra.mxu0 0.0
    %669 = vmatprep.subr.mxu0 0.0
    %670 = vmatpush1.xpose.msra.mxu0 0.0
    %671 = vmatprep.subr.mxu0 0.0
    %672 = vmatpush1.xpose.msra.mxu0 0.0
    %673 = vmatprep.subr.mxu0 0.0
    %674 = vmatpush1.xpose.msra.mxu0 0.0
    %675 = vmatprep.subr.mxu0 0.0
    %676 = vmatpush1.xpose.msra.mxu0 0.0
    %677 = vmatprep.subr.mxu0 0.0
    %678 = vmatpush1.xpose.msra.mxu0 0.0
    %679 = vmatprep.subr.mxu0 0.0
    %680 = vmatpush1.xpose.msra.mxu0 0.0
    %681 = vmatprep.subr.mxu0 0.0
    %682 = vmatpush1.xpose.msra.mxu0 0.0
    %683 = vmatprep.subr.mxu0 0.0
    %684 = vmatpush1.xpose.msra.mxu0 0.0
    %685 = vmatprep.subr.mxu0 0.0
    %686 = vmatpush1.xpose.msra.mxu0 0.0
    %687 = vmatprep.subr.mxu0 0.0
    %688 = vmatpush1.xpose.msra.mxu0 0.0
    %689 = vmatprep.subr.mxu0 0.0
    %690 = vmatpush1.xpose.msra.mxu0 0.0
    %691 = vmatprep.subr.mxu0 0.0
    %692 = vmatpush1.xpose.msra.mxu0 0.0
    %693 = vmatprep.subr.mxu0 0.0
    %694 = vmatpush1.xpose.msra.mxu0 0.0
    %695 = vmatprep.subr.mxu0 0.0
    %696 = vmatpush1.xpose.msra.mxu0 0.0
    %697 = vmatprep.subr.mxu0 0.0
    %698 = vmatpush1.xpose.msra.mxu0 0.0
    %699 = vmatprep.subr.mxu0 0.0
    %700 = vmatpush1.xpose.msra.mxu0 0.0
    %701 = vmatprep.subr.mxu0 0.0
    %702 = vmatpush1.xpose.msra.mxu0 0.0
    %703 = vmatprep.subr.mxu0 0.0
    %704 = vmatpush1.xpose.msra.mxu0 0.0
    %705 = vmatprep.subr.mxu0 0.0
    %706 = vmatpush1.xpose.msra.mxu0 0.0
    %707 = vmatprep.subr.mxu0 0.0
    %708 = vmatpush1.xpose.msra.mxu0 0.0
    %709 = vmatprep.subr.mxu0 0.0
    %710 = vmatpush1.xpose.msra.mxu0 0.0
    %711 = vmatprep.mubr.f32.mxu0 0.0
    %712 = vmatmul.mubr.f32.gmra.mrb[0].mxu0 %v643
    %v713 = vpop.f32.mrb[0].mxu0
    %v714 = vadd.f32 0.0, %v713
    %v715 = vpop.f32.mrb[0].mxu0
    %716 = vdwg.mxu0
    %717 = vrot.lane.b32.xlu0 %v301, 120
    %v718 = vpop.permute.xlu0 %717
    %719 = vrot.lane.b32.xlu0 %v301, 88
    %v720 = vpop.permute.xlu0 %719
    %v721 = vsel %vm311, %v718, 0
    %v723 = vsel %vm311, %v720, 0
    %725 = vmatprep.subr.mxu0 0.0
    %726 = vmatpush1.xpose.msra.mxu0 %v723
    %727 = vmatprep.subr.mxu0 0.0
    %728 = vmatpush1.xpose.msra.mxu0 0.0
    %729 = vmatprep.subr.mxu0 0.0
    %730 = vmatpush1.xpose.msra.mxu0 0.0
    %731 = vmatprep.subr.mxu0 0.0
    %732 = vmatpush1.xpose.msra.mxu0 0.0
    %733 = vmatprep.subr.mxu0 0.0
    %734 = vmatpush1.xpose.msra.mxu0 0.0
    %735 = vmatprep.subr.mxu0 0.0
    %736 = vmatpush1.xpose.msra.mxu0 0.0
    %737 = vmatprep.subr.mxu0 0.0
    %738 = vmatpush1.xpose.msra.mxu0 0.0
    %739 = vmatprep.subr.mxu0 0.0
    %740 = vmatpush1.xpose.msra.mxu0 0.0
    %741 = vmatprep.subr.mxu0 0.0
    %742 = vmatpush1.xpose.msra.mxu0 0.0
    %743 = vmatprep.subr.mxu0 0.0
    %744 = vmatpush1.xpose.msra.mxu0 0.0
    %745 = vmatprep.subr.mxu0 0.0
    %746 = vmatpush1.xpose.msra.mxu0 0.0
    %747 = vmatprep.subr.mxu0 0.0
    %748 = vmatpush1.xpose.msra.mxu0 0.0
    %749 = vmatprep.subr.mxu0 0.0
    %750 = vmatpush1.xpose.msra.mxu0 0.0
    %751 = vmatprep.subr.mxu0 0.0
    %752 = vmatpush1.xpose.msra.mxu0 0.0
    %753 = vmatprep.subr.mxu0 0.0
    %754 = vmatpush1.xpose.msra.mxu0 0.0
    %755 = vmatprep.subr.mxu0 0.0
    %756 = vmatpush1.xpose.msra.mxu0 0.0
    %757 = vmatprep.subr.mxu0 0.0
    %758 = vmatpush1.xpose.msra.mxu0 0.0
    %759 = vmatprep.subr.mxu0 0.0
    %760 = vmatpush1.xpose.msra.mxu0 0.0
    %761 = vmatprep.subr.mxu0 0.0
    %762 = vmatpush1.xpose.msra.mxu0 0.0
    %763 = vmatprep.subr.mxu0 0.0
    %764 = vmatpush1.xpose.msra.mxu0 0.0
    %765 = vmatprep.subr.mxu0 0.0
    %766 = vmatpush1.xpose.msra.mxu0 0.0
    %767 = vmatprep.subr.mxu0 0.0
    %768 = vmatpush1.xpose.msra.mxu0 0.0
    %769 = vmatprep.subr.mxu0 0.0
    %770 = vmatpush1.xpose.msra.mxu0 0.0
    %771 = vmatprep.subr.mxu0 0.0
    %772 = vmatpush1.xpose.msra.mxu0 0.0
    %773 = vmatprep.subr.mxu0 0.0
    %774 = vmatpush1.xpose.msra.mxu0 0.0
    %775 = vmatprep.subr.mxu0 0.0
    %776 = vmatpush1.xpose.msra.mxu0 0.0
    %777 = vmatprep.subr.mxu0 0.0
    %778 = vmatpush1.xpose.msra.mxu0 0.0
    %779 = vmatprep.subr.mxu0 0.0
    %780 = vmatpush1.xpose.msra.mxu0 0.0
    %781 = vmatprep.subr.mxu0 0.0
    %782 = vmatpush1.xpose.msra.mxu0 0.0
    %783 = vmatprep.subr.mxu0 0.0
    %784 = vmatpush1.xpose.msra.mxu0 0.0
    %785 = vmatprep.subr.mxu0 0.0
    %786 = vmatpush1.xpose.msra.mxu0 0.0
    %787 = vmatprep.subr.mxu0 0.0
    %788 = vmatpush1.xpose.msra.mxu0 0.0
    %789 = vmatprep.mubr.f32.mxu0 0.0
    %790 = vmatmul.mubr.f32.gmra.mrb[0].mxu0 %v721
    %v791 = vpop.f32.mrb[0].mxu0
    %v792 = vadd.f32 0.0, %v791
    %v793 = vpop.f32.mrb[0].mxu0
    %794 = vdwg.mxu0
    %v795 = vmul.f32 %v714, 0.35355338
    %v796 = vmul.f32 %v792, 0.35355338
    %v797 = vsel %vm311, %v795, -inf
    %798 = vmax.xlane.f32.xlu0 %v797
    %v799 = vpop.xlane.xlu0 %798
    %v800 = vsel %vm311, %v796, -inf
    %801 = vmax.xlane.f32.xlu0 %v800
    %v802 = vpop.xlane.xlu0 %801
    %v803 = vsub.f32 %v795, %v799
    %v804 = vsub.f32 %v796, %v802
    %v805 = vmul.f32 %v803, 1.442695
    %v806 = vpow.pop %v805
    %v807 = vmul.f32 %v804, 1.442695
    %v808 = vpow.pop %v807
    %v809 = vsel %vm311, %v806, 0.0
    %810 = vadd.xlane.f32.xlu0 %v809
    %v811 = vpop.xlane.xlu0 %810
    %v812 = vsel %vm311, %v808, 0.0
    %813 = vadd.xlane.f32.xlu0 %v812
    %v814 = vpop.xlane.xlu0 %813
    %v815 = vrcp.pop %v811
    %v816 = vrcp.pop %v814
    %v817 = vmul.f32 %v806, %v815
    %v818 = vmul.f32 %v808, %v816
    %819 = vrot.lane.b32.xlu0 %v296, 56
    %v820 = vpop.permute.xlu0 %819
    %v823 = vsel %vm311, %v817, 0
    %825 = vmatprep.subr.mxu0 0.0
    %826 = vmatpush1.msra.mxu0 %v820
    %827 = vmatprep.subr.mxu0 0.0
    %828 = vmatpush1.msra.mxu0 0.0
    %829 = vmatprep.subr.mxu0 0.0
    %830 = vmatpush1.msra.mxu0 0.0
    %831 = vmatprep.subr.mxu0 0.0
    %832 = vmatpush1.msra.mxu0 0.0
    %833 = vmatprep.subr.mxu0 0.0
    %834 = vmatpush1.msra.mxu0 0.0
    %835 = vmatprep.subr.mxu0 0.0
    %836 = vmatpush1.msra.mxu0 0.0
    %837 = vmatprep.subr.mxu0 0.0
    %838 = vmatpush1.msra.mxu0 0.0
    %839 = vmatprep.subr.mxu0 0.0
    %840 = vmatpush1.msra.mxu0 0.0
    %841 = vmatprep.subr.mxu0 0.0
    %842 = vmatpush1.msra.mxu0 0.0
    %843 = vmatprep.subr.mxu0 0.0
    %844 = vmatpush1.msra.mxu0 0.0
    %845 = vmatprep.subr.mxu0 0.0
    %846 = vmatpush1.msra.mxu0 0.0
    %847 = vmatprep.subr.mxu0 0.0
    %848 = vmatpush1.msra.mxu0 0.0
    %849 = vmatprep.subr.mxu0 0.0
    %850 = vmatpush1.msra.mxu0 0.0
    %851 = vmatprep.subr.mxu0 0.0
    %852 = vmatpush1.msra.mxu0 0.0
    %853 = vmatprep.subr.mxu0 0.0
    %854 = vmatpush1.msra.mxu0 0.0
    %855 = vmatprep.subr.mxu0 0.0
    %856 = vmatpush1.msra.mxu0 0.0
    %857 = vmatprep.subr.mxu0 0.0
    %858 = vmatpush1.msra.mxu0 0.0
    %859 = vmatprep.subr.mxu0 0.0
    %860 = vmatpush1.msra.mxu0 0.0
    %861 = vmatprep.subr.mxu0 0.0
    %862 = vmatpush1.msra.mxu0 0.0
    %863 = vmatprep.subr.mxu0 0.0
    %864 = vmatpush1.msra.mxu0 0.0
    %865 = vmatprep.subr.mxu0 0.0
    %866 = vmatpush1.msra.mxu0 0.0
    %867 = vmatprep.subr.mxu0 0.0
    %868 = vmatpush1.msra.mxu0 0.0
    %869 = vmatprep.subr.mxu0 0.0
    %870 = vmatpush1.msra.mxu0 0.0
    %871 = vmatprep.subr.mxu0 0.0
    %872 = vmatpush1.msra.mxu0 0.0
    %873 = vmatprep.subr.mxu0 0.0
    %874 = vmatpush1.msra.mxu0 0.0
    %875 = vmatprep.subr.mxu0 0.0
    %876 = vmatpush1.msra.mxu0 0.0
    %877 = vmatprep.subr.mxu0 0.0
    %878 = vmatpush1.msra.mxu0 0.0
    %879 = vmatprep.subr.mxu0 0.0
    %880 = vmatpush1.msra.mxu0 0.0
    %881 = vmatprep.subr.mxu0 0.0
    %882 = vmatpush1.msra.mxu0 0.0
    %883 = vmatprep.subr.mxu0 0.0
    %884 = vmatpush1.msra.mxu0 0.0
    %885 = vmatprep.subr.mxu0 0.0
    %886 = vmatpush1.msra.mxu0 0.0
    %887 = vmatprep.subr.mxu0 0.0
    %888 = vmatpush1.msra.mxu0 0.0
    %889 = vmatprep.mubr.f32.mxu0 0.0
    %890 = vmatmul.mubr.f32.gmra.mrb[0].mxu0 %v823
    %v891 = vpop.f32.mrb[0].mxu0
    %v892 = vadd.f32 0.0, %v891
    %v893 = vpop.f32.mrb[0].mxu0
    %894 = vdwg.mxu0
    %895 = vrot.lane.b32.xlu0 %v301, 56
    %v896 = vpop.permute.xlu0 %895
    %v899 = vsel %vm311, %v818, 0
    %901 = vmatprep.subr.mxu0 0.0
    %902 = vmatpush1.msra.mxu0 %v896
    %903 = vmatprep.subr.mxu0 0.0
    %904 = vmatpush1.msra.mxu0 0.0
    %905 = vmatprep.subr.mxu0 0.0
    %906 = vmatpush1.msra.mxu0 0.0
    %907 = vmatprep.subr.mxu0 0.0
    %908 = vmatpush1.msra.mxu0 0.0
    %909 = vmatprep.subr.mxu0 0.0
    %910 = vmatpush1.msra.mxu0 0.0
    %911 = vmatprep.subr.mxu0 0.0
    %912 = vmatpush1.msra.mxu0 0.0
    %913 = vmatprep.subr.mxu0 0.0
    %914 = vmatpush1.msra.mxu0 0.0
    %915 = vmatprep.subr.mxu0 0.0
    %916 = vmatpush1.msra.mxu0 0.0
    %917 = vmatprep.subr.mxu0 0.0
    %918 = vmatpush1.msra.mxu0 0.0
    %919 = vmatprep.subr.mxu0 0.0
    %920 = vmatpush1.msra.mxu0 0.0
    %921 = vmatprep.subr.mxu0 0.0
    %922 = vmatpush1.msra.mxu0 0.0
    %923 = vmatprep.subr.mxu0 0.0
    %924 = vmatpush1.msra.mxu0 0.0
    %925 = vmatprep.subr.mxu0 0.0
    %926 = vmatpush1.msra.mxu0 0.0
    %927 = vmatprep.subr.mxu0 0.0
    %928 = vmatpush1.msra.mxu0 0.0
    %929 = vmatprep.subr.mxu0 0.0
    %930 = vmatpush1.msra.mxu0 0.0
    %931 = vmatprep.subr.mxu0 0.0
    %932 = vmatpush1.msra.mxu0 0.0
    %933 = vmatprep.subr.mxu0 0.0
    %934 = vmatpush1.msra.mxu0 0.0
    %935 = vmatprep.subr.mxu0 0.0
    %936 = vmatpush1.msra.mxu0 0.0
    %937 = vmatprep.subr.mxu0 0.0
    %938 = vmatpush1.msra.mxu0 0.0
    %939 = vmatprep.subr.mxu0 0.0
    %940 = vmatpush1.msra.mxu0 0.0
    %941 = vmatprep.subr.mxu0 0.0
    %942 = vmatpush1.msra.mxu0 0.0
    %943 = vmatprep.subr.mxu0 0.0
    %944 = vmatpush1.msra.mxu0 0.0
    %945 = vmatprep.subr.mxu0 0.0
    %946 = vmatpush1.msra.mxu0 0.0
    %947 = vmatprep.subr.mxu0 0.0
    %948 = vmatpush1.msra.mxu0 0.0
    %949 = vmatprep.subr.mxu0 0.0
    %950 = vmatpush1.msra.mxu0 0.0
    %951 = vmatprep.subr.mxu0 0.0
    %952 = vmatpush1.msra.mxu0 0.0
    %953 = vmatprep.subr.mxu0 0.0
    %954 = vmatpush1.msra.mxu0 0.0
    %955 = vmatprep.subr.mxu0 0.0
    %956 = vmatpush1.msra.mxu0 0.0
    %957 = vmatprep.subr.mxu0 0.0
    %958 = vmatpush1.msra.mxu0 0.0
    %959 = vmatprep.subr.mxu0 0.0
    %960 = vmatpush1.msra.mxu0 0.0
    %961 = vmatprep.subr.mxu0 0.0
    %962 = vmatpush1.msra.mxu0 0.0
    %963 = vmatprep.subr.mxu0 0.0
    %964 = vmatpush1.msra.mxu0 0.0
    %965 = vmatprep.mubr.f32.mxu0 0.0
    %966 = vmatmul.mubr.f32.gmra.mrb[0].mxu0 %v899
    %v967 = vpop.f32.mrb[0].mxu0
    %v968 = vadd.f32 0.0, %v967
    %v969 = vpop.f32.mrb[0].mxu0
    %970 = vdwg.mxu0
    %v972 = vsel %vm311, %v892, 0
    %v975 = vsel %vm311, %v968, 0
    %977 = vmatprep.subr.mxu0 0.0
    %978 = vmatpush1.msra.mxu0 %v305
    %979 = vmatprep.subr.mxu0 0.0
    %980 = vmatpush1.msra.mxu0 0.0
    %981 = vmatprep.subr.mxu0 0.0
    %982 = vmatpush1.msra.mxu0 0.0
    %983 = vmatprep.subr.mxu0 0.0
    %984 = vmatpush1.msra.mxu0 0.0
    %985 = vmatprep.subr.mxu0 0.0
    %986 = vmatpush1.msra.mxu0 0.0
    %987 = vmatprep.subr.mxu0 0.0
    %988 = vmatpush1.msra.mxu0 0.0
    %989 = vmatprep.subr.mxu0 0.0
    %990 = vmatpush1.msra.mxu0 0.0
    %991 = vmatprep.subr.mxu0 0.0
    %992 = vmatpush1.msra.mxu0 0.0
    %993 = vmatprep.subr.mxu0 0.0
    %994 = vmatpush1.msra.mxu0 0.0
    %995 = vmatprep.subr.mxu0 0.0
    %996 = vmatpush1.msra.mxu0 0.0
    %997 = vmatprep.subr.mxu0 0.0
    %998 = vmatpush1.msra.mxu0 0.0
    %999 = vmatprep.subr.mxu0 0.0
    %1000 = vmatpush1.msra.mxu0 0.0
    %1001 = vmatprep.subr.mxu0 0.0
    %1002 = vmatpush1.msra.mxu0 0.0
    %1003 = vmatprep.subr.mxu0 0.0
    %1004 = vmatpush1.msra.mxu0 0.0
    %1005 = vmatprep.subr.mxu0 0.0
    %1006 = vmatpush1.msra.mxu0 0.0
    %1007 = vmatprep.subr.mxu0 0.0
    %1008 = vmatpush1.msra.mxu0 0.0
    %1009 = vmatprep.subr.mxu0 0.0
    %1010 = vmatpush1.msra.mxu0 0.0
    %1011 = vmatprep.subr.mxu0 0.0
    %1012 = vmatpush1.msra.mxu0 0.0
    %1013 = vmatprep.subr.mxu0 0.0
    %1014 = vmatpush1.msra.mxu0 0.0
    %1015 = vmatprep.subr.mxu0 0.0
    %1016 = vmatpush1.msra.mxu0 0.0
    %1017 = vmatprep.subr.mxu0 0.0
    %1018 = vmatpush1.msra.mxu0 0.0
    %1019 = vmatprep.subr.mxu0 0.0
    %1020 = vmatpush1.msra.mxu0 0.0
    %1021 = vmatprep.subr.mxu0 0.0
    %1022 = vmatpush1.msra.mxu0 0.0
    %1023 = vmatprep.subr.mxu0 0.0
    %1024 = vmatpush1.msra.mxu0 0.0
    %1025 = vmatprep.subr.mxu0 0.0
    %1026 = vmatpush1.msra.mxu0 0.0
    %1027 = vmatprep.subr.mxu0 0.0
    %1028 = vmatpush1.msra.mxu0 0.0
    %1029 = vmatprep.subr.mxu0 0.0
    %1030 = vmatpush1.msra.mxu0 0.0
    %1031 = vmatprep.subr.mxu0 0.0
    %1032 = vmatpush1.msra.mxu0 0.0
    %1033 = vmatprep.subr.mxu0 0.0
    %1034 = vmatpush1.msra.mxu0 0.0
    %1035 = vmatprep.subr.mxu0 0.0
    %1036 = vmatpush1.msra.mxu0 0.0
    %1037 = vmatprep.subr.mxu0 0.0
    %1038 = vmatpush1.msra.mxu0 0.0
    %1039 = vmatprep.subr.mxu0 0.0
    %1040 = vmatpush1.msra.mxu0 0.0
    %1041 = vmatprep.mubr.f32.mxu0 0.0
    %1042 = vmatmul.mubr.f32.gmra.mrb[0].mxu0 %v972
    %v1043 = vpop.f32.mrb[0].mxu0
    %v1044 = vadd.f32 0.0, %v1043
    %v1045 = vpop.f32.mrb[0].mxu0
    %1046 = vmatprep.mubr.f32.mxu0 0.0
    %1047 = vmatmul.mubr.f32.gmra.mrb[0].mxu0 %v975
    %v1048 = vpop.f32.mrb[0].mxu0
    %v1049 = vadd.f32 0.0, %v1048
    %v1050 = vpop.f32.mrb[0].mxu0
    %1051 = vdwg.mxu0
    %v1053 = vsel %vm311, %v560, 0
    %v1056 = vsel %vm311, %v636, 0
    %1058 = vmatprep.subr.mxu0 0.0
    %1059 = vmatpush1.msra.mxu0 %v304
    %1060 = vmatprep.subr.mxu0 0.0
    %1061 = vmatpush1.msra.mxu0 0.0
    %1062 = vmatprep.subr.mxu0 0.0
    %1063 = vmatpush1.msra.mxu0 0.0
    %1064 = vmatprep.subr.mxu0 0.0
    %1065 = vmatpush1.msra.mxu0 0.0
    %1066 = vmatprep.subr.mxu0 0.0
    %1067 = vmatpush1.msra.mxu0 0.0
    %1068 = vmatprep.subr.mxu0 0.0
    %1069 = vmatpush1.msra.mxu0 0.0
    %1070 = vmatprep.subr.mxu0 0.0
    %1071 = vmatpush1.msra.mxu0 0.0
    %1072 = vmatprep.subr.mxu0 0.0
    %1073 = vmatpush1.msra.mxu0 0.0
    %1074 = vmatprep.subr.mxu0 0.0
    %1075 = vmatpush1.msra.mxu0 0.0
    %1076 = vmatprep.subr.mxu0 0.0
    %1077 = vmatpush1.msra.mxu0 0.0
    %1078 = vmatprep.subr.mxu0 0.0
    %1079 = vmatpush1.msra.mxu0 0.0
    %1080 = vmatprep.subr.mxu0 0.0
    %1081 = vmatpush1.msra.mxu0 0.0
    %1082 = vmatprep.subr.mxu0 0.0
    %1083 = vmatpush1.msra.mxu0 0.0
    %1084 = vmatprep.subr.mxu0 0.0
    %1085 = vmatpush1.msra.mxu0 0.0
    %1086 = vmatprep.subr.mxu0 0.0
    %1087 = vmatpush1.msra.mxu0 0.0
    %1088 = vmatprep.subr.mxu0 0.0
    %1089 = vmatpush1.msra.mxu0 0.0
    %1090 = vmatprep.subr.mxu0 0.0
    %1091 = vmatpush1.msra.mxu0 0.0
    %1092 = vmatprep.subr.mxu0 0.0
    %1093 = vmatpush1.msra.mxu0 0.0
    %1094 = vmatprep.subr.mxu0 0.0
    %1095 = vmatpush1.msra.mxu0 0.0
    %1096 = vmatprep.subr.mxu0 0.0
    %1097 = vmatpush1.msra.mxu0 0.0
    %1098 = vmatprep.subr.mxu0 0.0
    %1099 = vmatpush1.msra.mxu0 0.0
    %1100 = vmatprep.subr.mxu0 0.0
    %1101 = vmatpush1.msra.mxu0 0.0
    %1102 = vmatprep.subr.mxu0 0.0
    %1103 = vmatpush1.msra.mxu0 0.0
    %1104 = vmatprep.subr.mxu0 0.0
    %1105 = vmatpush1.msra.mxu0 0.0
    %1106 = vmatprep.subr.mxu0 0.0
    %1107 = vmatpush1.msra.mxu0 0.0
    %1108 = vmatprep.subr.mxu0 0.0
    %1109 = vmatpush1.msra.mxu0 0.0
    %1110 = vmatprep.subr.mxu0 0.0
    %1111 = vmatpush1.msra.mxu0 0.0
    %1112 = vmatprep.subr.mxu0 0.0
    %1113 = vmatpush1.msra.mxu0 0.0
    %1114 = vmatprep.subr.mxu0 0.0
    %1115 = vmatpush1.msra.mxu0 0.0
    %1116 = vmatprep.subr.mxu0 0.0
    %1117 = vmatpush1.msra.mxu0 0.0
    %1118 = vmatprep.subr.mxu0 0.0
    %1119 = vmatpush1.msra.mxu0 0.0
    %1120 = vmatprep.subr.mxu0 0.0
    %1121 = vmatpush1.msra.mxu0 0.0
    %1122 = vmatprep.mubr.f32.mxu0 0.0
    %1123 = vmatmul.mubr.f32.gmra.mrb[0].mxu0 %v1053
    %v1124 = vpop.f32.mrb[0].mxu0
    %v1125 = vadd.f32 %v1044, %v1124
    %v1126 = vpop.f32.mrb[0].mxu0
    %1127 = vmatprep.mubr.f32.mxu0 0.0
    %1128 = vmatmul.mubr.f32.gmra.mrb[0].mxu0 %v1056
    %v1129 = vpop.f32.mrb[0].mxu0
    %v1130 = vadd.f32 %v1049, %v1129
    %v1131 = vpop.f32.mrb[0].mxu0
    %1132 = vdwg.mxu0
    %1133 = vrot.lane.b32.xlu0 %v296, 112
    %v1134 = vpop.permute.xlu0 %1133
    %1135 = vrot.lane.b32.xlu0 %v296, 80
    %v1136 = vpop.permute.xlu0 %1135
    %v1137 = vsel %vm311, %v1134, 0
    %v1139 = vsel %vm311, %v1136, 0
    %1141 = vmatprep.subr.mxu0 0.0
    %1142 = vmatpush1.xpose.msra.mxu0 %v1139
    %1143 = vmatprep.subr.mxu0 0.0
    %1144 = vmatpush1.xpose.msra.mxu0 0.0
    %1145 = vmatprep.subr.mxu0 0.0
    %1146 = vmatpush1.xpose.msra.mxu0 0.0
    %1147 = vmatprep.subr.mxu0 0.0
    %1148 = vmatpush1.xpose.msra.mxu0 0.0
    %1149 = vmatprep.subr.mxu0 0.0
    %1150 = vmatpush1.xpose.msra.mxu0 0.0
    %1151 = vmatprep.subr.mxu0 0.0
    %1152 = vmatpush1.xpose.msra.mxu0 0.0
    %1153 = vmatprep.subr.mxu0 0.0
    %1154 = vmatpush1.xpose.msra.mxu0 0.0
    %1155 = vmatprep.subr.mxu0 0.0
    %1156 = vmatpush1.xpose.msra.mxu0 0.0
    %1157 = vmatprep.subr.mxu0 0.0
    %1158 = vmatpush1.xpose.msra.mxu0 0.0
    %1159 = vmatprep.subr.mxu0 0.0
    %1160 = vmatpush1.xpose.msra.mxu0 0.0
    %1161 = vmatprep.subr.mxu0 0.0
    %1162 = vmatpush1.xpose.msra.mxu0 0.0
    %1163 = vmatprep.subr.mxu0 0.0
    %1164 = vmatpush1.xpose.msra.mxu0 0.0
    %1165 = vmatprep.subr.mxu0 0.0
    %1166 = vmatpush1.xpose.msra.mxu0 0.0
    %1167 = vmatprep.subr.mxu0 0.0
    %1168 = vmatpush1.xpose.msra.mxu0 0.0
    %1169 = vmatprep.subr.mxu0 0.0
    %1170 = vmatpush1.xpose.msra.mxu0 0.0
    %1171 = vmatprep.subr.mxu0 0.0
    %1172 = vmatpush1.xpose.msra.mxu0 0.0
    %1173 = vmatprep.subr.mxu0 0.0
    %1174 = vmatpush1.xpose.msra.mxu0 0.0
    %1175 = vmatprep.subr.mxu0 0.0
    %1176 = vmatpush1.xpose.msra.mxu0 0.0
    %1177 = vmatprep.subr.mxu0 0.0
    %1178 = vmatpush1.xpose.msra.mxu0 0.0
    %1179 = vmatprep.subr.mxu0 0.0
    %1180 = vmatpush1.xpose.msra.mxu0 0.0
    %1181 = vmatprep.subr.mxu0 0.0
    %1182 = vmatpush1.xpose.msra.mxu0 0.0
    %1183 = vmatprep.subr.mxu0 0.0
    %1184 = vmatpush1.xpose.msra.mxu0 0.0
    %1185 = vmatprep.subr.mxu0 0.0
    %1186 = vmatpush1.xpose.msra.mxu0 0.0
    %1187 = vmatprep.subr.mxu0 0.0
    %1188 = vmatpush1.xpose.msra.mxu0 0.0
    %1189 = vmatprep.subr.mxu0 0.0
    %1190 = vmatpush1.xpose.msra.mxu0 0.0
    %1191 = vmatprep.subr.mxu0 0.0
    %1192 = vmatpush1.xpose.msra.mxu0 0.0
    %1193 = vmatprep.subr.mxu0 0.0
    %1194 = vmatpush1.xpose.msra.mxu0 0.0
    %1195 = vmatprep.subr.mxu0 0.0
    %1196 = vmatpush1.xpose.msra.mxu0 0.0
    %1197 = vmatprep.subr.mxu0 0.0
    %1198 = vmatpush1.xpose.msra.mxu0 0.0
    %1199 = vmatprep.subr.mxu0 0.0
    %1200 = vmatpush1.xpose.msra.mxu0 0.0
    %1201 = vmatprep.subr.mxu0 0.0
    %1202 = vmatpush1.xpose.msra.mxu0 0.0
    %1203 = vmatprep.subr.mxu0 0.0
    %1204 = vmatpush1.xpose.msra.mxu0 0.0
    %1205 = vmatprep.mubr.f32.mxu0 0.0
    %1206 = vmatmul.mubr.f32.gmra.mrb[0].mxu0 %v1137
    %v1207 = vpop.f32.mrb[0].mxu0
    %v1208 = vadd.f32 0.0, %v1207
    %v1209 = vpop.f32.mrb[0].mxu0
    %1210 = vdwg.mxu0
    %1211 = vrot.lane.b32.xlu0 %v301, 112
    %v1212 = vpop.permute.xlu0 %1211
    %1213 = vrot.lane.b32.xlu0 %v301, 80
    %v1214 = vpop.permute.xlu0 %1213
    %v1215 = vsel %vm311, %v1212, 0
    %v1217 = vsel %vm311, %v1214, 0
    %1219 = vmatprep.subr.mxu0 0.0
    %1220 = vmatpush1.xpose.msra.mxu0 %v1217
    %1221 = vmatprep.subr.mxu0 0.0
    %1222 = vmatpush1.xpose.msra.mxu0 0.0
    %1223 = vmatprep.subr.mxu0 0.0
    %1224 = vmatpush1.xpose.msra.mxu0 0.0
    %1225 = vmatprep.subr.mxu0 0.0
    %1226 = vmatpush1.xpose.msra.mxu0 0.0
    %1227 = vmatprep.subr.mxu0 0.0
    %1228 = vmatpush1.xpose.msra.mxu0 0.0
    %1229 = vmatprep.subr.mxu0 0.0
    %1230 = vmatpush1.xpose.msra.mxu0 0.0
    %1231 = vmatprep.subr.mxu0 0.0
    %1232 = vmatpush1.xpose.msra.mxu0 0.0
    %1233 = vmatprep.subr.mxu0 0.0
    %1234 = vmatpush1.xpose.msra.mxu0 0.0
    %1235 = vmatprep.subr.mxu0 0.0
    %1236 = vmatpush1.xpose.msra.mxu0 0.0
    %1237 = vmatprep.subr.mxu0 0.0
    %1238 = vmatpush1.xpose.msra.mxu0 0.0
    %1239 = vmatprep.subr.mxu0 0.0
    %1240 = vmatpush1.xpose.msra.mxu0 0.0
    %1241 = vmatprep.subr.mxu0 0.0
    %1242 = vmatpush1.xpose.msra.mxu0 0.0
    %1243 = vmatprep.subr.mxu0 0.0
    %1244 = vmatpush1.xpose.msra.mxu0 0.0
    %1245 = vmatprep.subr.mxu0 0.0
    %1246 = vmatpush1.xpose.msra.mxu0 0.0
    %1247 = vmatprep.subr.mxu0 0.0
    %1248 = vmatpush1.xpose.msra.mxu0 0.0
    %1249 = vmatprep.subr.mxu0 0.0
    %1250 = vmatpush1.xpose.msra.mxu0 0.0
    %1251 = vmatprep.subr.mxu0 0.0
    %1252 = vmatpush1.xpose.msra.mxu0 0.0
    %1253 = vmatprep.subr.mxu0 0.0
    %1254 = vmatpush1.xpose.msra.mxu0 0.0
    %1255 = vmatprep.subr.mxu0 0.0
    %1256 = vmatpush1.xpose.msra.mxu0 0.0
    %1257 = vmatprep.subr.mxu0 0.0
    %1258 = vmatpush1.xpose.msra.mxu0 0.0
    %1259 = vmatprep.subr.mxu0 0.0
    %1260 = vmatpush1.xpose.msra.mxu0 0.0
    %1261 = vmatprep.subr.mxu0 0.0
    %1262 = vmatpush1.xpose.msra.mxu0 0.0
    %1263 = vmatprep.subr.mxu0 0.0
    %1264 = vmatpush1.xpose.msra.mxu0 0.0
    %1265 = vmatprep.subr.mxu0 0.0
    %1266 = vmatpush1.xpose.msra.mxu0 0.0
    %1267 = vmatprep.subr.mxu0 0.0
    %1268 = vmatpush1.xpose.msra.mxu0 0.0
    %1269 = vmatprep.subr.mxu0 0.0
    %1270 = vmatpush1.xpose.msra.mxu0 0.0
    %1271 = vmatprep.subr.mxu0 0.0
    %1272 = vmatpush1.xpose.msra.mxu0 0.0
    %1273 = vmatprep.subr.mxu0 0.0
    %1274 = vmatpush1.xpose.msra.mxu0 0.0
    %1275 = vmatprep.subr.mxu0 0.0
    %1276 = vmatpush1.xpose.msra.mxu0 0.0
    %1277 = vmatprep.subr.mxu0 0.0
    %1278 = vmatpush1.xpose.msra.mxu0 0.0
    %1279 = vmatprep.subr.mxu0 0.0
    %1280 = vmatpush1.xpose.msra.mxu0 0.0
    %1281 = vmatprep.subr.mxu0 0.0
    %1282 = vmatpush1.xpose.msra.mxu0 0.0
    %1283 = vmatprep.mubr.f32.mxu0 0.0
    %1284 = vmatmul.mubr.f32.gmra.mrb[0].mxu0 %v1215
    %v1285 = vpop.f32.mrb[0].mxu0
    %v1286 = vadd.f32 0.0, %v1285
    %v1287 = vpop.f32.mrb[0].mxu0
    %1288 = vdwg.mxu0
    %v1289 = vmul.f32 %v1208, 0.35355338
    %v1290 = vmul.f32 %v1286, 0.35355338
    %v1291 = vsel %vm311, %v1289, -inf
    %1292 = vmax.xlane.f32.xlu0 %v1291
    %v1293 = vpop.xlane.xlu0 %1292
    %v1294 = vsel %vm311, %v1290, -inf
    %1295 = vmax.xlane.f32.xlu0 %v1294
    %v1296 = vpop.xlane.xlu0 %1295
    %v1297 = vsub.f32 %v1289, %v1293
    %v1298 = vsub.f32 %v1290, %v1296
    %v1299 = vmul.f32 %v1297, 1.442695
    %v1300 = vpow.pop %v1299
    %v1301 = vmul.f32 %v1298, 1.442695
    %v1302 = vpow.pop %v1301
    %v1303 = vsel %vm311, %v1300, 0.0
    %1304 = vadd.xlane.f32.xlu0 %v1303
    %v1305 = vpop.xlane.xlu0 %1304
    %v1306 = vsel %vm311, %v1302, 0.0
    %1307 = vadd.xlane.f32.xlu0 %v1306
    %v1308 = vpop.xlane.xlu0 %1307
    %v1309 = vrcp.pop %v1305
    %v1310 = vrcp.pop %v1308
    %v1311 = vmul.f32 %v1300, %v1309
    %v1312 = vmul.f32 %v1302, %v1310
    %1313 = vrot.lane.b32.xlu0 %v296, 48
    %v1314 = vpop.permute.xlu0 %1313
    %v1317 = vsel %vm311, %v1311, 0
    %1319 = vmatprep.subr.mxu0 0.0
    %1320 = vmatpush1.msra.mxu0 %v1314
    %1321 = vmatprep.subr.mxu0 0.0
    %1322 = vmatpush1.msra.mxu0 0.0
    %1323 = vmatprep.subr.mxu0 0.0
    %1324 = vmatpush1.msra.mxu0 0.0
    %1325 = vmatprep.subr.mxu0 0.0
    %1326 = vmatpush1.msra.mxu0 0.0
    %1327 = vmatprep.subr.mxu0 0.0
    %1328 = vmatpush1.msra.mxu0 0.0
    %1329 = vmatprep.subr.mxu0 0.0
    %1330 = vmatpush1.msra.mxu0 0.0
    %1331 = vmatprep.subr.mxu0 0.0
    %1332 = vmatpush1.msra.mxu0 0.0
    %1333 = vmatprep.subr.mxu0 0.0
    %1334 = vmatpush1.msra.mxu0 0.0
    %1335 = vmatprep.subr.mxu0 0.0
    %1336 = vmatpush1.msra.mxu0 0.0
    %1337 = vmatprep.subr.mxu0 0.0
    %1338 = vmatpush1.msra.mxu0 0.0
    %1339 = vmatprep.subr.mxu0 0.0
    %1340 = vmatpush1.msra.mxu0 0.0
    %1341 = vmatprep.subr.mxu0 0.0
    %1342 = vmatpush1.msra.mxu0 0.0
    %1343 = vmatprep.subr.mxu0 0.0
    %1344 = vmatpush1.msra.mxu0 0.0
    %1345 = vmatprep.subr.mxu0 0.0
    %1346 = vmatpush1.msra.mxu0 0.0
    %1347 = vmatprep.subr.mxu0 0.0
    %1348 = vmatpush1.msra.mxu0 0.0
    %1349 = vmatprep.subr.mxu0 0.0
    %1350 = vmatpush1.msra.mxu0 0.0
    %1351 = vmatprep.subr.mxu0 0.0
    %1352 = vmatpush1.msra.mxu0 0.0
    %1353 = vmatprep.subr.mxu0 0.0
    %1354 = vmatpush1.msra.mxu0 0.0
    %1355 = vmatprep.subr.mxu0 0.0
    %1356 = vmatpush1.msra.mxu0 0.0
    %1357 = vmatprep.subr.mxu0 0.0
    %1358 = vmatpush1.msra.mxu0 0.0
    %1359 = vmatprep.subr.mxu0 0.0
    %1360 = vmatpush1.msra.mxu0 0.0
    %1361 = vmatprep.subr.mxu0 0.0
    %1362 = vmatpush1.msra.mxu0 0.0
    %1363 = vmatprep.subr.mxu0 0.0
    %1364 = vmatpush1.msra.mxu0 0.0
    %1365 = vmatprep.subr.mxu0 0.0
    %1366 = vmatpush1.msra.mxu0 0.0
    %1367 = vmatprep.subr.mxu0 0.0
    %1368 = vmatpush1.msra.mxu0 0.0
    %1369 = vmatprep.subr.mxu0 0.0
    %1370 = vmatpush1.msra.mxu0 0.0
    %1371 = vmatprep.subr.mxu0 0.0
    %1372 = vmatpush1.msra.mxu0 0.0
    %1373 = vmatprep.subr.mxu0 0.0
    %1374 = vmatpush1.msra.mxu0 0.0
    %1375 = vmatprep.subr.mxu0 0.0
    %1376 = vmatpush1.msra.mxu0 0.0
    %1377 = vmatprep.subr.mxu0 0.0
    %1378 = vmatpush1.msra.mxu0 0.0
    %1379 = vmatprep.subr.mxu0 0.0
    %1380 = vmatpush1.msra.mxu0 0.0
    %1381 = vmatprep.subr.mxu0 0.0
    %1382 = vmatpush1.msra.mxu0 0.0
    %1383 = vmatprep.mubr.f32.mxu0 0.0
    %1384 = vmatmul.mubr.f32.gmra.mrb[0].mxu0 %v1317
    %v1385 = vpop.f32.mrb[0].mxu0
    %v1386 = vadd.f32 0.0, %v1385
    %v1387 = vpop.f32.mrb[0].mxu0
    %1388 = vdwg.mxu0
    %1389 = vrot.lane.b32.xlu0 %v301, 48
    %v1390 = vpop.permute.xlu0 %1389
    %v1393 = vsel %vm311, %v1312, 0
    %1395 = vmatprep.subr.mxu0 0.0
    %1396 = vmatpush1.msra.mxu0 %v1390
    %1397 = vmatprep.subr.mxu0 0.0
    %1398 = vmatpush1.msra.mxu0 0.0
    %1399 = vmatprep.subr.mxu0 0.0
    %1400 = vmatpush1.msra.mxu0 0.0
    %1401 = vmatprep.subr.mxu0 0.0
    %1402 = vmatpush1.msra.mxu0 0.0
    %1403 = vmatprep.subr.mxu0 0.0
    %1404 = vmatpush1.msra.mxu0 0.0
    %1405 = vmatprep.subr.mxu0 0.0
    %1406 = vmatpush1.msra.mxu0 0.0
    %1407 = vmatprep.subr.mxu0 0.0
    %1408 = vmatpush1.msra.mxu0 0.0
    %1409 = vmatprep.subr.mxu0 0.0
    %1410 = vmatpush1.msra.mxu0 0.0
    %1411 = vmatprep.subr.mxu0 0.0
    %1412 = vmatpush1.msra.mxu0 0.0
    %1413 = vmatprep.subr.mxu0 0.0
    %1414 = vmatpush1.msra.mxu0 0.0
    %1415 = vmatprep.subr.mxu0 0.0
    %1416 = vmatpush1.msra.mxu0 0.0
    %1417 = vmatprep.subr.mxu0 0.0
    %1418 = vmatpush1.msra.mxu0 0.0
    %1419 = vmatprep.subr.mxu0 0.0
    %1420 = vmatpush1.msra.mxu0 0.0
    %1421 = vmatprep.subr.mxu0 0.0
    %1422 = vmatpush1.msra.mxu0 0.0
    %1423 = vmatprep.subr.mxu0 0.0
    %1424 = vmatpush1.msra.mxu0 0.0
    %1425 = vmatprep.subr.mxu0 0.0
    %1426 = vmatpush1.msra.mxu0 0.0
    %1427 = vmatprep.subr.mxu0 0.0
    %1428 = vmatpush1.msra.mxu0 0.0
    %1429 = vmatprep.subr.mxu0 0.0
    %1430 = vmatpush1.msra.mxu0 0.0
    %1431 = vmatprep.subr.mxu0 0.0
    %1432 = vmatpush1.msra.mxu0 0.0
    %1433 = vmatprep.subr.mxu0 0.0
    %1434 = vmatpush1.msra.mxu0 0.0
    %1435 = vmatprep.subr.mxu0 0.0
    %1436 = vmatpush1.msra.mxu0 0.0
    %1437 = vmatprep.subr.mxu0 0.0
    %1438 = vmatpush1.msra.mxu0 0.0
    %1439 = vmatprep.subr.mxu0 0.0
    %1440 = vmatpush1.msra.mxu0 0.0
    %1441 = vmatprep.subr.mxu0 0.0
    %1442 = vmatpush1.msra.mxu0 0.0
    %1443 = vmatprep.subr.mxu0 0.0
    %1444 = vmatpush1.msra.mxu0 0.0
    %1445 = vmatprep.subr.mxu0 0.0
    %1446 = vmatpush1.msra.mxu0 0.0
    %1447 = vmatprep.subr.mxu0 0.0
    %1448 = vmatpush1.msra.mxu0 0.0
    %1449 = vmatprep.subr.mxu0 0.0
    %1450 = vmatpush1.msra.mxu0 0.0
    %1451 = vmatprep.subr.mxu0 0.0
    %1452 = vmatpush1.msra.mxu0 0.0
    %1453 = vmatprep.subr.mxu0 0.0
    %1454 = vmatpush1.msra.mxu0 0.0
    %1455 = vmatprep.subr.mxu0 0.0
    %1456 = vmatpush1.msra.mxu0 0.0
    %1457 = vmatprep.subr.mxu0 0.0
    %1458 = vmatpush1.msra.mxu0 0.0
    %1459 = vmatprep.mubr.f32.mxu0 0.0
    %1460 = vmatmul.mubr.f32.gmra.mrb[0].mxu0 %v1393
    %v1461 = vpop.f32.mrb[0].mxu0
    %v1462 = vadd.f32 0.0, %v1461
    %v1463 = vpop.f32.mrb[0].mxu0
    %1464 = vdwg.mxu0
    %v1466 = vsel %vm311, %v1386, 0
    %v1469 = vsel %vm311, %v1462, 0
    %1471 = vmatprep.subr.mxu0 0.0
    %1472 = vmatpush1.msra.mxu0 %v306
    %1473 = vmatprep.subr.mxu0 0.0
    %1474 = vmatpush1.msra.mxu0 0.0
    %1475 = vmatprep.subr.mxu0 0.0
    %1476 = vmatpush1.msra.mxu0 0.0
    %1477 = vmatprep.subr.mxu0 0.0
    %1478 = vmatpush1.msra.mxu0 0.0
    %1479 = vmatprep.subr.mxu0 0.0
    %1480 = vmatpush1.msra.mxu0 0.0
    %1481 = vmatprep.subr.mxu0 0.0
    %1482 = vmatpush1.msra.mxu0 0.0
    %1483 = vmatprep.subr.mxu0 0.0
    %1484 = vmatpush1.msra.mxu0 0.0
    %1485 = vmatprep.subr.mxu0 0.0
    %1486 = vmatpush1.msra.mxu0 0.0
    %1487 = vmatprep.subr.mxu0 0.0
    %1488 = vmatpush1.msra.mxu0 0.0
    %1489 = vmatprep.subr.mxu0 0.0
    %1490 = vmatpush1.msra.mxu0 0.0
    %1491 = vmatprep.subr.mxu0 0.0
    %1492 = vmatpush1.msra.mxu0 0.0
    %1493 = vmatprep.subr.mxu0 0.0
    %1494 = vmatpush1.msra.mxu0 0.0
    %1495 = vmatprep.subr.mxu0 0.0
    %1496 = vmatpush1.msra.mxu0 0.0
    %1497 = vmatprep.subr.mxu0 0.0
    %1498 = vmatpush1.msra.mxu0 0.0
    %1499 = vmatprep.subr.mxu0 0.0
    %1500 = vmatpush1.msra.mxu0 0.0
    %1501 = vmatprep.subr.mxu0 0.0
    %1502 = vmatpush1.msra.mxu0 0.0
    %1503 = vmatprep.subr.mxu0 0.0
    %1504 = vmatpush1.msra.mxu0 0.0
    %1505 = vmatprep.subr.mxu0 0.0
    %1506 = vmatpush1.msra.mxu0 0.0
    %1507 = vmatprep.subr.mxu0 0.0
    %1508 = vmatpush1.msra.mxu0 0.0
    %1509 = vmatprep.subr.mxu0 0.0
    %1510 = vmatpush1.msra.mxu0 0.0
    %1511 = vmatprep.subr.mxu0 0.0
    %1512 = vmatpush1.msra.mxu0 0.0
    %1513 = vmatprep.subr.mxu0 0.0
    %1514 = vmatpush1.msra.mxu0 0.0
    %1515 = vmatprep.subr.mxu0 0.0
    %1516 = vmatpush1.msra.mxu0 0.0
    %1517 = vmatprep.subr.mxu0 0.0
    %1518 = vmatpush1.msra.mxu0 0.0
    %1519 = vmatprep.subr.mxu0 0.0
    %1520 = vmatpush1.msra.mxu0 0.0
    %1521 = vmatprep.subr.mxu0 0.0
    %1522 = vmatpush1.msra.mxu0 0.0
    %1523 = vmatprep.subr.mxu0 0.0
    %1524 = vmatpush1.msra.mxu0 0.0
    %1525 = vmatprep.subr.mxu0 0.0
    %1526 = vmatpush1.msra.mxu0 0.0
    %1527 = vmatprep.subr.mxu0 0.0
    %1528 = vmatpush1.msra.mxu0 0.0
    %1529 = vmatprep.subr.mxu0 0.0
    %1530 = vmatpush1.msra.mxu0 0.0
    %1531 = vmatprep.subr.mxu0 0.0
    %1532 = vmatpush1.msra.mxu0 0.0
    %1533 = vmatprep.subr.mxu0 0.0
    %1534 = vmatpush1.msra.mxu0 0.0
    %1535 = vmatprep.mubr.f32.mxu0 0.0
    %1536 = vmatmul.mubr.f32.gmra.mrb[0].mxu0 %v1466
    %v1537 = vpop.f32.mrb[0].mxu0
    %v1538 = vadd.f32 0.0, %v1537
    %v1539 = vpop.f32.mrb[0].mxu0
    %1540 = vmatprep.mubr.f32.mxu0 0.0
    %1541 = vmatmul.mubr.f32.gmra.mrb[0].mxu0 %v1469
    %v1542 = vpop.f32.mrb[0].mxu0
    %v1543 = vadd.f32 0.0, %v1542
    %v1544 = vpop.f32.mrb[0].mxu0
    %1545 = vdwg.mxu0
    %v1546 = vadd.f32 %v1125, %v1538
    %v1547 = vadd.f32 %v1130, %v1543
    %1548 = vrot.lane.b32.xlu0 %v296, 104
    %v1549 = vpop.permute.xlu0 %1548
    %1550 = vrot.lane.b32.xlu0 %v296, 72
    %v1551 = vpop.permute.xlu0 %1550
    %v1552 = vsel %vm311, %v1549, 0
    %v1554 = vsel %vm311, %v1551, 0
    %1556 = vmatprep.subr.mxu0 0.0
    %1557 = vmatpush1.xpose.msra.mxu0 %v1554
    %1558 = vmatprep.subr.mxu0 0.0
    %1559 = vmatpush1.xpose.msra.mxu0 0.0
    %1560 = vmatprep.subr.mxu0 0.0
    %1561 = vmatpush1.xpose.msra.mxu0 0.0
    %1562 = vmatprep.subr.mxu0 0.0
    %1563 = vmatpush1.xpose.msra.mxu0 0.0
    %1564 = vmatprep.subr.mxu0 0.0
    %1565 = vmatpush1.xpose.msra.mxu0 0.0
    %1566 = vmatprep.subr.mxu0 0.0
    %1567 = vmatpush1.xpose.msra.mxu0 0.0
    %1568 = vmatprep.subr.mxu0 0.0
    %1569 = vmatpush1.xpose.msra.mxu0 0.0
    %1570 = vmatprep.subr.mxu0 0.0
    %1571 = vmatpush1.xpose.msra.mxu0 0.0
    %1572 = vmatprep.subr.mxu0 0.0
    %1573 = vmatpush1.xpose.msra.mxu0 0.0
    %1574 = vmatprep.subr.mxu0 0.0
    %1575 = vmatpush1.xpose.msra.mxu0 0.0
    %1576 = vmatprep.subr.mxu0 0.0
    %1577 = vmatpush1.xpose.msra.mxu0 0.0
    %1578 = vmatprep.subr.mxu0 0.0
    %1579 = vmatpush1.xpose.msra.mxu0 0.0
    %1580 = vmatprep.subr.mxu0 0.0
    %1581 = vmatpush1.xpose.msra.mxu0 0.0
    %1582 = vmatprep.subr.mxu0 0.0
    %1583 = vmatpush1.xpose.msra.mxu0 0.0
    %1584 = vmatprep.subr.mxu0 0.0
    %1585 = vmatpush1.xpose.msra.mxu0 0.0
    %1586 = vmatprep.subr.mxu0 0.0
    %1587 = vmatpush1.xpose.msra.mxu0 0.0
    %1588 = vmatprep.subr.mxu0 0.0
    %1589 = vmatpush1.xpose.msra.mxu0 0.0
    %1590 = vmatprep.subr.mxu0 0.0
    %1591 = vmatpush1.xpose.msra.mxu0 0.0
    %1592 = vmatprep.subr.mxu0 0.0
    %1593 = vmatpush1.xpose.msra.mxu0 0.0
    %1594 = vmatprep.subr.mxu0 0.0
    %1595 = vmatpush1.xpose.msra.mxu0 0.0
    %1596 = vmatprep.subr.mxu0 0.0
    %1597 = vmatpush1.xpose.msra.mxu0 0.0
    %1598 = vmatprep.subr.mxu0 0.0
    %1599 = vmatpush1.xpose.msra.mxu0 0.0
    %1600 = vmatprep.subr.mxu0 0.0
    %1601 = vmatpush1.xpose.msra.mxu0 0.0
    %1602 = vmatprep.subr.mxu0 0.0
    %1603 = vmatpush1.xpose.msra.mxu0 0.0
    %1604 = vmatprep.subr.mxu0 0.0
    %1605 = vmatpush1.xpose.msra.mxu0 0.0
    %1606 = vmatprep.subr.mxu0 0.0
    %1607 = vmatpush1.xpose.msra.mxu0 0.0
    %1608 = vmatprep.subr.mxu0 0.0
    %1609 = vmatpush1.xpose.msra.mxu0 0.0
    %1610 = vmatprep.subr.mxu0 0.0
    %1611 = vmatpush1.xpose.msra.mxu0 0.0
    %1612 = vmatprep.subr.mxu0 0.0
    %1613 = vmatpush1.xpose.msra.mxu0 0.0
    %1614 = vmatprep.subr.mxu0 0.0
    %1615 = vmatpush1.xpose.msra.mxu0 0.0
    %1616 = vmatprep.subr.mxu0 0.0
    %1617 = vmatpush1.xpose.msra.mxu0 0.0
    %1618 = vmatprep.subr.mxu0 0.0
    %1619 = vmatpush1.xpose.msra.mxu0 0.0
    %1620 = vmatprep.mubr.f32.mxu0 0.0
    %1621 = vmatmul.mubr.f32.gmra.mrb[0].mxu0 %v1552
    %v1622 = vpop.f32.mrb[0].mxu0
    %v1623 = vadd.f32 0.0, %v1622
    %v1624 = vpop.f32.mrb[0].mxu0
    %1625 = vdwg.mxu0
    %1626 = vrot.lane.b32.xlu0 %v301, 104
    %v1627 = vpop.permute.xlu0 %1626
    %1628 = vrot.lane.b32.xlu0 %v301, 72
    %v1629 = vpop.permute.xlu0 %1628
    %v1630 = vsel %vm311, %v1627, 0
    %v1632 = vsel %vm311, %v1629, 0
    %1634 = vmatprep.subr.mxu0 0.0
    %1635 = vmatpush1.xpose.msra.mxu0 %v1632
    %1636 = vmatprep.subr.mxu0 0.0
    %1637 = vmatpush1.xpose.msra.mxu0 0.0
    %1638 = vmatprep.subr.mxu0 0.0
    %1639 = vmatpush1.xpose.msra.mxu0 0.0
    %1640 = vmatprep.subr.mxu0 0.0
    %1641 = vmatpush1.xpose.msra.mxu0 0.0
    %1642 = vmatprep.subr.mxu0 0.0
    %1643 = vmatpush1.xpose.msra.mxu0 0.0
    %1644 = vmatprep.subr.mxu0 0.0
    %1645 = vmatpush1.xpose.msra.mxu0 0.0
    %1646 = vmatprep.subr.mxu0 0.0
    %1647 = vmatpush1.xpose.msra.mxu0 0.0
    %1648 = vmatprep.subr.mxu0 0.0
    %1649 = vmatpush1.xpose.msra.mxu0 0.0
    %1650 = vmatprep.subr.mxu0 0.0
    %1651 = vmatpush1.xpose.msra.mxu0 0.0
    %1652 = vmatprep.subr.mxu0 0.0
    %1653 = vmatpush1.xpose.msra.mxu0 0.0
    %1654 = vmatprep.subr.mxu0 0.0
    %1655 = vmatpush1.xpose.msra.mxu0 0.0
    %1656 = vmatprep.subr.mxu0 0.0
    %1657 = vmatpush1.xpose.msra.mxu0 0.0
    %1658 = vmatprep.subr.mxu0 0.0
    %1659 = vmatpush1.xpose.msra.mxu0 0.0
    %1660 = vmatprep.subr.mxu0 0.0
    %1661 = vmatpush1.xpose.msra.mxu0 0.0
    %1662 = vmatprep.subr.mxu0 0.0
    %1663 = vmatpush1.xpose.msra.mxu0 0.0
    %1664 = vmatprep.subr.mxu0 0.0
    %1665 = vmatpush1.xpose.msra.mxu0 0.0
    %1666 = vmatprep.subr.mxu0 0.0
    %1667 = vmatpush1.xpose.msra.mxu0 0.0
    %1668 = vmatprep.subr.mxu0 0.0
    %1669 = vmatpush1.xpose.msra.mxu0 0.0
    %1670 = vmatprep.subr.mxu0 0.0
    %1671 = vmatpush1.xpose.msra.mxu0 0.0
    %1672 = vmatprep.subr.mxu0 0.0
    %1673 = vmatpush1.xpose.msra.mxu0 0.0
    %1674 = vmatprep.subr.mxu0 0.0
    %1675 = vmatpush1.xpose.msra.mxu0 0.0
    %1676 = vmatprep.subr.mxu0 0.0
    %1677 = vmatpush1.xpose.msra.mxu0 0.0
    %1678 = vmatprep.subr.mxu0 0.0
    %1679 = vmatpush1.xpose.msra.mxu0 0.0
    %1680 = vmatprep.subr.mxu0 0.0
    %1681 = vmatpush1.xpose.msra.mxu0 0.0
    %1682 = vmatprep.subr.mxu0 0.0
    %1683 = vmatpush1.xpose.msra.mxu0 0.0
    %1684 = vmatprep.subr.mxu0 0.0
    %1685 = vmatpush1.xpose.msra.mxu0 0.0
    %1686 = vmatprep.subr.mxu0 0.0
    %1687 = vmatpush1.xpose.msra.mxu0 0.0
    %1688 = vmatprep.subr.mxu0 0.0
    %1689 = vmatpush1.xpose.msra.mxu0 0.0
    %1690 = vmatprep.subr.mxu0 0.0
    %1691 = vmatpush1.xpose.msra.mxu0 0.0
    %1692 = vmatprep.subr.mxu0 0.0
    %1693 = vmatpush1.xpose.msra.mxu0 0.0
    %1694 = vmatprep.subr.mxu0 0.0
    %1695 = vmatpush1.xpose.msra.mxu0 0.0
    %1696 = vmatprep.subr.mxu0 0.0
    %1697 = vmatpush1.xpose.msra.mxu0 0.0
    %1698 = vmatprep.mubr.f32.mxu0 0.0
    %1699 = vmatmul.mubr.f32.gmra.mrb[0].mxu0 %v1630
    %v1700 = vpop.f32.mrb[0].mxu0
    %v1701 = vadd.f32 0.0, %v1700
    %v1702 = vpop.f32.mrb[0].mxu0
    %1703 = vdwg.mxu0
    %v1704 = vmul.f32 %v1623, 0.35355338
    %v1705 = vmul.f32 %v1701, 0.35355338
    %v1706 = vsel %vm311, %v1704, -inf
    %1707 = vmax.xlane.f32.xlu0 %v1706
    %v1708 = vpop.xlane.xlu0 %1707
    %v1709 = vsel %vm311, %v1705, -inf
    %1710 = vmax.xlane.f32.xlu0 %v1709
    %v1711 = vpop.xlane.xlu0 %1710
    %v1712 = vsub.f32 %v1704, %v1708
    %v1713 = vsub.f32 %v1705, %v1711
    %v1714 = vmul.f32 %v1712, 1.442695
    %v1715 = vpow.pop %v1714
    %v1716 = vmul.f32 %v1713, 1.442695
    %v1717 = vpow.pop %v1716
    %v1718 = vsel %vm311, %v1715, 0.0
    %1719 = vadd.xlane.f32.xlu0 %v1718
    %v1720 = vpop.xlane.xlu0 %1719
    %v1721 = vsel %vm311, %v1717, 0.0
    %1722 = vadd.xlane.f32.xlu0 %v1721
    %v1723 = vpop.xlane.xlu0 %1722
    %v1724 = vrcp.pop %v1720
    %v1725 = vrcp.pop %v1723
    %v1726 = vmul.f32 %v1715, %v1724
    %v1727 = vmul.f32 %v1717, %v1725
    %1728 = vrot.lane.b32.xlu0 %v296, 40
    %v1729 = vpop.permute.xlu0 %1728
    %v1732 = vsel %vm311, %v1726, 0
    %1734 = vmatprep.subr.mxu0 0.0
    %1735 = vmatpush1.msra.mxu0 %v1729
    %1736 = vmatprep.subr.mxu0 0.0
    %1737 = vmatpush1.msra.mxu0 0.0
    %1738 = vmatprep.subr.mxu0 0.0
    %1739 = vmatpush1.msra.mxu0 0.0
    %1740 = vmatprep.subr.mxu0 0.0
    %1741 = vmatpush1.msra.mxu0 0.0
    %1742 = vmatprep.subr.mxu0 0.0
    %1743 = vmatpush1.msra.mxu0 0.0
    %1744 = vmatprep.subr.mxu0 0.0
    %1745 = vmatpush1.msra.mxu0 0.0
    %1746 = vmatprep.subr.mxu0 0.0
    %1747 = vmatpush1.msra.mxu0 0.0
    %1748 = vmatprep.subr.mxu0 0.0
    %1749 = vmatpush1.msra.mxu0 0.0
    %1750 = vmatprep.subr.mxu0 0.0
    %1751 = vmatpush1.msra.mxu0 0.0
    %1752 = vmatprep.subr.mxu0 0.0
    %1753 = vmatpush1.msra.mxu0 0.0
    %1754 = vmatprep.subr.mxu0 0.0
    %1755 = vmatpush1.msra.mxu0 0.0
    %1756 = vmatprep.subr.mxu0 0.0
    %1757 = vmatpush1.msra.mxu0 0.0
    %1758 = vmatprep.subr.mxu0 0.0
    %1759 = vmatpush1.msra.mxu0 0.0
    %1760 = vmatprep.subr.mxu0 0.0
    %1761 = vmatpush1.msra.mxu0 0.0
    %1762 = vmatprep.subr.mxu0 0.0
    %1763 = vmatpush1.msra.mxu0 0.0
    %1764 = vmatprep.subr.mxu0 0.0
    %1765 = vmatpush1.msra.mxu0 0.0
    %1766 = vmatprep.subr.mxu0 0.0
    %1767 = vmatpush1.msra.mxu0 0.0
    %1768 = vmatprep.subr.mxu0 0.0
    %1769 = vmatpush1.msra.mxu0 0.0
    %1770 = vmatprep.subr.mxu0 0.0
    %1771 = vmatpush1.msra.mxu0 0.0
    %1772 = vmatprep.subr.mxu0 0.0
    %1773 = vmatpush1.msra.mxu0 0.0
    %1774 = vmatprep.subr.mxu0 0.0
    %1775 = vmatpush1.msra.mxu0 0.0
    %1776 = vmatprep.subr.mxu0 0.0
    %1777 = vmatpush1.msra.mxu0 0.0
    %1778 = vmatprep.subr.mxu0 0.0
    %1779 = vmatpush1.msra.mxu0 0.0
    %1780 = vmatprep.subr.mxu0 0.0
    %1781 = vmatpush1.msra.mxu0 0.0
    %1782 = vmatprep.subr.mxu0 0.0
    %1783 = vmatpush1.msra.mxu0 0.0
    %1784 = vmatprep.subr.mxu0 0.0
    %1785 = vmatpush1.msra.mxu0 0.0
    %1786 = vmatprep.subr.mxu0 0.0
    %1787 = vmatpush1.msra.mxu0 0.0
    %1788 = vmatprep.subr.mxu0 0.0
    %1789 = vmatpush1.msra.mxu0 0.0
    %1790 = vmatprep.subr.mxu0 0.0
    %1791 = vmatpush1.msra.mxu0 0.0
    %1792 = vmatprep.subr.mxu0 0.0
    %1793 = vmatpush1.msra.mxu0 0.0
    %1794 = vmatprep.subr.mxu0 0.0
    %1795 = vmatpush1.msra.mxu0 0.0
    %1796 = vmatprep.subr.mxu0 0.0
    %1797 = vmatpush1.msra.mxu0 0.0
    %1798 = vmatprep.mubr.f32.mxu0 0.0
    %1799 = vmatmul.mubr.f32.gmra.mrb[0].mxu0 %v1732
    %v1800 = vpop.f32.mrb[0].mxu0
    %v1801 = vadd.f32 0.0, %v1800
    %v1802 = vpop.f32.mrb[0].mxu0
    %1803 = vdwg.mxu0
    %1804 = vrot.lane.b32.xlu0 %v301, 40
    %v1805 = vpop.permute.xlu0 %1804
    %v1808 = vsel %vm311, %v1727, 0
    %1810 = vmatprep.subr.mxu0 0.0
    %1811 = vmatpush1.msra.mxu0 %v1805
    %1812 = vmatprep.subr.mxu0 0.0
    %1813 = vmatpush1.msra.mxu0 0.0
    %1814 = vmatprep.subr.mxu0 0.0
    %1815 = vmatpush1.msra.mxu0 0.0
    %1816 = vmatprep.subr.mxu0 0.0
    %1817 = vmatpush1.msra.mxu0 0.0
    %1818 = vmatprep.subr.mxu0 0.0
    %1819 = vmatpush1.msra.mxu0 0.0
    %1820 = vmatprep.subr.mxu0 0.0
    %1821 = vmatpush1.msra.mxu0 0.0
    %1822 = vmatprep.subr.mxu0 0.0
    %1823 = vmatpush1.msra.mxu0 0.0
    %1824 = vmatprep.subr.mxu0 0.0
    %1825 = vmatpush1.msra.mxu0 0.0
    %1826 = vmatprep.subr.mxu0 0.0
    %1827 = vmatpush1.msra.mxu0 0.0
    %1828 = vmatprep.subr.mxu0 0.0
    %1829 = vmatpush1.msra.mxu0 0.0
    %1830 = vmatprep.subr.mxu0 0.0
    %1831 = vmatpush1.msra.mxu0 0.0
    %1832 = vmatprep.subr.mxu0 0.0
    %1833 = vmatpush1.msra.mxu0 0.0
    %1834 = vmatprep.subr.mxu0 0.0
    %1835 = vmatpush1.msra.mxu0 0.0
    %1836 = vmatprep.subr.mxu0 0.0
    %1837 = vmatpush1.msra.mxu0 0.0
    %1838 = vmatprep.subr.mxu0 0.0
    %1839 = vmatpush1.msra.mxu0 0.0
    %1840 = vmatprep.subr.mxu0 0.0
    %1841 = vmatpush1.msra.mxu0 0.0
    %1842 = vmatprep.subr.mxu0 0.0
    %1843 = vmatpush1.msra.mxu0 0.0
    %1844 = vmatprep.subr.mxu0 0.0
    %1845 = vmatpush1.msra.mxu0 0.0
    %1846 = vmatprep.subr.mxu0 0.0
    %1847 = vmatpush1.msra.mxu0 0.0
    %1848 = vmatprep.subr.mxu0 0.0
    %1849 = vmatpush1.msra.mxu0 0.0
    %1850 = vmatprep.subr.mxu0 0.0
    %1851 = vmatpush1.msra.mxu0 0.0
    %1852 = vmatprep.subr.mxu0 0.0
    %1853 = vmatpush1.msra.mxu0 0.0
    %1854 = vmatprep.subr.mxu0 0.0
    %1855 = vmatpush1.msra.mxu0 0.0
    %1856 = vmatprep.subr.mxu0 0.0
    %1857 = vmatpush1.msra.mxu0 0.0
    %1858 = vmatprep.subr.mxu0 0.0
    %1859 = vmatpush1.msra.mxu0 0.0
    %1860 = vmatprep.subr.mxu0 0.0
    %1861 = vmatpush1.msra.mxu0 0.0
    %1862 = vmatprep.subr.mxu0 0.0
    %1863 = vmatpush1.msra.mxu0 0.0
    %1864 = vmatprep.subr.mxu0 0.0
    %1865 = vmatpush1.msra.mxu0 0.0
    %1866 = vmatprep.subr.mxu0 0.0
    %1867 = vmatpush1.msra.mxu0 0.0
    %1868 = vmatprep.subr.mxu0 0.0
    %1869 = vmatpush1.msra.mxu0 0.0
    %1870 = vmatprep.subr.mxu0 0.0
    %1871 = vmatpush1.msra.mxu0 0.0
    %1872 = vmatprep.subr.mxu0 0.0
    %1873 = vmatpush1.msra.mxu0 0.0
    %1874 = vmatprep.mubr.f32.mxu0 0.0
    %1875 = vmatmul.mubr.f32.gmra.mrb[0].mxu0 %v1808
    %v1876 = vpop.f32.mrb[0].mxu0
    %v1877 = vadd.f32 0.0, %v1876
    %v1878 = vpop.f32.mrb[0].mxu0
    %1879 = vdwg.mxu0
    %v1881 = vsel %vm311, %v1801, 0
    %v1884 = vsel %vm311, %v1877, 0
    %1886 = vmatprep.subr.mxu0 0.0
    %1887 = vmatpush1.msra.mxu0 %v307
    %1888 = vmatprep.subr.mxu0 0.0
    %1889 = vmatpush1.msra.mxu0 0.0
    %1890 = vmatprep.subr.mxu0 0.0
    %1891 = vmatpush1.msra.mxu0 0.0
    %1892 = vmatprep.subr.mxu0 0.0
    %1893 = vmatpush1.msra.mxu0 0.0
    %1894 = vmatprep.subr.mxu0 0.0
    %1895 = vmatpush1.msra.mxu0 0.0
    %1896 = vmatprep.subr.mxu0 0.0
    %1897 = vmatpush1.msra.mxu0 0.0
    %1898 = vmatprep.subr.mxu0 0.0
    %1899 = vmatpush1.msra.mxu0 0.0
    %1900 = vmatprep.subr.mxu0 0.0
    %1901 = vmatpush1.msra.mxu0 0.0
    %1902 = vmatprep.subr.mxu0 0.0
    %1903 = vmatpush1.msra.mxu0 0.0
    %1904 = vmatprep.subr.mxu0 0.0
    %1905 = vmatpush1.msra.mxu0 0.0
    %1906 = vmatprep.subr.mxu0 0.0
    %1907 = vmatpush1.msra.mxu0 0.0
    %1908 = vmatprep.subr.mxu0 0.0
    %1909 = vmatpush1.msra.mxu0 0.0
    %1910 = vmatprep.subr.mxu0 0.0
    %1911 = vmatpush1.msra.mxu0 0.0
    %1912 = vmatprep.subr.mxu0 0.0
    %1913 = vmatpush1.msra.mxu0 0.0
    %1914 = vmatprep.subr.mxu0 0.0
    %1915 = vmatpush1.msra.mxu0 0.0
    %1916 = vmatprep.subr.mxu0 0.0
    %1917 = vmatpush1.msra.mxu0 0.0
    %1918 = vmatprep.subr.mxu0 0.0
    %1919 = vmatpush1.msra.mxu0 0.0
    %1920 = vmatprep.subr.mxu0 0.0
    %1921 = vmatpush1.msra.mxu0 0.0
    %1922 = vmatprep.subr.mxu0 0.0
    %1923 = vmatpush1.msra.mxu0 0.0
    %1924 = vmatprep.subr.mxu0 0.0
    %1925 = vmatpush1.msra.mxu0 0.0
    %1926 = vmatprep.subr.mxu0 0.0
    %1927 = vmatpush1.msra.mxu0 0.0
    %1928 = vmatprep.subr.mxu0 0.0
    %1929 = vmatpush1.msra.mxu0 0.0
    %1930 = vmatprep.subr.mxu0 0.0
    %1931 = vmatpush1.msra.mxu0 0.0
    %1932 = vmatprep.subr.mxu0 0.0
    %1933 = vmatpush1.msra.mxu0 0.0
    %1934 = vmatprep.subr.mxu0 0.0
    %1935 = vmatpush1.msra.mxu0 0.0
    %1936 = vmatprep.subr.mxu0 0.0
    %1937 = vmatpush1.msra.mxu0 0.0
    %1938 = vmatprep.subr.mxu0 0.0
    %1939 = vmatpush1.msra.mxu0 0.0
    %1940 = vmatprep.subr.mxu0 0.0
    %1941 = vmatpush1.msra.mxu0 0.0
    %1942 = vmatprep.subr.mxu0 0.0
    %1943 = vmatpush1.msra.mxu0 0.0
    %1944 = vmatprep.subr.mxu0 0.0
    %1945 = vmatpush1.msra.mxu0 0.0
    %1946 = vmatprep.subr.mxu0 0.0
    %1947 = vmatpush1.msra.mxu0 0.0
    %1948 = vmatprep.subr.mxu0 0.0
    %1949 = vmatpush1.msra.mxu0 0.0
    %1950 = vmatprep.mubr.f32.mxu0 0.0
    %1951 = vmatmul.mubr.f32.gmra.mrb[0].mxu0 %v1881
    %v1952 = vpop.f32.mrb[0].mxu0
    %v1953 = vadd.f32 0.0, %v1952
    %v1954 = vpop.f32.mrb[0].mxu0
    %1955 = vmatprep.mubr.f32.mxu0 0.0
    %1956 = vmatmul.mubr.f32.gmra.mrb[0].mxu0 %v1884
    %v1957 = vpop.f32.mrb[0].mxu0
    %v1958 = vadd.f32 0.0, %v1957
    %v1959 = vpop.f32.mrb[0].mxu0
    %1960 = vdwg.mxu0
    %v1961 = vadd.f32 %v1546, %v1953
    %v1962 = vadd.f32 %v1547, %v1958
    %v1963 = vadd.f32 %v158, %v1961
    %v1964 = vadd.f32 %v163, %v1962
    %v1965 = vld [vmem:[%s7] sm:$0x1]
    %v1967 = vlaneseq
    %v1968 = vshrl.u32 %v1967, 7
    %v1969 = vsub.s32 0, %v1968
    %v1970 = vrot.slane %v1965, %v1969
    %v1972 = vadd.f32 %v1963, %v1970
    %v1973 = vadd.f32 %v1964, %v1970
    %v1974 = vld [vmem:[%s8] sm:$0x1]
    %v1975 = vld [vmem:[%s9] sm:$0x1]
    %v1976 = vsel %vm168, %v1972, 0.0
    %1977 = vadd.xlane.f32.xlu0 %v1976
    %v1978 = vpop.xlane.xlu0 %1977
    %v1979 = vsel %vm168, %v1973, 0.0
    %1980 = vadd.xlane.f32.xlu0 %v1979
    %v1981 = vpop.xlane.xlu0 %1980
    %v1982 = vmul.f32 %v1978, %v175
    %v1983 = vmul.f32 %v1981, %v175
    %v1984 = vsub.f32 %v1972, %v1982
    %v1985 = vsub.f32 %v1973, %v1983
    %v1986 = vmul.f32 %v1984, %v1984
    %v1987 = vmul.f32 %v1985, %v1985
    %v1988 = vsel %vm168, %v1986, 0.0
    %1989 = vadd.xlane.f32.xlu0 %v1988
    %v1990 = vpop.xlane.xlu0 %1989
    %v1991 = vsel %vm168, %v1987, 0.0
    %1992 = vadd.xlane.f32.xlu0 %v1991
    %v1993 = vpop.xlane.xlu0 %1992
    %v1994 = vmul.f32 %v1990, %v175
    %v1995 = vmul.f32 %v1993, %v175
    %v1996 = vadd.f32 %v1994, 1e-05
    %v1997 = vadd.f32 %v1995, 1e-05
    %v1998 = vrsqrt.pop %v1996
    %v1999 = vrsqrt.pop %v1997
    %v2000 = vmul.f32 %v1984, %v1998
    %v2001 = vmul.f32 %v1985, %v1999
    %v2003 = vlaneseq
    %v2004 = vshrl.u32 %v2003, 7
    %v2005 = vsub.s32 0, %v2004
    %v2006 = vrot.slane %v1974, %v2005
    %v2008 = vmul.f32 %v2000, %v2006
    %v2009 = vmul.f32 %v2001, %v2006
    %v2011 = vlaneseq
    %v2012 = vshrl.u32 %v2011, 7
    %v2013 = vsub.s32 0, %v2012
    %v2014 = vrot.slane %v1975, %v2013
    %v2016 = vadd.f32 %v2008, %v2014
    %v2017 = vadd.f32 %v2009, %v2014
    %v2018 = vld [vmem:[%s10] sm:$0xff]
    %v2019 = vld [vmem:[%s10 + $0x8] sm:$0xff]
    %v2020 = vld [vmem:[%s10 + $0x10] sm:$0xff]
    %v2021 = vld [vmem:[%s10 + $0x18] sm:$0xff]
    %v2022 = vld [vmem:[%s11] sm:$0x1]
    %v2024 = vlaneseq
    %v2025 = vshrl.u32 %v2024, 7
    %v2026 = vsub.s32 0, %v2025
    %v2027 = vrot.slane %v2022, %v2026
    %v2030 = vsel %vm168, %v2016, 0
    %v2033 = vsel %vm168, %v2017, 0
    %2035 = vmatprep.subr.mxu0 0.0
    %2036 = vmatpush1.msra.mxu0 %v2018
    %2037 = vmatprep.subr.mxu0 0.0
    %2038 = vmatpush1.msra.mxu0 %v2019
    %2039 = vmatprep.subr.mxu0 0.0
    %2040 = vmatpush1.msra.mxu0 %v2020
    %2041 = vmatprep.subr.mxu0 0.0
    %2042 = vmatpush1.msra.mxu0 %v2021
    %2043 = vmatprep.subr.mxu0 0.0
    %2044 = vmatpush1.msra.mxu0 0.0
    %2045 = vmatprep.subr.mxu0 0.0
    %2046 = vmatpush1.msra.mxu0 0.0
    %2047 = vmatprep.subr.mxu0 0.0
    %2048 = vmatpush1.msra.mxu0 0.0
    %2049 = vmatprep.subr.mxu0 0.0
    %2050 = vmatpush1.msra.mxu0 0.0
    %2051 = vmatprep.subr.mxu0 0.0
    %2052 = vmatpush1.msra.mxu0 0.0
    %2053 = vmatprep.subr.mxu0 0.0
    %2054 = vmatpush1.msra.mxu0 0.0
    %2055 = vmatprep.subr.mxu0 0.0
    %2056 = vmatpush1.msra.mxu0 0.0
    %2057 = vmatprep.subr.mxu0 0.0
    %2058 = vmatpush1.msra.mxu0 0.0
    %2059 = vmatprep.subr.mxu0 0.0
    %2060 = vmatpush1.msra.mxu0 0.0
    %2061 = vmatprep.subr.mxu0 0.0
    %2062 = vmatpush1.msra.mxu0 0.0
    %2063 = vmatprep.subr.mxu0 0.0
    %2064 = vmatpush1.msra.mxu0 0.0
    %2065 = vmatprep.subr.mxu0 0.0
    %2066 = vmatpush1.msra.mxu0 0.0
    %2067 = vmatprep.subr.mxu0 0.0
    %2068 = vmatpush1.msra.mxu0 0.0
    %2069 = vmatprep.subr.mxu0 0.0
    %2070 = vmatpush1.msra.mxu0 0.0
    %2071 = vmatprep.subr.mxu0 0.0
    %2072 = vmatpush1.msra.mxu0 0.0
    %2073 = vmatprep.subr.mxu0 0.0
    %2074 = vmatpush1.msra.mxu0 0.0
    %2075 = vmatprep.subr.mxu0 0.0
    %2076 = vmatpush1.msra.mxu0 0.0
    %2077 = vmatprep.subr.mxu0 0.0
    %2078 = vmatpush1.msra.mxu0 0.0
    %2079 = vmatprep.subr.mxu0 0.0
    %2080 = vmatpush1.msra.mxu0 0.0
    %2081 = vmatprep.subr.mxu0 0.0
    %2082 = vmatpush1.msra.mxu0 0.0
    %2083 = vmatprep.subr.mxu0 0.0
    %2084 = vmatpush1.msra.mxu0 0.0
    %2085 = vmatprep.subr.mxu0 0.0
    %2086 = vmatpush1.msra.mxu0 0.0
    %2087 = vmatprep.subr.mxu0 0.0
    %2088 = vmatpush1.msra.mxu0 0.0
    %2089 = vmatprep.subr.mxu0 0.0
    %2090 = vmatpush1.msra.mxu0 0.0
    %2091 = vmatprep.subr.mxu0 0.0
    %2092 = vmatpush1.msra.mxu0 0.0
    %2093 = vmatprep.subr.mxu0 0.0
    %2094 = vmatpush1.msra.mxu0 0.0
    %2095 = vmatprep.subr.mxu0 0.0
    %2096 = vmatpush1.msra.mxu0 0.0
    %2097 = vmatprep.subr.mxu0 0.0
    %2098 = vmatpush1.msra.mxu0 0.0
    %2099 = vmatprep.mubr.f32.mxu0 0.0
    %2100 = vmatmul.mubr.f32.gmra.mrb[0].mxu0 %v2030
    %v2101 = vpop.f32.mrb[0].mxu0
    %v2102 = vadd.f32 %v2027, %v2101
    %v2103 = vpop.f32.mrb[0].mxu0
    %2104 = vmatprep.mubr.f32.mxu0 0.0
    %2105 = vmatmul.mubr.f32.gmra.mrb[0].mxu0 %v2033
    %v2106 = vpop.f32.mrb[0].mxu0
    %v2107 = vadd.f32 %v2027, %v2106
    %v2108 = vpop.f32.mrb[0].mxu0
    %2109 = vdwg.mxu0
    %v2110 = vmul.f32 %v2102, 0.5
    %v2111 = vmul.f32 %v2107, 0.5
    %v2112 = vmul.f32 %v2102, 0.70710677
    %v2113 = vmul.f32 %v2107, 0.70710677
    %v2114 = verf.f32.pop %v2112
    %v2115 = verf.f32.pop %v2113
    %v2116 = vadd.f32 %v2114, 1.0
    %v2117 = vadd.f32 %v2115, 1.0
    %v2118 = vmul.f32 %v2110, %v2116
    %v2119 = vmul.f32 %v2111, %v2117
    %v2120 = vld [vmem:[%s12] sm:$0xff]
    %v2121 = vld [vmem:[%s12 + $0x8] sm:$0xff]
    %v2122 = vld [vmem:[%s12 + $0x10] sm:$0xff]
    %v2123 = vld [vmem:[%s12 + $0x18] sm:$0xff]
    %v2124 = vld [vmem:[%s12 + $0x20] sm:$0xff]
    %v2125 = vld [vmem:[%s12 + $0x28] sm:$0xff]
    %v2126 = vld [vmem:[%s12 + $0x30] sm:$0xff]
    %v2127 = vld [vmem:[%s12 + $0x38] sm:$0xff]
    %v2129 = vsel %vm84, %v2118, 0
    %v2132 = vsel %vm84, %v2119, 0
    %2134 = vmatprep.subr.mxu0 0.0
    %2135 = vmatpush1.msra.mxu0 %v2120
    %2136 = vmatprep.subr.mxu0 0.0
    %2137 = vmatpush1.msra.mxu0 %v2121
    %2138 = vmatprep.subr.mxu0 0.0
    %2139 = vmatpush1.msra.mxu0 %v2122
    %2140 = vmatprep.subr.mxu0 0.0
    %2141 = vmatpush1.msra.mxu0 %v2123
    %2142 = vmatprep.subr.mxu0 0.0
    %2143 = vmatpush1.msra.mxu0 %v2124
    %2144 = vmatprep.subr.mxu0 0.0
    %2145 = vmatpush1.msra.mxu0 %v2125
    %2146 = vmatprep.subr.mxu0 0.0
    %2147 = vmatpush1.msra.mxu0 %v2126
    %2148 = vmatprep.subr.mxu0 0.0
    %2149 = vmatpush1.msra.mxu0 %v2127
    %2150 = vmatprep.subr.mxu0 0.0
    %2151 = vmatpush1.msra.mxu0 0.0
    %2152 = vmatprep.subr.mxu0 0.0
    %2153 = vmatpush1.msra.mxu0 0.0
    %2154 = vmatprep.subr.mxu0 0.0
    %2155 = vmatpush1.msra.mxu0 0.0
    %2156 = vmatprep.subr.mxu0 0.0
    %2157 = vmatpush1.msra.mxu0 0.0
    %2158 = vmatprep.subr.mxu0 0.0
    %2159 = vmatpush1.msra.mxu0 0.0
    %2160 = vmatprep.subr.mxu0 0.0
    %2161 = vmatpush1.msra.mxu0 0.0
    %2162 = vmatprep.subr.mxu0 0.0
    %2163 = vmatpush1.msra.mxu0 0.0
    %2164 = vmatprep.subr.mxu0 0.0
    %2165 = vmatpush1.msra.mxu0 0.0
    %2166 = vmatprep.subr.mxu0 0.0
    %2167 = vmatpush1.msra.mxu0 0.0
    %2168 = vmatprep.subr.mxu0 0.0
    %2169 = vmatpush1.msra.mxu0 0.0
    %2170 = vmatprep.subr.mxu0 0.0
    %2171 = vmatpush1.msra.mxu0 0.0
    %2172 = vmatprep.subr.mxu0 0.0
    %2173 = vmatpush1.msra.mxu0 0.0
    %2174 = vmatprep.subr.mxu0 0.0
    %2175 = vmatpush1.msra.mxu0 0.0
    %2176 = vmatprep.subr.mxu0 0.0
    %2177 = vmatpush1.msra.mxu0 0.0
    %2178 = vmatprep.subr.mxu0 0.0
    %2179 = vmatpush1.msra.mxu0 0.0
    %2180 = vmatprep.subr.mxu0 0.0
    %2181 = vmatpush1.msra.mxu0 0.0
    %2182 = vmatprep.subr.mxu0 0.0
    %2183 = vmatpush1.msra.mxu0 0.0
    %2184 = vmatprep.subr.mxu0 0.0
    %2185 = vmatpush1.msra.mxu0 0.0
    %2186 = vmatprep.subr.mxu0 0.0
    %2187 = vmatpush1.msra.mxu0 0.0
    %2188 = vmatprep.subr.mxu0 0.0
    %2189 = vmatpush1.msra.mxu0 0.0
    %2190 = vmatprep.subr.mxu0 0.0
    %2191 = vmatpush1.msra.mxu0 0.0
    %2192 = vmatprep.subr.mxu0 0.0
    %2193 = vmatpush1.msra.mxu0 0.0
    %2194 = vmatprep.subr.mxu0 0.0
    %2195 = vmatpush1.msra.mxu0 0.0
    %2196 = vmatprep.subr.mxu0 0.0
    %2197 = vmatpush1.msra.mxu0 0.0
    %2198 = vmatprep.mubr.f32.mxu0 0.0
    %2199 = vmatmul.mubr.f32.gmra.mrb[0].mxu0 %v2129
    %v2200 = vpop.f32.mrb[0].mxu0
    %v2201 = vadd.f32 0.0, %v2200
    %v2202 = vpop.f32.mrb[0].mxu0
    %2203 = vmatprep.mubr.f32.mxu0 0.0
    %2204 = vmatmul.mubr.f32.gmra.mrb[0].mxu0 %v2132
    %v2205 = vpop.f32.mrb[0].mxu0
    %v2206 = vadd.f32 0.0, %v2205
    %v2207 = vpop.f32.mrb[0].mxu0
    %2208 = vdwg.mxu0
    %v2209 = vadd.f32 %v1972, %v2201
    %v2210 = vadd.f32 %v1973, %v2206
    %v2211 = vld [vmem:[%s13] sm:$0x1]
    %v2213 = vlaneseq
    %v2214 = vshrl.u32 %v2213, 7
    %v2215 = vsub.s32 0, %v2214
    %v2216 = vrot.slane %v2211, %v2215
    %v2218 = vadd.f32 %v2209, %v2216
    %v2219 = vadd.f32 %v2210, %v2216
    %s2220 = scalar_lea.vmem %s2, 1
    %v2221 = vld [vmem:[%s2220] sm:$0x1]
    %s2222 = scalar_lea.vmem %s3, 1
    %v2223 = vld [vmem:[%s2222] sm:$0x1]
    %v2224 = vsel %vm168, %v2218, 0.0
    %2225 = vadd.xlane.f32.xlu0 %v2224
    %v2226 = vpop.xlane.xlu0 %2225
    %v2227 = vsel %vm168, %v2219, 0.0
    %2228 = vadd.xlane.f32.xlu0 %v2227
    %v2229 = vpop.xlane.xlu0 %2228
    %v2230 = vmul.f32 %v2226, %v175
    %v2231 = vmul.f32 %v2229, %v175
    %v2232 = vsub.f32 %v2218, %v2230
    %v2233 = vsub.f32 %v2219, %v2231
    %v2234 = vmul.f32 %v2232, %v2232
    %v2235 = vmul.f32 %v2233, %v2233
    %v2236 = vsel %vm168, %v2234, 0.0
    %2237 = vadd.xlane.f32.xlu0 %v2236
    %v2238 = vpop.xlane.xlu0 %2237
    %v2239 = vsel %vm168, %v2235, 0.0
    %2240 = vadd.xlane.f32.xlu0 %v2239
    %v2241 = vpop.xlane.xlu0 %2240
    %v2242 = vmul.f32 %v2238, %v175
    %v2243 = vmul.f32 %v2241, %v175
    %v2244 = vadd.f32 %v2242, 1e-05
    %v2245 = vadd.f32 %v2243, 1e-05
    %v2246 = vrsqrt.pop %v2244
    %v2247 = vrsqrt.pop %v2245
    %v2248 = vmul.f32 %v2232, %v2246
    %v2249 = vmul.f32 %v2233, %v2247
    %v2251 = vlaneseq
    %v2252 = vshrl.u32 %v2251, 7
    %v2253 = vsub.s32 0, %v2252
    %v2254 = vrot.slane %v2221, %v2253
    %v2256 = vmul.f32 %v2248, %v2254
    %v2257 = vmul.f32 %v2249, %v2254
    %v2259 = vlaneseq
    %v2260 = vshrl.u32 %v2259, 7
    %v2261 = vsub.s32 0, %v2260
    %v2262 = vrot.slane %v2223, %v2261
    %v2264 = vadd.f32 %v2256, %v2262
    %v2265 = vadd.f32 %v2257, %v2262
    %s2266 = scalar_lea.vmem %s4, 32
    %v2267 = vld [vmem:[%s2266] sm:$0xff]
    %v2268 = vld [vmem:[%s2266 + $0x8] sm:$0xff]
    %v2269 = vld [vmem:[%s2266 + $0x10] sm:$0xff]
    %v2270 = vld [vmem:[%s2266 + $0x18] sm:$0xff]
    %s2271 = scalar_lea.vmem %s5, 1
    %v2272 = vld [vmem:[%s2271] sm:$0x1]
    %v2274 = vlaneseq
    %v2275 = vshrl.u32 %v2274, 7
    %v2276 = vsub.s32 0, %v2275
    %v2277 = vrot.slane %v2272, %v2276
    %v2280 = vsel %vm168, %v2264, 0
    %v2283 = vsel %vm168, %v2265, 0
    %2285 = vmatprep.subr.mxu0 0.0
    %2286 = vmatpush1.msra.mxu0 %v2267
    %2287 = vmatprep.subr.mxu0 0.0
    %2288 = vmatpush1.msra.mxu0 %v2268
    %2289 = vmatprep.subr.mxu0 0.0
    %2290 = vmatpush1.msra.mxu0 %v2269
    %2291 = vmatprep.subr.mxu0 0.0
    %2292 = vmatpush1.msra.mxu0 %v2270
    %2293 = vmatprep.subr.mxu0 0.0
    %2294 = vmatpush1.msra.mxu0 0.0
    %2295 = vmatprep.subr.mxu0 0.0
    %2296 = vmatpush1.msra.mxu0 0.0
    %2297 = vmatprep.subr.mxu0 0.0
    %2298 = vmatpush1.msra.mxu0 0.0
    %2299 = vmatprep.subr.mxu0 0.0
    %2300 = vmatpush1.msra.mxu0 0.0
    %2301 = vmatprep.subr.mxu0 0.0
    %2302 = vmatpush1.msra.mxu0 0.0
    %2303 = vmatprep.subr.mxu0 0.0
    %2304 = vmatpush1.msra.mxu0 0.0
    %2305 = vmatprep.subr.mxu0 0.0
    %2306 = vmatpush1.msra.mxu0 0.0
    %2307 = vmatprep.subr.mxu0 0.0
    %2308 = vmatpush1.msra.mxu0 0.0
    %2309 = vmatprep.subr.mxu0 0.0
    %2310 = vmatpush1.msra.mxu0 0.0
    %2311 = vmatprep.subr.mxu0 0.0
    %2312 = vmatpush1.msra.mxu0 0.0
    %2313 = vmatprep.subr.mxu0 0.0
    %2314 = vmatpush1.msra.mxu0 0.0
    %2315 = vmatprep.subr.mxu0 0.0
    %2316 = vmatpush1.msra.mxu0 0.0
    %2317 = vmatprep.subr.mxu0 0.0
    %2318 = vmatpush1.msra.mxu0 0.0
    %2319 = vmatprep.subr.mxu0 0.0
    %2320 = vmatpush1.msra.mxu0 0.0
    %2321 = vmatprep.subr.mxu0 0.0
    %2322 = vmatpush1.msra.mxu0 0.0
    %2323 = vmatprep.subr.mxu0 0.0
    %2324 = vmatpush1.msra.mxu0 0.0
    %2325 = vmatprep.subr.mxu0 0.0
    %2326 = vmatpush1.msra.mxu0 0.0
    %2327 = vmatprep.subr.mxu0 0.0
    %2328 = vmatpush1.msra.mxu0 0.0
    %2329 = vmatprep.subr.mxu0 0.0
    %2330 = vmatpush1.msra.mxu0 0.0
    %2331 = vmatprep.subr.mxu0 0.0
    %2332 = vmatpush1.msra.mxu0 0.0
    %2333 = vmatprep.subr.mxu0 0.0
    %2334 = vmatpush1.msra.mxu0 0.0
    %2335 = vmatprep.subr.mxu0 0.0
    %2336 = vmatpush1.msra.mxu0 0.0
    %2337 = vmatprep.subr.mxu0 0.0
    %2338 = vmatpush1.msra.mxu0 0.0
    %2339 = vmatprep.subr.mxu0 0.0
    %2340 = vmatpush1.msra.mxu0 0.0
    %2341 = vmatprep.subr.mxu0 0.0
    %2342 = vmatpush1.msra.mxu0 0.0
    %2343 = vmatprep.subr.mxu0 0.0
    %2344 = vmatpush1.msra.mxu0 0.0
    %2345 = vmatprep.subr.mxu0 0.0
    %2346 = vmatpush1.msra.mxu0 0.0
    %2347 = vmatprep.subr.mxu0 0.0
    %2348 = vmatpush1.msra.mxu0 0.0
    %2349 = vmatprep.mubr.f32.mxu0 0.0
    %2350 = vmatmul.mubr.f32.gmra.mrb[0].mxu0 %v2280
    %v2351 = vpop.f32.mrb[0].mxu0
    %v2352 = vadd.f32 %v2277, %v2351
    %v2353 = vpop.f32.mrb[0].mxu0
    %2354 = vmatprep.mubr.f32.mxu0 0.0
    %2355 = vmatmul.mubr.f32.gmra.mrb[0].mxu0 %v2283
    %v2356 = vpop.f32.mrb[0].mxu0
    %v2357 = vadd.f32 %v2277, %v2356
    %v2358 = vpop.f32.mrb[0].mxu0
    %2359 = vdwg.mxu0
    %s2360 = scalar_lea.vmem %s6, 32
    %v2361 = vld [vmem:[%s2360] sm:$0xff]
    %v2362 = vld [vmem:[%s2360 + $0x8] sm:$0xff]
    %v2363 = vld [vmem:[%s2360 + $0x10] sm:$0xff]
    %v2364 = vld [vmem:[%s2360 + $0x18] sm:$0xff]
    %2366 = vrot.lane.b32.xlu0 %v2352, 96
    %v2367 = vpop.permute.xlu0 %2366
    %v2368 = vsel %vm311, %v2352, 0
    %v2370 = vsel %vm311, %v2367, 0
    %2372 = vmatprep.subr.mxu0 0.0
    %2373 = vmatpush1.xpose.msra.mxu0 %v2370
    %2374 = vmatprep.subr.mxu0 0.0
    %2375 = vmatpush1.xpose.msra.mxu0 0.0
    %2376 = vmatprep.subr.mxu0 0.0
    %2377 = vmatpush1.xpose.msra.mxu0 0.0
    %2378 = vmatprep.subr.mxu0 0.0
    %2379 = vmatpush1.xpose.msra.mxu0 0.0
    %2380 = vmatprep.subr.mxu0 0.0
    %2381 = vmatpush1.xpose.msra.mxu0 0.0
    %2382 = vmatprep.subr.mxu0 0.0
    %2383 = vmatpush1.xpose.msra.mxu0 0.0
    %2384 = vmatprep.subr.mxu0 0.0
    %2385 = vmatpush1.xpose.msra.mxu0 0.0
    %2386 = vmatprep.subr.mxu0 0.0
    %2387 = vmatpush1.xpose.msra.mxu0 0.0
    %2388 = vmatprep.subr.mxu0 0.0
    %2389 = vmatpush1.xpose.msra.mxu0 0.0
    %2390 = vmatprep.subr.mxu0 0.0
    %2391 = vmatpush1.xpose.msra.mxu0 0.0
    %2392 = vmatprep.subr.mxu0 0.0
    %2393 = vmatpush1.xpose.msra.mxu0 0.0
    %2394 = vmatprep.subr.mxu0 0.0
    %2395 = vmatpush1.xpose.msra.mxu0 0.0
    %2396 = vmatprep.subr.mxu0 0.0
    %2397 = vmatpush1.xpose.msra.mxu0 0.0
    %2398 = vmatprep.subr.mxu0 0.0
    %2399 = vmatpush1.xpose.msra.mxu0 0.0
    %2400 = vmatprep.subr.mxu0 0.0
    %2401 = vmatpush1.xpose.msra.mxu0 0.0
    %2402 = vmatprep.subr.mxu0 0.0
    %2403 = vmatpush1.xpose.msra.mxu0 0.0
    %2404 = vmatprep.subr.mxu0 0.0
    %2405 = vmatpush1.xpose.msra.mxu0 0.0
    %2406 = vmatprep.subr.mxu0 0.0
    %2407 = vmatpush1.xpose.msra.mxu0 0.0
    %2408 = vmatprep.subr.mxu0 0.0
    %2409 = vmatpush1.xpose.msra.mxu0 0.0
    %2410 = vmatprep.subr.mxu0 0.0
    %2411 = vmatpush1.xpose.msra.mxu0 0.0
    %2412 = vmatprep.subr.mxu0 0.0
    %2413 = vmatpush1.xpose.msra.mxu0 0.0
    %2414 = vmatprep.subr.mxu0 0.0
    %2415 = vmatpush1.xpose.msra.mxu0 0.0
    %2416 = vmatprep.subr.mxu0 0.0
    %2417 = vmatpush1.xpose.msra.mxu0 0.0
    %2418 = vmatprep.subr.mxu0 0.0
    %2419 = vmatpush1.xpose.msra.mxu0 0.0
    %2420 = vmatprep.subr.mxu0 0.0
    %2421 = vmatpush1.xpose.msra.mxu0 0.0
    %2422 = vmatprep.subr.mxu0 0.0
    %2423 = vmatpush1.xpose.msra.mxu0 0.0
    %2424 = vmatprep.subr.mxu0 0.0
    %2425 = vmatpush1.xpose.msra.mxu0 0.0
    %2426 = vmatprep.subr.mxu0 0.0
    %2427 = vmatpush1.xpose.msra.mxu0 0.0
    %2428 = vmatprep.subr.mxu0 0.0
    %2429 = vmatpush1.xpose.msra.mxu0 0.0
    %2430 = vmatprep.subr.mxu0 0.0
    %2431 = vmatpush1.xpose.msra.mxu0 0.0
    %2432 = vmatprep.subr.mxu0 0.0
    %2433 = vmatpush1.xpose.msra.mxu0 0.0
    %2434 = vmatprep.subr.mxu0 0.0
    %2435 = vmatpush1.xpose.msra.mxu0 0.0
    %2436 = vmatprep.mubr.f32.mxu0 0.0
    %2437 = vmatmul.mubr.f32.gmra.mrb[0].mxu0 %v2368
    %v2438 = vpop.f32.mrb[0].mxu0
    %v2439 = vadd.f32 0.0, %v2438
    %v2440 = vpop.f32.mrb[0].mxu0
    %2441 = vdwg.mxu0
    %2443 = vrot.lane.b32.xlu0 %v2357, 96
    %v2444 = vpop.permute.xlu0 %2443
    %v2445 = vsel %vm311, %v2357, 0
    %v2447 = vsel %vm311, %v2444, 0
    %2449 = vmatprep.subr.mxu0 0.0
    %2450 = vmatpush1.xpose.msra.mxu0 %v2447
    %2451 = vmatprep.subr.mxu0 0.0
    %2452 = vmatpush1.xpose.msra.mxu0 0.0
    %2453 = vmatprep.subr.mxu0 0.0
    %2454 = vmatpush1.xpose.msra.mxu0 0.0
    %2455 = vmatprep.subr.mxu0 0.0
    %2456 = vmatpush1.xpose.msra.mxu0 0.0
    %2457 = vmatprep.subr.mxu0 0.0
    %2458 = vmatpush1.xpose.msra.mxu0 0.0
    %2459 = vmatprep.subr.mxu0 0.0
    %2460 = vmatpush1.xpose.msra.mxu0 0.0
    %2461 = vmatprep.subr.mxu0 0.0
    %2462 = vmatpush1.xpose.msra.mxu0 0.0
    %2463 = vmatprep.subr.mxu0 0.0
    %2464 = vmatpush1.xpose.msra.mxu0 0.0
    %2465 = vmatprep.subr.mxu0 0.0
    %2466 = vmatpush1.xpose.msra.mxu0 0.0
    %2467 = vmatprep.subr.mxu0 0.0
    %2468 = vmatpush1.xpose.msra.mxu0 0.0
    %2469 = vmatprep.subr.mxu0 0.0
    %2470 = vmatpush1.xpose.msra.mxu0 0.0
    %2471 = vmatprep.subr.mxu0 0.0
    %2472 = vmatpush1.xpose.msra.mxu0 0.0
    %2473 = vmatprep.subr.mxu0 0.0
    %2474 = vmatpush1.xpose.msra.mxu0 0.0
    %2475 = vmatprep.subr.mxu0 0.0
    %2476 = vmatpush1.xpose.msra.mxu0 0.0
    %2477 = vmatprep.subr.mxu0 0.0
    %2478 = vmatpush1.xpose.msra.mxu0 0.0
    %2479 = vmatprep.subr.mxu0 0.0
    %2480 = vmatpush1.xpose.msra.mxu0 0.0
    %2481 = vmatprep.subr.mxu0 0.0
    %2482 = vmatpush1.xpose.msra.mxu0 0.0
    %2483 = vmatprep.subr.mxu0 0.0
    %2484 = vmatpush1.xpose.msra.mxu0 0.0
    %2485 = vmatprep.subr.mxu0 0.0
    %2486 = vmatpush1.xpose.msra.mxu0 0.0
    %2487 = vmatprep.subr.mxu0 0.0
    %2488 = vmatpush1.xpose.msra.mxu0 0.0
    %2489 = vmatprep.subr.mxu0 0.0
    %2490 = vmatpush1.xpose.msra.mxu0 0.0
    %2491 = vmatprep.subr.mxu0 0.0
    %2492 = vmatpush1.xpose.msra.mxu0 0.0
    %2493 = vmatprep.subr.mxu0 0.0
    %2494 = vmatpush1.xpose.msra.mxu0 0.0
    %2495 = vmatprep.subr.mxu0 0.0
    %2496 = vmatpush1.xpose.msra.mxu0 0.0
    %2497 = vmatprep.subr.mxu0 0.0
    %2498 = vmatpush1.xpose.msra.mxu0 0.0
    %2499 = vmatprep.subr.mxu0 0.0
    %2500 = vmatpush1.xpose.msra.mxu0 0.0
    %2501 = vmatprep.subr.mxu0 0.0
    %2502 = vmatpush1.xpose.msra.mxu0 0.0
    %2503 = vmatprep.subr.mxu0 0.0
    %2504 = vmatpush1.xpose.msra.mxu0 0.0
    %2505 = vmatprep.subr.mxu0 0.0
    %2506 = vmatpush1.xpose.msra.mxu0 0.0
    %2507 = vmatprep.subr.mxu0 0.0
    %2508 = vmatpush1.xpose.msra.mxu0 0.0
    %2509 = vmatprep.subr.mxu0 0.0
    %2510 = vmatpush1.xpose.msra.mxu0 0.0
    %2511 = vmatprep.subr.mxu0 0.0
    %2512 = vmatpush1.xpose.msra.mxu0 0.0
    %2513 = vmatprep.mubr.f32.mxu0 0.0
    %2514 = vmatmul.mubr.f32.gmra.mrb[0].mxu0 %v2445
    %v2515 = vpop.f32.mrb[0].mxu0
    %v2516 = vadd.f32 0.0, %v2515
    %v2517 = vpop.f32.mrb[0].mxu0
    %2518 = vdwg.mxu0
    %v2519 = vmul.f32 %v2439, 0.35355338
    %v2520 = vmul.f32 %v2516, 0.35355338
    %v2521 = vsel %vm311, %v2519, -inf
    %2522 = vmax.xlane.f32.xlu0 %v2521
    %v2523 = vpop.xlane.xlu0 %2522
    %v2524 = vsel %vm311, %v2520, -inf
    %2525 = vmax.xlane.f32.xlu0 %v2524
    %v2526 = vpop.xlane.xlu0 %2525
    %v2527 = vsub.f32 %v2519, %v2523
    %v2528 = vsub.f32 %v2520, %v2526
    %v2529 = vmul.f32 %v2527, 1.442695
    %v2530 = vpow.pop %v2529
    %v2531 = vmul.f32 %v2528, 1.442695
    %v2532 = vpow.pop %v2531
    %v2533 = vsel %vm311, %v2530, 0.0
    %2534 = vadd.xlane.f32.xlu0 %v2533
    %v2535 = vpop.xlane.xlu0 %2534
    %v2536 = vsel %vm311, %v2532, 0.0
    %2537 = vadd.xlane.f32.xlu0 %v2536
    %v2538 = vpop.xlane.xlu0 %2537
    %v2539 = vrcp.pop %v2535
    %v2540 = vrcp.pop %v2538
    %v2541 = vmul.f32 %v2530, %v2539
    %v2542 = vmul.f32 %v2532, %v2540
    %2543 = vrot.lane.b32.xlu0 %v2352, 64
    %v2544 = vpop.permute.xlu0 %2543
    %v2547 = vsel %vm311, %v2541, 0
    %2549 = vmatprep.subr.mxu0 0.0
    %2550 = vmatpush1.msra.mxu0 %v2544
    %2551 = vmatprep.subr.mxu0 0.0
    %2552 = vmatpush1.msra.mxu0 0.0
    %2553 = vmatprep.subr.mxu0 0.0
    %2554 = vmatpush1.msra.mxu0 0.0
    %2555 = vmatprep.subr.mxu0 0.0
    %2556 = vmatpush1.msra.mxu0 0.0
    %2557 = vmatprep.subr.mxu0 0.0
    %2558 = vmatpush1.msra.mxu0 0.0
    %2559 = vmatprep.subr.mxu0 0.0
    %2560 = vmatpush1.msra.mxu0 0.0
    %2561 = vmatprep.subr.mxu0 0.0
    %2562 = vmatpush1.msra.mxu0 0.0
    %2563 = vmatprep.subr.mxu0 0.0
    %2564 = vmatpush1.msra.mxu0 0.0
    %2565 = vmatprep.subr.mxu0 0.0
    %2566 = vmatpush1.msra.mxu0 0.0
    %2567 = vmatprep.subr.mxu0 0.0
    %2568 = vmatpush1.msra.mxu0 0.0
    %2569 = vmatprep.subr.mxu0 0.0
    %2570 = vmatpush1.msra.mxu0 0.0
    %2571 = vmatprep.subr.mxu0 0.0
    %2572 = vmatpush1.msra.mxu0 0.0
    %2573 = vmatprep.subr.mxu0 0.0
    %2574 = vmatpush1.msra.mxu0 0.0
    %2575 = vmatprep.subr.mxu0 0.0
    %2576 = vmatpush1.msra.mxu0 0.0
    %2577 = vmatprep.subr.mxu0 0.0
    %2578 = vmatpush1.msra.mxu0 0.0
    %2579 = vmatprep.subr.mxu0 0.0
    %2580 = vmatpush1.msra.mxu0 0.0
    %2581 = vmatprep.subr.mxu0 0.0
    %2582 = vmatpush1.msra.mxu0 0.0
    %2583 = vmatprep.subr.mxu0 0.0
    %2584 = vmatpush1.msra.mxu0 0.0
    %2585 = vmatprep.subr.mxu0 0.0
    %2586 = vmatpush1.msra.mxu0 0.0
    %2587 = vmatprep.subr.mxu0 0.0
    %2588 = vmatpush1.msra.mxu0 0.0
    %2589 = vmatprep.subr.mxu0 0.0
    %2590 = vmatpush1.msra.mxu0 0.0
    %2591 = vmatprep.subr.mxu0 0.0
    %2592 = vmatpush1.msra.mxu0 0.0
    %2593 = vmatprep.subr.mxu0 0.0
    %2594 = vmatpush1.msra.mxu0 0.0
    %2595 = vmatprep.subr.mxu0 0.0
    %2596 = vmatpush1.msra.mxu0 0.0
    %2597 = vmatprep.subr.mxu0 0.0
    %2598 = vmatpush1.msra.mxu0 0.0
    %2599 = vmatprep.subr.mxu0 0.0
    %2600 = vmatpush1.msra.mxu0 0.0
    %2601 = vmatprep.subr.mxu0 0.0
    %2602 = vmatpush1.msra.mxu0 0.0
    %2603 = vmatprep.subr.mxu0 0.0
    %2604 = vmatpush1.msra.mxu0 0.0
    %2605 = vmatprep.subr.mxu0 0.0
    %2606 = vmatpush1.msra.mxu0 0.0
    %2607 = vmatprep.subr.mxu0 0.0
    %2608 = vmatpush1.msra.mxu0 0.0
    %2609 = vmatprep.subr.mxu0 0.0
    %2610 = vmatpush1.msra.mxu0 0.0
    %2611 = vmatprep.subr.mxu0 0.0
    %2612 = vmatpush1.msra.mxu0 0.0
    %2613 = vmatprep.mubr.f32.mxu0 0.0
    %2614 = vmatmul.mubr.f32.gmra.mrb[0].mxu0 %v2547
    %v2615 = vpop.f32.mrb[0].mxu0
    %v2616 = vadd.f32 0.0, %v2615
    %v2617 = vpop.f32.mrb[0].mxu0
    %2618 = vdwg.mxu0
    %2619 = vrot.lane.b32.xlu0 %v2357, 64
    %v2620 = vpop.permute.xlu0 %2619
    %v2623 = vsel %vm311, %v2542, 0
    %2625 = vmatprep.subr.mxu0 0.0
    %2626 = vmatpush1.msra.mxu0 %v2620
    %2627 = vmatprep.subr.mxu0 0.0
    %2628 = vmatpush1.msra.mxu0 0.0
    %2629 = vmatprep.subr.mxu0 0.0
    %2630 = vmatpush1.msra.mxu0 0.0
    %2631 = vmatprep.subr.mxu0 0.0
    %2632 = vmatpush1.msra.mxu0 0.0
    %2633 = vmatprep.subr.mxu0 0.0
    %2634 = vmatpush1.msra.mxu0 0.0
    %2635 = vmatprep.subr.mxu0 0.0
    %2636 = vmatpush1.msra.mxu0 0.0
    %2637 = vmatprep.subr.mxu0 0.0
    %2638 = vmatpush1.msra.mxu0 0.0
    %2639 = vmatprep.subr.mxu0 0.0
    %2640 = vmatpush1.msra.mxu0 0.0
    %2641 = vmatprep.subr.mxu0 0.0
    %2642 = vmatpush1.msra.mxu0 0.0
    %2643 = vmatprep.subr.mxu0 0.0
    %2644 = vmatpush1.msra.mxu0 0.0
    %2645 = vmatprep.subr.mxu0 0.0
    %2646 = vmatpush1.msra.mxu0 0.0
    %2647 = vmatprep.subr.mxu0 0.0
    %2648 = vmatpush1.msra.mxu0 0.0
    %2649 = vmatprep.subr.mxu0 0.0
    %2650 = vmatpush1.msra.mxu0 0.0
    %2651 = vmatprep.subr.mxu0 0.0
    %2652 = vmatpush1.msra.mxu0 0.0
    %2653 = vmatprep.subr.mxu0 0.0
    %2654 = vmatpush1.msra.mxu0 0.0
    %2655 = vmatprep.subr.mxu0 0.0
    %2656 = vmatpush1.msra.mxu0 0.0
    %2657 = vmatprep.subr.mxu0 0.0
    %2658 = vmatpush1.msra.mxu0 0.0
    %2659 = vmatprep.subr.mxu0 0.0
    %2660 = vmatpush1.msra.mxu0 0.0
    %2661 = vmatprep.subr.mxu0 0.0
    %2662 = vmatpush1.msra.mxu0 0.0
    %2663 = vmatprep.subr.mxu0 0.0
    %2664 = vmatpush1.msra.mxu0 0.0
    %2665 = vmatprep.subr.mxu0 0.0
    %2666 = vmatpush1.msra.mxu0 0.0
    %2667 = vmatprep.subr.mxu0 0.0
    %2668 = vmatpush1.msra.mxu0 0.0
    %2669 = vmatprep.subr.mxu0 0.0
    %2670 = vmatpush1.msra.mxu0 0.0
    %2671 = vmatprep.subr.mxu0 0.0
    %2672 = vmatpush1.msra.mxu0 0.0
    %2673 = vmatprep.subr.mxu0 0.0
    %2674 = vmatpush1.msra.mxu0 0.0
    %2675 = vmatprep.subr.mxu0 0.0
    %2676 = vmatpush1.msra.mxu0 0.0
    %2677 = vmatprep.subr.mxu0 0.0
    %2678 = vmatpush1.msra.mxu0 0.0
    %2679 = vmatprep.subr.mxu0 0.0
    %2680 = vmatpush1.msra.mxu0 0.0
    %2681 = vmatprep.subr.mxu0 0.0
    %2682 = vmatpush1.msra.mxu0 0.0
    %2683 = vmatprep.subr.mxu0 0.0
    %2684 = vmatpush1.msra.mxu0 0.0
    %2685 = vmatprep.subr.mxu0 0.0
    %2686 = vmatpush1.msra.mxu0 0.0
    %2687 = vmatprep.subr.mxu0 0.0
    %2688 = vmatpush1.msra.mxu0 0.0
    %2689 = vmatprep.mubr.f32.mxu0 0.0
    %2690 = vmatmul.mubr.f32.gmra.mrb[0].mxu0 %v2623
    %v2691 = vpop.f32.mrb[0].mxu0
    %v2692 = vadd.f32 0.0, %v2691
    %v2693 = vpop.f32.mrb[0].mxu0
    %2694 = vdwg.mxu0
    %2695 = vrot.lane.b32.xlu0 %v2352, 120
    %v2696 = vpop.permute.xlu0 %2695
    %2697 = vrot.lane.b32.xlu0 %v2352, 88
    %v2698 = vpop.permute.xlu0 %2697
    %v2699 = vsel %vm311, %v2696, 0
    %v2701 = vsel %vm311, %v2698, 0
    %2703 = vmatprep.subr.mxu0 0.0
    %2704 = vmatpush1.xpose.msra.mxu0 %v2701
    %2705 = vmatprep.subr.mxu0 0.0
    %2706 = vmatpush1.xpose.msra.mxu0 0.0
    %2707 = vmatprep.subr.mxu0 0.0
    %2708 = vmatpush1.xpose.msra.mxu0 0.0
    %2709 = vmatprep.subr.mxu0 0.0
    %2710 = vmatpush1.xpose.msra.mxu0 0.0
    %2711 = vmatprep.subr.mxu0 0.0
    %2712 = vmatpush1.xpose.msra.mxu0 0.0
    %2713 = vmatprep.subr.mxu0 0.0
    %2714 = vmatpush1.xpose.msra.mxu0 0.0
    %2715 = vmatprep.subr.mxu0 0.0
    %2716 = vmatpush1.xpose.msra.mxu0 0.0
    %2717 = vmatprep.subr.mxu0 0.0
    %2718 = vmatpush1.xpose.msra.mxu0 0.0
    %2719 = vmatprep.subr.mxu0 0.0
    %2720 = vmatpush1.xpose.msra.mxu0 0.0
    %2721 = vmatprep.subr.mxu0 0.0
    %2722 = vmatpush1.xpose.msra.mxu0 0.0
    %2723 = vmatprep.subr.mxu0 0.0
    %2724 = vmatpush1.xpose.msra.mxu0 0.0
    %2725 = vmatprep.subr.mxu0 0.0
    %2726 = vmatpush1.xpose.msra.mxu0 0.0
    %2727 = vmatprep.subr.mxu0 0.0
    %2728 = vmatpush1.xpose.msra.mxu0 0.0
    %2729 = vmatprep.subr.mxu0 0.0
    %2730 = vmatpush1.xpose.msra.mxu0 0.0
    %2731 = vmatprep.subr.mxu0 0.0
    %2732 = vmatpush1.xpose.msra.mxu0 0.0
    %2733 = vmatprep.subr.mxu0 0.0
    %2734 = vmatpush1.xpose.msra.mxu0 0.0
    %2735 = vmatprep.subr.mxu0 0.0
    %2736 = vmatpush1.xpose.msra.mxu0 0.0
    %2737 = vmatprep.subr.mxu0 0.0
    %2738 = vmatpush1.xpose.msra.mxu0 0.0
    %2739 = vmatprep.subr.mxu0 0.0
    %2740 = vmatpush1.xpose.msra.mxu0 0.0
    %2741 = vmatprep.subr.mxu0 0.0
    %2742 = vmatpush1.xpose.msra.mxu0 0.0
    %2743 = vmatprep.subr.mxu0 0.0
    %2744 = vmatpush1.xpose.msra.mxu0 0.0
    %2745 = vmatprep.subr.mxu0 0.0
    %2746 = vmatpush1.xpose.msra.mxu0 0.0
    %2747 = vmatprep.subr.mxu0 0.0
    %2748 = vmatpush1.xpose.msra.mxu0 0.0
    %2749 = vmatprep.subr.mxu0 0.0
    %2750 = vmatpush1.xpose.msra.mxu0 0.0
    %2751 = vmatprep.subr.mxu0 0.0
    %2752 = vmatpush1.xpose.msra.mxu0 0.0
    %2753 = vmatprep.subr.mxu0 0.0
    %2754 = vmatpush1.xpose.msra.mxu0 0.0
    %2755 = vmatprep.subr.mxu0 0.0
    %2756 = vmatpush1.xpose.msra.mxu0 0.0
    %2757 = vmatprep.subr.mxu0 0.0
    %2758 = vmatpush1.xpose.msra.mxu0 0.0
    %2759 = vmatprep.subr.mxu0 0.0
    %2760 = vmatpush1.xpose.msra.mxu0 0.0
    %2761 = vmatprep.subr.mxu0 0.0
    %2762 = vmatpush1.xpose.msra.mxu0 0.0
    %2763 = vmatprep.subr.mxu0 0.0
    %2764 = vmatpush1.xpose.msra.mxu0 0.0
    %2765 = vmatprep.subr.mxu0 0.0
    %2766 = vmatpush1.xpose.msra.mxu0 0.0
    %2767 = vmatprep.mubr.f32.mxu0 0.0
    %2768 = vmatmul.mubr.f32.gmra.mrb[0].mxu0 %v2699
    %v2769 = vpop.f32.mrb[0].mxu0
    %v2770 = vadd.f32 0.0, %v2769
    %v2771 = vpop.f32.mrb[0].mxu0
    %2772 = vdwg.mxu0
    %2773 = vrot.lane.b32.xlu0 %v2357, 120
    %v2774 = vpop.permute.xlu0 %2773
    %2775 = vrot.lane.b32.xlu0 %v2357, 88
    %v2776 = vpop.permute.xlu0 %2775
    %v2777 = vsel %vm311, %v2774, 0
    %v2779 = vsel %vm311, %v2776, 0
    %2781 = vmatprep.subr.mxu0 0.0
    %2782 = vmatpush1.xpose.msra.mxu0 %v2779
    %2783 = vmatprep.subr.mxu0 0.0
    %2784 = vmatpush1.xpose.msra.mxu0 0.0
    %2785 = vmatprep.subr.mxu0 0.0
    %2786 = vmatpush1.xpose.msra.mxu0 0.0
    %2787 = vmatprep.subr.mxu0 0.0
    %2788 = vmatpush1.xpose.msra.mxu0 0.0
    %2789 = vmatprep.subr.mxu0 0.0
    %2790 = vmatpush1.xpose.msra.mxu0 0.0
    %2791 = vmatprep.subr.mxu0 0.0
    %2792 = vmatpush1.xpose.msra.mxu0 0.0
    %2793 = vmatprep.subr.mxu0 0.0
    %2794 = vmatpush1.xpose.msra.mxu0 0.0
    %2795 = vmatprep.subr.mxu0 0.0
    %2796 = vmatpush1.xpose.msra.mxu0 0.0
    %2797 = vmatprep.subr.mxu0 0.0
    %2798 = vmatpush1.xpose.msra.mxu0 0.0
    %2799 = vmatprep.subr.mxu0 0.0
    %2800 = vmatpush1.xpose.msra.mxu0 0.0
    %2801 = vmatprep.subr.mxu0 0.0
    %2802 = vmatpush1.xpose.msra.mxu0 0.0
    %2803 = vmatprep.subr.mxu0 0.0
    %2804 = vmatpush1.xpose.msra.mxu0 0.0
    %2805 = vmatprep.subr.mxu0 0.0
    %2806 = vmatpush1.xpose.msra.mxu0 0.0
    %2807 = vmatprep.subr.mxu0 0.0
    %2808 = vmatpush1.xpose.msra.mxu0 0.0
    %2809 = vmatprep.subr.mxu0 0.0
    %2810 = vmatpush1.xpose.msra.mxu0 0.0
    %2811 = vmatprep.subr.mxu0 0.0
    %2812 = vmatpush1.xpose.msra.mxu0 0.0
    %2813 = vmatprep.subr.mxu0 0.0
    %2814 = vmatpush1.xpose.msra.mxu0 0.0
    %2815 = vmatprep.subr.mxu0 0.0
    %2816 = vmatpush1.xpose.msra.mxu0 0.0
    %2817 = vmatprep.subr.mxu0 0.0
    %2818 = vmatpush1.xpose.msra.mxu0 0.0
    %2819 = vmatprep.subr.mxu0 0.0
    %2820 = vmatpush1.xpose.msra.mxu0 0.0
    %2821 = vmatprep.subr.mxu0 0.0
    %2822 = vmatpush1.xpose.msra.mxu0 0.0
    %2823 = vmatprep.subr.mxu0 0.0
    %2824 = vmatpush1.xpose.msra.mxu0 0.0
    %2825 = vmatprep.subr.mxu0 0.0
    %2826 = vmatpush1.xpose.msra.mxu0 0.0
    %2827 = vmatprep.subr.mxu0 0.0
    %2828 = vmatpush1.xpose.msra.mxu0 0.0
    %2829 = vmatprep.subr.mxu0 0.0
    %2830 = vmatpush1.xpose.msra.mxu0 0.0
    %2831 = vmatprep.subr.mxu0 0.0
    %2832 = vmatpush1.xpose.msra.mxu0 0.0
    %2833 = vmatprep.subr.mxu0 0.0
    %2834 = vmatpush1.xpose.msra.mxu0 0.0
    %2835 = vmatprep.subr.mxu0 0.0
    %2836 = vmatpush1.xpose.msra.mxu0 0.0
    %2837 = vmatprep.subr.mxu0 0.0
    %2838 = vmatpush1.xpose.msra.mxu0 0.0
    %2839 = vmatprep.subr.mxu0 0.0
    %2840 = vmatpush1.xpose.msra.mxu0 0.0
    %2841 = vmatprep.subr.mxu0 0.0
    %2842 = vmatpush1.xpose.msra.mxu0 0.0
    %2843 = vmatprep.subr.mxu0 0.0
    %2844 = vmatpush1.xpose.msra.mxu0 0.0
    %2845 = vmatprep.mubr.f32.mxu0 0.0
    %2846 = vmatmul.mubr.f32.gmra.mrb[0].mxu0 %v2777
    %v2847 = vpop.f32.mrb[0].mxu0
    %v2848 = vadd.f32 0.0, %v2847
    %v2849 = vpop.f32.mrb[0].mxu0
    %2850 = vdwg.mxu0
    %v2851 = vmul.f32 %v2770, 0.35355338
    %v2852 = vmul.f32 %v2848, 0.35355338
    %v2853 = vsel %vm311, %v2851, -inf
    %2854 = vmax.xlane.f32.xlu0 %v2853
    %v2855 = vpop.xlane.xlu0 %2854
    %v2856 = vsel %vm311, %v2852, -inf
    %2857 = vmax.xlane.f32.xlu0 %v2856
    %v2858 = vpop.xlane.xlu0 %2857
    %v2859 = vsub.f32 %v2851, %v2855
    %v2860 = vsub.f32 %v2852, %v2858
    %v2861 = vmul.f32 %v2859, 1.442695
    %v2862 = vpow.pop %v2861
    %v2863 = vmul.f32 %v2860, 1.442695
    %v2864 = vpow.pop %v2863
    %v2865 = vsel %vm311, %v2862, 0.0
    %2866 = vadd.xlane.f32.xlu0 %v2865
    %v2867 = vpop.xlane.xlu0 %2866
    %v2868 = vsel %vm311, %v2864, 0.0
    %2869 = vadd.xlane.f32.xlu0 %v2868
    %v2870 = vpop.xlane.xlu0 %2869
    %v2871 = vrcp.pop %v2867
    %v2872 = vrcp.pop %v2870
    %v2873 = vmul.f32 %v2862, %v2871
    %v2874 = vmul.f32 %v2864, %v2872
    %2875 = vrot.lane.b32.xlu0 %v2352, 56
    %v2876 = vpop.permute.xlu0 %2875
    %v2879 = vsel %vm311, %v2873, 0
    %2881 = vmatprep.subr.mxu0 0.0
    %2882 = vmatpush1.msra.mxu0 %v2876
    %2883 = vmatprep.subr.mxu0 0.0
    %2884 = vmatpush1.msra.mxu0 0.0
    %2885 = vmatprep.subr.mxu0 0.0
    %2886 = vmatpush1.msra.mxu0 0.0
    %2887 = vmatprep.subr.mxu0 0.0
    %2888 = vmatpush1.msra.mxu0 0.0
    %2889 = vmatprep.subr.mxu0 0.0
    %2890 = vmatpush1.msra.mxu0 0.0
    %2891 = vmatprep.subr.mxu0 0.0
    %2892 = vmatpush1.msra.mxu0 0.0
    %2893 = vmatprep.subr.mxu0 0.0
    %2894 = vmatpush1.msra.mxu0 0.0
    %2895 = vmatprep.subr.mxu0 0.0
    %2896 = vmatpush1.msra.mxu0 0.0
    %2897 = vmatprep.subr.mxu0 0.0
    %2898 = vmatpush1.msra.mxu0 0.0
    %2899 = vmatprep.subr.mxu0 0.0
    %2900 = vmatpush1.msra.mxu0 0.0
    %2901 = vmatprep.subr.mxu0 0.0
    %2902 = vmatpush1.msra.mxu0 0.0
    %2903 = vmatprep.subr.mxu0 0.0
    %2904 = vmatpush1.msra.mxu0 0.0
    %2905 = vmatprep.subr.mxu0 0.0
    %2906 = vmatpush1.msra.mxu0 0.0
    %2907 = vmatprep.subr.mxu0 0.0
    %2908 = vmatpush1.msra.mxu0 0.0
    %2909 = vmatprep.subr.mxu0 0.0
    %2910 = vmatpush1.msra.mxu0 0.0
    %2911 = vmatprep.subr.mxu0 0.0
    %2912 = vmatpush1.msra.mxu0 0.0
    %2913 = vmatprep.subr.mxu0 0.0
    %2914 = vmatpush1.msra.mxu0 0.0
    %2915 = vmatprep.subr.mxu0 0.0
    %2916 = vmatpush1.msra.mxu0 0.0
    %2917 = vmatprep.subr.mxu0 0.0
    %2918 = vmatpush1.msra.mxu0 0.0
    %2919 = vmatprep.subr.mxu0 0.0
    %2920 = vmatpush1.msra.mxu0 0.0
    %2921 = vmatprep.subr.mxu0 0.0
    %2922 = vmatpush1.msra.mxu0 0.0
    %2923 = vmatprep.subr.mxu0 0.0
    %2924 = vmatpush1.msra.mxu0 0.0
    %2925 = vmatprep.subr.mxu0 0.0
    %2926 = vmatpush1.msra.mxu0 0.0
    %2927 = vmatprep.subr.mxu0 0.0
    %2928 = vmatpush1.msra.mxu0 0.0
    %2929 = vmatprep.subr.mxu0 0.0
    %2930 = vmatpush1.msra.mxu0 0.0
    %2931 = vmatprep.subr.mxu0 0.0
    %2932 = vmatpush1.msra.mxu0 0.0
    %2933 = vmatprep.subr.mxu0 0.0
    %2934 = vmatpush1.msra.mxu0 0.0
    %2935 = vmatprep.subr.mxu0 0.0
    %2936 = vmatpush1.msra.mxu0 0.0
    %2937 = vmatprep.subr.mxu0 0.0
    %2938 = vmatpush1.msra.mxu0 0.0
    %2939 = vmatprep.subr.mxu0 0.0
    %2940 = vmatpush1.msra.mxu0 0.0
    %2941 = vmatprep.subr.mxu0 0.0
    %2942 = vmatpush1.msra.mxu0 0.0
    %2943 = vmatprep.subr.mxu0 0.0
    %2944 = vmatpush1.msra.mxu0 0.0
    %2945 = vmatprep.mubr.f32.mxu0 0.0
    %2946 = vmatmul.mubr.f32.gmra.mrb[0].mxu0 %v2879
    %v2947 = vpop.f32.mrb[0].mxu0
    %v2948 = vadd.f32 0.0, %v2947
    %v2949 = vpop.f32.mrb[0].mxu0
    %2950 = vdwg.mxu0
    %2951 = vrot.lane.b32.xlu0 %v2357, 56
    %v2952 = vpop.permute.xlu0 %2951
    %v2955 = vsel %vm311, %v2874, 0
    %2957 = vmatprep.subr.mxu0 0.0
    %2958 = vmatpush1.msra.mxu0 %v2952
    %2959 = vmatprep.subr.mxu0 0.0
    %2960 = vmatpush1.msra.mxu0 0.0
    %2961 = vmatprep.subr.mxu0 0.0
    %2962 = vmatpush1.msra.mxu0 0.0
    %2963 = vmatprep.subr.mxu0 0.0
    %2964 = vmatpush1.msra.mxu0 0.0
    %2965 = vmatprep.subr.mxu0 0.0
    %2966 = vmatpush1.msra.mxu0 0.0
    %2967 = vmatprep.subr.mxu0 0.0
    %2968 = vmatpush1.msra.mxu0 0.0
    %2969 = vmatprep.subr.mxu0 0.0
    %2970 = vmatpush1.msra.mxu0 0.0
    %2971 = vmatprep.subr.mxu0 0.0
    %2972 = vmatpush1.msra.mxu0 0.0
    %2973 = vmatprep.subr.mxu0 0.0
    %2974 = vmatpush1.msra.mxu0 0.0
    %2975 = vmatprep.subr.mxu0 0.0
    %2976 = vmatpush1.msra.mxu0 0.0
    %2977 = vmatprep.subr.mxu0 0.0
    %2978 = vmatpush1.msra.mxu0 0.0
    %2979 = vmatprep.subr.mxu0 0.0
    %2980 = vmatpush1.msra.mxu0 0.0
    %2981 = vmatprep.subr.mxu0 0.0
    %2982 = vmatpush1.msra.mxu0 0.0
    %2983 = vmatprep.subr.mxu0 0.0
    %2984 = vmatpush1.msra.mxu0 0.0
    %2985 = vmatprep.subr.mxu0 0.0
    %2986 = vmatpush1.msra.mxu0 0.0
    %2987 = vmatprep.subr.mxu0 0.0
    %2988 = vmatpush1.msra.mxu0 0.0
    %2989 = vmatprep.subr.mxu0 0.0
    %2990 = vmatpush1.msra.mxu0 0.0
    %2991 = vmatprep.subr.mxu0 0.0
    %2992 = vmatpush1.msra.mxu0 0.0
    %2993 = vmatprep.subr.mxu0 0.0
    %2994 = vmatpush1.msra.mxu0 0.0
    %2995 = vmatprep.subr.mxu0 0.0
    %2996 = vmatpush1.msra.mxu0 0.0
    %2997 = vmatprep.subr.mxu0 0.0
    %2998 = vmatpush1.msra.mxu0 0.0
    %2999 = vmatprep.subr.mxu0 0.0
    %3000 = vmatpush1.msra.mxu0 0.0
    %3001 = vmatprep.subr.mxu0 0.0
    %3002 = vmatpush1.msra.mxu0 0.0
    %3003 = vmatprep.subr.mxu0 0.0
    %3004 = vmatpush1.msra.mxu0 0.0
    %3005 = vmatprep.subr.mxu0 0.0
    %3006 = vmatpush1.msra.mxu0 0.0
    %3007 = vmatprep.subr.mxu0 0.0
    %3008 = vmatpush1.msra.mxu0 0.0
    %3009 = vmatprep.subr.mxu0 0.0
    %3010 = vmatpush1.msra.mxu0 0.0
    %3011 = vmatprep.subr.mxu0 0.0
    %3012 = vmatpush1.msra.mxu0 0.0
    %3013 = vmatprep.subr.mxu0 0.0
    %3014 = vmatpush1.msra.mxu0 0.0
    %3015 = vmatprep.subr.mxu0 0.0
    %3016 = vmatpush1.msra.mxu0 0.0
    %3017 = vmatprep.subr.mxu0 0.0
    %3018 = vmatpush1.msra.mxu0 0.0
    %3019 = vmatprep.subr.mxu0 0.0
    %3020 = vmatpush1.msra.mxu0 0.0
    %3021 = vmatprep.mubr.f32.mxu0 0.0
    %3022 = vmatmul.mubr.f32.gmra.mrb[0].mxu0 %v2955
    %v3023 = vpop.f32.mrb[0].mxu0
    %v3024 = vadd.f32 0.0, %v3023
    %v3025 = vpop.f32.mrb[0].mxu0
    %3026 = vdwg.mxu0
    %v3028 = vsel %vm311, %v2948, 0
    %v3031 = vsel %vm311, %v3024, 0
    %3033 = vmatprep.subr.mxu0 0.0
    %3034 = vmatpush1.msra.mxu0 %v2362
    %3035 = vmatprep.subr.mxu0 0.0
    %3036 = vmatpush1.msra.mxu0 0.0
    %3037 = vmatprep.subr.mxu0 0.0
    %3038 = vmatpush1.msra.mxu0 0.0
    %3039 = vmatprep.subr.mxu0 0.0
    %3040 = vmatpush1.msra.mxu0 0.0
    %3041 = vmatprep.subr.mxu0 0.0
    %3042 = vmatpush1.msra.mxu0 0.0
    %3043 = vmatprep.subr.mxu0 0.0
    %3044 = vmatpush1.msra.mxu0 0.0
    %3045 = vmatprep.subr.mxu0 0.0
    %3046 = vmatpush1.msra.mxu0 0.0
    %3047 = vmatprep.subr.mxu0 0.0
    %3048 = vmatpush1.msra.mxu0 0.0
    %3049 = vmatprep.subr.mxu0 0.0
    %3050 = vmatpush1.msra.mxu0 0.0
    %3051 = vmatprep.subr.mxu0 0.0
    %3052 = vmatpush1.msra.mxu0 0.0
    %3053 = vmatprep.subr.mxu0 0.0
    %3054 = vmatpush1.msra.mxu0 0.0
    %3055 = vmatprep.subr.mxu0 0.0
    %3056 = vmatpush1.msra.mxu0 0.0
    %3057 = vmatprep.subr.mxu0 0.0
    %3058 = vmatpush1.msra.mxu0 0.0
    %3059 = vmatprep.subr.mxu0 0.0
    %3060 = vmatpush1.msra.mxu0 0.0
    %3061 = vmatprep.subr.mxu0 0.0
    %3062 = vmatpush1.msra.mxu0 0.0
    %3063 = vmatprep.subr.mxu0 0.0
    %3064 = vmatpush1.msra.mxu0 0.0
    %3065 = vmatprep.subr.mxu0 0.0
    %3066 = vmatpush1.msra.mxu0 0.0
    %3067 = vmatprep.subr.mxu0 0.0
    %3068 = vmatpush1.msra.mxu0 0.0
    %3069 = vmatprep.subr.mxu0 0.0
    %3070 = vmatpush1.msra.mxu0 0.0
    %3071 = vmatprep.subr.mxu0 0.0
    %3072 = vmatpush1.msra.mxu0 0.0
    %3073 = vmatprep.subr.mxu0 0.0
    %3074 = vmatpush1.msra.mxu0 0.0
    %3075 = vmatprep.subr.mxu0 0.0
    %3076 = vmatpush1.msra.mxu0 0.0
    %3077 = vmatprep.subr.mxu0 0.0
    %3078 = vmatpush1.msra.mxu0 0.0
    %3079 = vmatprep.subr.mxu0 0.0
    %3080 = vmatpush1.msra.mxu0 0.0
    %3081 = vmatprep.subr.mxu0 0.0
    %3082 = vmatpush1.msra.mxu0 0.0
    %3083 = vmatprep.subr.mxu0 0.0
    %3084 = vmatpush1.msra.mxu0 0.0
    %3085 = vmatprep.subr.mxu0 0.0
    %3086 = vmatpush1.msra.mxu0 0.0
    %3087 = vmatprep.subr.mxu0 0.0
    %3088 = vmatpush1.msra.mxu0 0.0
    %3089 = vmatprep.subr.mxu0 0.0
    %3090 = vmatpush1.msra.mxu0 0.0
    %3091 = vmatprep.subr.mxu0 0.0
    %3092 = vmatpush1.msra.mxu0 0.0
    %3093 = vmatprep.subr.mxu0 0.0
    %3094 = vmatpush1.msra.mxu0 0.0
    %3095 = vmatprep.subr.mxu0 0.0
    %3096 = vmatpush1.msra.mxu0 0.0
    %3097 = vmatprep.mubr.f32.mxu0 0.0
    %3098 = vmatmul.mubr.f32.gmra.mrb[0].mxu0 %v3028
    %v3099 = vpop.f32.mrb[0].mxu0
    %v3100 = vadd.f32 0.0, %v3099
    %v3101 = vpop.f32.mrb[0].mxu0
    %3102 = vmatprep.mubr.f32.mxu0 0.0
    %3103 = vmatmul.mubr.f32.gmra.mrb[0].mxu0 %v3031
    %v3104 = vpop.f32.mrb[0].mxu0
    %v3105 = vadd.f32 0.0, %v3104
    %v3106 = vpop.f32.mrb[0].mxu0
    %3107 = vdwg.mxu0
    %v3109 = vsel %vm311, %v2616, 0
    %v3112 = vsel %vm311, %v2692, 0
    %3114 = vmatprep.subr.mxu0 0.0
    %3115 = vmatpush1.msra.mxu0 %v2361
    %3116 = vmatprep.subr.mxu0 0.0
    %3117 = vmatpush1.msra.mxu0 0.0
    %3118 = vmatprep.subr.mxu0 0.0
    %3119 = vmatpush1.msra.mxu0 0.0
    %3120 = vmatprep.subr.mxu0 0.0
    %3121 = vmatpush1.msra.mxu0 0.0
    %3122 = vmatprep.subr.mxu0 0.0
    %3123 = vmatpush1.msra.mxu0 0.0
    %3124 = vmatprep.subr.mxu0 0.0
    %3125 = vmatpush1.msra.mxu0 0.0
    %3126 = vmatprep.subr.mxu0 0.0
    %3127 = vmatpush1.msra.mxu0 0.0
    %3128 = vmatprep.subr.mxu0 0.0
    %3129 = vmatpush1.msra.mxu0 0.0
    %3130 = vmatprep.subr.mxu0 0.0
    %3131 = vmatpush1.msra.mxu0 0.0
    %3132 = vmatprep.subr.mxu0 0.0
    %3133 = vmatpush1.msra.mxu0 0.0
    %3134 = vmatprep.subr.mxu0 0.0
    %3135 = vmatpush1.msra.mxu0 0.0
    %3136 = vmatprep.subr.mxu0 0.0
    %3137 = vmatpush1.msra.mxu0 0.0
    %3138 = vmatprep.subr.mxu0 0.0
    %3139 = vmatpush1.msra.mxu0 0.0
    %3140 = vmatprep.subr.mxu0 0.0
    %3141 = vmatpush1.msra.mxu0 0.0
    %3142 = vmatprep.subr.mxu0 0.0
    %3143 = vmatpush1.msra.mxu0 0.0
    %3144 = vmatprep.subr.mxu0 0.0
    %3145 = vmatpush1.msra.mxu0 0.0
    %3146 = vmatprep.subr.mxu0 0.0
    %3147 = vmatpush1.msra.mxu0 0.0
    %3148 = vmatprep.subr.mxu0 0.0
    %3149 = vmatpush1.msra.mxu0 0.0
    %3150 = vmatprep.subr.mxu0 0.0
    %3151 = vmatpush1.msra.mxu0 0.0
    %3152 = vmatprep.subr.mxu0 0.0
    %3153 = vmatpush1.msra.mxu0 0.0
    %3154 = vmatprep.subr.mxu0 0.0
    %3155 = vmatpush1.msra.mxu0 0.0
    %3156 = vmatprep.subr.mxu0 0.0
    %3157 = vmatpush1.msra.mxu0 0.0
    %3158 = vmatprep.subr.mxu0 0.0
    %3159 = vmatpush1.msra.mxu0 0.0
    %3160 = vmatprep.subr.mxu0 0.0
    %3161 = vmatpush1.msra.mxu0 0.0
    %3162 = vmatprep.subr.mxu0 0.0
    %3163 = vmatpush1.msra.mxu0 0.0
    %3164 = vmatprep.subr.mxu0 0.0
    %3165 = vmatpush1.msra.mxu0 0.0
    %3166 = vmatprep.subr.mxu0 0.0
    %3167 = vmatpush1.msra.mxu0 0.0
    %3168 = vmatprep.subr.mxu0 0.0
    %3169 = vmatpush1.msra.mxu0 0.0
    %3170 = vmatprep.subr.mxu0 0.0
    %3171 = vmatpush1.msra.mxu0 0.0
    %3172 = vmatprep.subr.mxu0 0.0
    %3173 = vmatpush1.msra.mxu0 0.0
    %3174 = vmatprep.subr.mxu0 0.0
    %3175 = vmatpush1.msra.mxu0 0.0
    %3176 = vmatprep.subr.mxu0 0.0
    %3177 = vmatpush1.msra.mxu0 0.0
    %3178 = vmatprep.mubr.f32.mxu0 0.0
    %3179 = vmatmul.mubr.f32.gmra.mrb[0].mxu0 %v3109
    %v3180 = vpop.f32.mrb[0].mxu0
    %v3181 = vadd.f32 %v3100, %v3180
    %v3182 = vpop.f32.mrb[0].mxu0
    %3183 = vmatprep.mubr.f32.mxu0 0.0
    %3184 = vmatmul.mubr.f32.gmra.mrb[0].mxu0 %v3112
    %v3185 = vpop.f32.mrb[0].mxu0
    %v3186 = vadd.f32 %v3105, %v3185
    %v3187 = vpop.f32.mrb[0].mxu0
    %3188 = vdwg.mxu0
    %3189 = vrot.lane.b32.xlu0 %v2352, 112
    %v3190 = vpop.permute.xlu0 %3189
    %3191 = vrot.lane.b32.xlu0 %v2352, 80
    %v3192 = vpop.permute.xlu0 %3191
    %v3193 = vsel %vm311, %v3190, 0
    %v3195 = vsel %vm311, %v3192, 0
    %3197 = vmatprep.subr.mxu0 0.0
    %3198 = vmatpush1.xpose.msra.mxu0 %v3195
    %3199 = vmatprep.subr.mxu0 0.0
    %3200 = vmatpush1.xpose.msra.mxu0 0.0
    %3201 = vmatprep.subr.mxu0 0.0
    %3202 = vmatpush1.xpose.msra.mxu0 0.0
    %3203 = vmatprep.subr.mxu0 0.0
    %3204 = vmatpush1.xpose.msra.mxu0 0.0
    %3205 = vmatprep.subr.mxu0 0.0
    %3206 = vmatpush1.xpose.msra.mxu0 0.0
    %3207 = vmatprep.subr.mxu0 0.0
    %3208 = vmatpush1.xpose.msra.mxu0 0.0
    %3209 = vmatprep.subr.mxu0 0.0
    %3210 = vmatpush1.xpose.msra.mxu0 0.0
    %3211 = vmatprep.subr.mxu0 0.0
    %3212 = vmatpush1.xpose.msra.mxu0 0.0
    %3213 = vmatprep.subr.mxu0 0.0
    %3214 = vmatpush1.xpose.msra.mxu0 0.0
    %3215 = vmatprep.subr.mxu0 0.0
    %3216 = vmatpush1.xpose.msra.mxu0 0.0
    %3217 = vmatprep.subr.mxu0 0.0
    %3218 = vmatpush1.xpose.msra.mxu0 0.0
    %3219 = vmatprep.subr.mxu0 0.0
    %3220 = vmatpush1.xpose.msra.mxu0 0.0
    %3221 = vmatprep.subr.mxu0 0.0
    %3222 = vmatpush1.xpose.msra.mxu0 0.0
    %3223 = vmatprep.subr.mxu0 0.0
    %3224 = vmatpush1.xpose.msra.mxu0 0.0
    %3225 = vmatprep.subr.mxu0 0.0
    %3226 = vmatpush1.xpose.msra.mxu0 0.0
    %3227 = vmatprep.subr.mxu0 0.0
    %3228 = vmatpush1.xpose.msra.mxu0 0.0
    %3229 = vmatprep.subr.mxu0 0.0
    %3230 = vmatpush1.xpose.msra.mxu0 0.0
    %3231 = vmatprep.subr.mxu0 0.0
    %3232 = vmatpush1.xpose.msra.mxu0 0.0
    %3233 = vmatprep.subr.mxu0 0.0
    %3234 = vmatpush1.xpose.msra.mxu0 0.0
    %3235 = vmatprep.subr.mxu0 0.0
    %3236 = vmatpush1.xpose.msra.mxu0 0.0
    %3237 = vmatprep.subr.mxu0 0.0
    %3238 = vmatpush1.xpose.msra.mxu0 0.0
    %3239 = vmatprep.subr.mxu0 0.0
    %3240 = vmatpush1.xpose.msra.mxu0 0.0
    %3241 = vmatprep.subr.mxu0 0.0
    %3242 = vmatpush1.xpose.msra.mxu0 0.0
    %3243 = vmatprep.subr.mxu0 0.0
    %3244 = vmatpush1.xpose.msra.mxu0 0.0
    %3245 = vmatprep.subr.mxu0 0.0
    %3246 = vmatpush1.xpose.msra.mxu0 0.0
    %3247 = vmatprep.subr.mxu0 0.0
    %3248 = vmatpush1.xpose.msra.mxu0 0.0
    %3249 = vmatprep.subr.mxu0 0.0
    %3250 = vmatpush1.xpose.msra.mxu0 0.0
    %3251 = vmatprep.subr.mxu0 0.0
    %3252 = vmatpush1.xpose.msra.mxu0 0.0
    %3253 = vmatprep.subr.mxu0 0.0
    %3254 = vmatpush1.xpose.msra.mxu0 0.0
    %3255 = vmatprep.subr.mxu0 0.0
    %3256 = vmatpush1.xpose.msra.mxu0 0.0
    %3257 = vmatprep.subr.mxu0 0.0
    %3258 = vmatpush1.xpose.msra.mxu0 0.0
    %3259 = vmatprep.subr.mxu0 0.0
    %3260 = vmatpush1.xpose.msra.mxu0 0.0
    %3261 = vmatprep.mubr.f32.mxu0 0.0
    %3262 = vmatmul.mubr.f32.gmra.mrb[0].mxu0 %v3193
    %v3263 = vpop.f32.mrb[0].mxu0
    %v3264 = vadd.f32 0.0, %v3263
    %v3265 = vpop.f32.mrb[0].mxu0
    %3266 = vdwg.mxu0
    %3267 = vrot.lane.b32.xlu0 %v2357, 112
    %v3268 = vpop.permute.xlu0 %3267
    %3269 = vrot.lane.b32.xlu0 %v2357, 80
    %v3270 = vpop.permute.xlu0 %3269
    %v3271 = vsel %vm311, %v3268, 0
    %v3273 = vsel %vm311, %v3270, 0
    %3275 = vmatprep.subr.mxu0 0.0
    %3276 = vmatpush1.xpose.msra.mxu0 %v3273
    %3277 = vmatprep.subr.mxu0 0.0
    %3278 = vmatpush1.xpose.msra.mxu0 0.0
    %3279 = vmatprep.subr.mxu0 0.0
    %3280 = vmatpush1.xpose.msra.mxu0 0.0
    %3281 = vmatprep.subr.mxu0 0.0
    %3282 = vmatpush1.xpose.msra.mxu0 0.0
    %3283 = vmatprep.subr.mxu0 0.0
    %3284 = vmatpush1.xpose.msra.mxu0 0.0
    %3285 = vmatprep.subr.mxu0 0.0
    %3286 = vmatpush1.xpose.msra.mxu0 0.0
    %3287 = vmatprep.subr.mxu0 0.0
    %3288 = vmatpush1.xpose.msra.mxu0 0.0
    %3289 = vmatprep.subr.mxu0 0.0
    %3290 = vmatpush1.xpose.msra.mxu0 0.0
    %3291 = vmatprep.subr.mxu0 0.0
    %3292 = vmatpush1.xpose.msra.mxu0 0.0
    %3293 = vmatprep.subr.mxu0 0.0
    %3294 = vmatpush1.xpose.msra.mxu0 0.0
    %3295 = vmatprep.subr.mxu0 0.0
    %3296 = vmatpush1.xpose.msra.mxu0 0.0
    %3297 = vmatprep.subr.mxu0 0.0
    %3298 = vmatpush1.xpose.msra.mxu0 0.0
    %3299 = vmatprep.subr.mxu0 0.0
    %3300 = vmatpush1.xpose.msra.mxu0 0.0
    %3301 = vmatprep.subr.mxu0 0.0
    %3302 = vmatpush1.xpose.msra.mxu0 0.0
    %3303 = vmatprep.subr.mxu0 0.0
    %3304 = vmatpush1.xpose.msra.mxu0 0.0
    %3305 = vmatprep.subr.mxu0 0.0
    %3306 = vmatpush1.xpose.msra.mxu0 0.0
    %3307 = vmatprep.subr.mxu0 0.0
    %3308 = vmatpush1.xpose.msra.mxu0 0.0
    %3309 = vmatprep.subr.mxu0 0.0
    %3310 = vmatpush1.xpose.msra.mxu0 0.0
    %3311 = vmatprep.subr.mxu0 0.0
    %3312 = vmatpush1.xpose.msra.mxu0 0.0
    %3313 = vmatprep.subr.mxu0 0.0
    %3314 = vmatpush1.xpose.msra.mxu0 0.0
    %3315 = vmatprep.subr.mxu0 0.0
    %3316 = vmatpush1.xpose.msra.mxu0 0.0
    %3317 = vmatprep.subr.mxu0 0.0
    %3318 = vmatpush1.xpose.msra.mxu0 0.0
    %3319 = vmatprep.subr.mxu0 0.0
    %3320 = vmatpush1.xpose.msra.mxu0 0.0
    %3321 = vmatprep.subr.mxu0 0.0
    %3322 = vmatpush1.xpose.msra.mxu0 0.0
    %3323 = vmatprep.subr.mxu0 0.0
    %3324 = vmatpush1.xpose.msra.mxu0 0.0
    %3325 = vmatprep.subr.mxu0 0.0
    %3326 = vmatpush1.xpose.msra.mxu0 0.0
    %3327 = vmatprep.subr.mxu0 0.0
    %3328 = vmatpush1.xpose.msra.mxu0 0.0
    %3329 = vmatprep.subr.mxu0 0.0
    %3330 = vmatpush1.xpose.msra.mxu0 0.0
    %3331 = vmatprep.subr.mxu0 0.0
    %3332 = vmatpush1.xpose.msra.mxu0 0.0
    %3333 = vmatprep.subr.mxu0 0.0
    %3334 = vmatpush1.xpose.msra.mxu0 0.0
    %3335 = vmatprep.subr.mxu0 0.0
    %3336 = vmatpush1.xpose.msra.mxu0 0.0
    %3337 = vmatprep.subr.mxu0 0.0
    %3338 = vmatpush1.xpose.msra.mxu0 0.0
    %3339 = vmatprep.mubr.f32.mxu0 0.0
    %3340 = vmatmul.mubr.f32.gmra.mrb[0].mxu0 %v3271
    %v3341 = vpop.f32.mrb[0].mxu0
    %v3342 = vadd.f32 0.0, %v3341
    %v3343 = vpop.f32.mrb[0].mxu0
    %3344 = vdwg.mxu0
    %v3345 = vmul.f32 %v3264, 0.35355338
    %v3346 = vmul.f32 %v3342, 0.35355338
    %v3347 = vsel %vm311, %v3345, -inf
    %3348 = vmax.xlane.f32.xlu0 %v3347
    %v3349 = vpop.xlane.xlu0 %3348
    %v3350 = vsel %vm311, %v3346, -inf
    %3351 = vmax.xlane.f32.xlu0 %v3350
    %v3352 = vpop.xlane.xlu0 %3351
    %v3353 = vsub.f32 %v3345, %v3349
    %v3354 = vsub.f32 %v3346, %v3352
    %v3355 = vmul.f32 %v3353, 1.442695
    %v3356 = vpow.pop %v3355
    %v3357 = vmul.f32 %v3354, 1.442695
    %v3358 = vpow.pop %v3357
    %v3359 = vsel %vm311, %v3356, 0.0
    %3360 = vadd.xlane.f32.xlu0 %v3359
    %v3361 = vpop.xlane.xlu0 %3360
    %v3362 = vsel %vm311, %v3358, 0.0
    %3363 = vadd.xlane.f32.xlu0 %v3362
    %v3364 = vpop.xlane.xlu0 %3363
    %v3365 = vrcp.pop %v3361
    %v3366 = vrcp.pop %v3364
    %v3367 = vmul.f32 %v3356, %v3365
    %v3368 = vmul.f32 %v3358, %v3366
    %3369 = vrot.lane.b32.xlu0 %v2352, 48
    %v3370 = vpop.permute.xlu0 %3369
    %v3373 = vsel %vm311, %v3367, 0
    %3375 = vmatprep.subr.mxu0 0.0
    %3376 = vmatpush1.msra.mxu0 %v3370
    %3377 = vmatprep.subr.mxu0 0.0
    %3378 = vmatpush1.msra.mxu0 0.0
    %3379 = vmatprep.subr.mxu0 0.0
    %3380 = vmatpush1.msra.mxu0 0.0
    %3381 = vmatprep.subr.mxu0 0.0
    %3382 = vmatpush1.msra.mxu0 0.0
    %3383 = vmatprep.subr.mxu0 0.0
    %3384 = vmatpush1.msra.mxu0 0.0
    %3385 = vmatprep.subr.mxu0 0.0
    %3386 = vmatpush1.msra.mxu0 0.0
    %3387 = vmatprep.subr.mxu0 0.0
    %3388 = vmatpush1.msra.mxu0 0.0
    %3389 = vmatprep.subr.mxu0 0.0
    %3390 = vmatpush1.msra.mxu0 0.0
    %3391 = vmatprep.subr.mxu0 0.0
    %3392 = vmatpush1.msra.mxu0 0.0
    %3393 = vmatprep.subr.mxu0 0.0
    %3394 = vmatpush1.msra.mxu0 0.0
    %3395 = vmatprep.subr.mxu0 0.0
    %3396 = vmatpush1.msra.mxu0 0.0
    %3397 = vmatprep.subr.mxu0 0.0
    %3398 = vmatpush1.msra.mxu0 0.0
    %3399 = vmatprep.subr.mxu0 0.0
    %3400 = vmatpush1.msra.mxu0 0.0
    %3401 = vmatprep.subr.mxu0 0.0
    %3402 = vmatpush1.msra.mxu0 0.0
    %3403 = vmatprep.subr.mxu0 0.0
    %3404 = vmatpush1.msra.mxu0 0.0
    %3405 = vmatprep.subr.mxu0 0.0
    %3406 = vmatpush1.msra.mxu0 0.0
    %3407 = vmatprep.subr.mxu0 0.0
    %3408 = vmatpush1.msra.mxu0 0.0
    %3409 = vmatprep.subr.mxu0 0.0
    %3410 = vmatpush1.msra.mxu0 0.0
    %3411 = vmatprep.subr.mxu0 0.0
    %3412 = vmatpush1.msra.mxu0 0.0
    %3413 = vmatprep.subr.mxu0 0.0
    %3414 = vmatpush1.msra.mxu0 0.0
    %3415 = vmatprep.subr.mxu0 0.0
    %3416 = vmatpush1.msra.mxu0 0.0
    %3417 = vmatprep.subr.mxu0 0.0
    %3418 = vmatpush1.msra.mxu0 0.0
    %3419 = vmatprep.subr.mxu0 0.0
    %3420 = vmatpush1.msra.mxu0 0.0
    %3421 = vmatprep.subr.mxu0 0.0
    %3422 = vmatpush1.msra.mxu0 0.0
    %3423 = vmatprep.subr.mxu0 0.0
    %3424 = vmatpush1.msra.mxu0 0.0
    %3425 = vmatprep.subr.mxu0 0.0
    %3426 = vmatpush1.msra.mxu0 0.0
    %3427 = vmatprep.subr.mxu0 0.0
    %3428 = vmatpush1.msra.mxu0 0.0
    %3429 = vmatprep.subr.mxu0 0.0
    %3430 = vmatpush1.msra.mxu0 0.0
    %3431 = vmatprep.subr.mxu0 0.0
    %3432 = vmatpush1.msra.mxu0 0.0
    %3433 = vmatprep.subr.mxu0 0.0
    %3434 = vmatpush1.msra.mxu0 0.0
    %3435 = vmatprep.subr.mxu0 0.0
    %3436 = vmatpush1.msra.mxu0 0.0
    %3437 = vmatprep.subr.mxu0 0.0
    %3438 = vmatpush1.msra.mxu0 0.0
    %3439 = vmatprep.mubr.f32.mxu0 0.0
    %3440 = vmatmul.mubr.f32.gmra.mrb[0].mxu0 %v3373
    %v3441 = vpop.f32.mrb[0].mxu0
    %v3442 = vadd.f32 0.0, %v3441
    %v3443 = vpop.f32.mrb[0].mxu0
    %3444 = vdwg.mxu0
    %3445 = vrot.lane.b32.xlu0 %v2357, 48
    %v3446 = vpop.permute.xlu0 %3445
    %v3449 = vsel %vm311, %v3368, 0
    %3451 = vmatprep.subr.mxu0 0.0
    %3452 = vmatpush1.msra.mxu0 %v3446
    %3453 = vmatprep.subr.mxu0 0.0
    %3454 = vmatpush1.msra.mxu0 0.0
    %3455 = vmatprep.subr.mxu0 0.0
    %3456 = vmatpush1.msra.mxu0 0.0
    %3457 = vmatprep.subr.mxu0 0.0
    %3458 = vmatpush1.msra.mxu0 0.0
    %3459 = vmatprep.subr.mxu0 0.0
    %3460 = vmatpush1.msra.mxu0 0.0
    %3461 = vmatprep.subr.mxu0 0.0
    %3462 = vmatpush1.msra.mxu0 0.0
    %3463 = vmatprep.subr.mxu0 0.0
    %3464 = vmatpush1.msra.mxu0 0.0
    %3465 = vmatprep.subr.mxu0 0.0
    %3466 = vmatpush1.msra.mxu0 0.0
    %3467 = vmatprep.subr.mxu0 0.0
    %3468 = vmatpush1.msra.mxu0 0.0
    %3469 = vmatprep.subr.mxu0 0.0
    %3470 = vmatpush1.msra.mxu0 0.0
    %3471 = vmatprep.subr.mxu0 0.0
    %3472 = vmatpush1.msra.mxu0 0.0
    %3473 = vmatprep.subr.mxu0 0.0
    %3474 = vmatpush1.msra.mxu0 0.0
    %3475 = vmatprep.subr.mxu0 0.0
    %3476 = vmatpush1.msra.mxu0 0.0
    %3477 = vmatprep.subr.mxu0 0.0
    %3478 = vmatpush1.msra.mxu0 0.0
    %3479 = vmatprep.subr.mxu0 0.0
    %3480 = vmatpush1.msra.mxu0 0.0
    %3481 = vmatprep.subr.mxu0 0.0
    %3482 = vmatpush1.msra.mxu0 0.0
    %3483 = vmatprep.subr.mxu0 0.0
    %3484 = vmatpush1.msra.mxu0 0.0
    %3485 = vmatprep.subr.mxu0 0.0
    %3486 = vmatpush1.msra.mxu0 0.0
    %3487 = vmatprep.subr.mxu0 0.0
    %3488 = vmatpush1.msra.mxu0 0.0
    %3489 = vmatprep.subr.mxu0 0.0
    %3490 = vmatpush1.msra.mxu0 0.0
    %3491 = vmatprep.subr.mxu0 0.0
    %3492 = vmatpush1.msra.mxu0 0.0
    %3493 = vmatprep.subr.mxu0 0.0
    %3494 = vmatpush1.msra.mxu0 0.0
    %3495 = vmatprep.subr.mxu0 0.0
    %3496 = vmatpush1.msra.mxu0 0.0
    %3497 = vmatprep.subr.mxu0 0.0
    %3498 = vmatpush1.msra.mxu0 0.0
    %3499 = vmatprep.subr.mxu0 0.0
    %3500 = vmatpush1.msra.mxu0 0.0
    %3501 = vmatprep.subr.mxu0 0.0
    %3502 = vmatpush1.msra.mxu0 0.0
    %3503 = vmatprep.subr.mxu0 0.0
    %3504 = vmatpush1.msra.mxu0 0.0
    %3505 = vmatprep.subr.mxu0 0.0
    %3506 = vmatpush1.msra.mxu0 0.0
    %3507 = vmatprep.subr.mxu0 0.0
    %3508 = vmatpush1.msra.mxu0 0.0
    %3509 = vmatprep.subr.mxu0 0.0
    %3510 = vmatpush1.msra.mxu0 0.0
    %3511 = vmatprep.subr.mxu0 0.0
    %3512 = vmatpush1.msra.mxu0 0.0
    %3513 = vmatprep.subr.mxu0 0.0
    %3514 = vmatpush1.msra.mxu0 0.0
    %3515 = vmatprep.mubr.f32.mxu0 0.0
    %3516 = vmatmul.mubr.f32.gmra.mrb[0].mxu0 %v3449
    %v3517 = vpop.f32.mrb[0].mxu0
    %v3518 = vadd.f32 0.0, %v3517
    %v3519 = vpop.f32.mrb[0].mxu0
    %3520 = vdwg.mxu0
    %v3522 = vsel %vm311, %v3442, 0
    %v3525 = vsel %vm311, %v3518, 0
    %3527 = vmatprep.subr.mxu0 0.0
    %3528 = vmatpush1.msra.mxu0 %v2363
    %3529 = vmatprep.subr.mxu0 0.0
    %3530 = vmatpush1.msra.mxu0 0.0
    %3531 = vmatprep.subr.mxu0 0.0
    %3532 = vmatpush1.msra.mxu0 0.0
    %3533 = vmatprep.subr.mxu0 0.0
    %3534 = vmatpush1.msra.mxu0 0.0
    %3535 = vmatprep.subr.mxu0 0.0
    %3536 = vmatpush1.msra.mxu0 0.0
    %3537 = vmatprep.subr.mxu0 0.0
    %3538 = vmatpush1.msra.mxu0 0.0
    %3539 = vmatprep.subr.mxu0 0.0
    %3540 = vmatpush1.msra.mxu0 0.0
    %3541 = vmatprep.subr.mxu0 0.0
    %3542 = vmatpush1.msra.mxu0 0.0
    %3543 = vmatprep.subr.mxu0 0.0
    %3544 = vmatpush1.msra.mxu0 0.0
    %3545 = vmatprep.subr.mxu0 0.0
    %3546 = vmatpush1.msra.mxu0 0.0
    %3547 = vmatprep.subr.mxu0 0.0
    %3548 = vmatpush1.msra.mxu0 0.0
    %3549 = vmatprep.subr.mxu0 0.0
    %3550 = vmatpush1.msra.mxu0 0.0
    %3551 = vmatprep.subr.mxu0 0.0
    %3552 = vmatpush1.msra.mxu0 0.0
    %3553 = vmatprep.subr.mxu0 0.0
    %3554 = vmatpush1.msra.mxu0 0.0
    %3555 = vmatprep.subr.mxu0 0.0
    %3556 = vmatpush1.msra.mxu0 0.0
    %3557 = vmatprep.subr.mxu0 0.0
    %3558 = vmatpush1.msra.mxu0 0.0
    %3559 = vmatprep.subr.mxu0 0.0
    %3560 = vmatpush1.msra.mxu0 0.0
    %3561 = vmatprep.subr.mxu0 0.0
    %3562 = vmatpush1.msra.mxu0 0.0
    %3563 = vmatprep.subr.mxu0 0.0
    %3564 = vmatpush1.msra.mxu0 0.0
    %3565 = vmatprep.subr.mxu0 0.0
    %3566 = vmatpush1.msra.mxu0 0.0
    %3567 = vmatprep.subr.mxu0 0.0
    %3568 = vmatpush1.msra.mxu0 0.0
    %3569 = vmatprep.subr.mxu0 0.0
    %3570 = vmatpush1.msra.mxu0 0.0
    %3571 = vmatprep.subr.mxu0 0.0
    %3572 = vmatpush1.msra.mxu0 0.0
    %3573 = vmatprep.subr.mxu0 0.0
    %3574 = vmatpush1.msra.mxu0 0.0
    %3575 = vmatprep.subr.mxu0 0.0
    %3576 = vmatpush1.msra.mxu0 0.0
    %3577 = vmatprep.subr.mxu0 0.0
    %3578 = vmatpush1.msra.mxu0 0.0
    %3579 = vmatprep.subr.mxu0 0.0
    %3580 = vmatpush1.msra.mxu0 0.0
    %3581 = vmatprep.subr.mxu0 0.0
    %3582 = vmatpush1.msra.mxu0 0.0
    %3583 = vmatprep.subr.mxu0 0.0
    %3584 = vmatpush1.msra.mxu0 0.0
    %3585 = vmatprep.subr.mxu0 0.0
    %3586 = vmatpush1.msra.mxu0 0.0
    %3587 = vmatprep.subr.mxu0 0.0
    %3588 = vmatpush1.msra.mxu0 0.0
    %3589 = vmatprep.subr.mxu0 0.0
    %3590 = vmatpush1.msra.mxu0 0.0
    %3591 = vmatprep.mubr.f32.mxu0 0.0
    %3592 = vmatmul.mubr.f32.gmra.mrb[0].mxu0 %v3522
    %v3593 = vpop.f32.mrb[0].mxu0
    %v3594 = vadd.f32 0.0, %v3593
    %v3595 = vpop.f32.mrb[0].mxu0
    %3596 = vmatprep.mubr.f32.mxu0 0.0
    %3597 = vmatmul.mubr.f32.gmra.mrb[0].mxu0 %v3525
    %v3598 = vpop.f32.mrb[0].mxu0
    %v3599 = vadd.f32 0.0, %v3598
    %v3600 = vpop.f32.mrb[0].mxu0
    %3601 = vdwg.mxu0
    %v3602 = vadd.f32 %v3181, %v3594
    %v3603 = vadd.f32 %v3186, %v3599
    %3604 = vrot.lane.b32.xlu0 %v2352, 104
    %v3605 = vpop.permute.xlu0 %3604
    %3606 = vrot.lane.b32.xlu0 %v2352, 72
    %v3607 = vpop.permute.xlu0 %3606
    %v3608 = vsel %vm311, %v3605, 0
    %v3610 = vsel %vm311, %v3607, 0
    %3612 = vmatprep.subr.mxu0 0.0
    %3613 = vmatpush1.xpose.msra.mxu0 %v3610
    %3614 = vmatprep.subr.mxu0 0.0
    %3615 = vmatpush1.xpose.msra.mxu0 0.0
    %3616 = vmatprep.subr.mxu0 0.0
    %3617 = vmatpush1.xpose.msra.mxu0 0.0
    %3618 = vmatprep.subr.mxu0 0.0
    %3619 = vmatpush1.xpose.msra.mxu0 0.0
    %3620 = vmatprep.subr.mxu0 0.0
    %3621 = vmatpush1.xpose.msra.mxu0 0.0
    %3622 = vmatprep.subr.mxu0 0.0
    %3623 = vmatpush1.xpose.msra.mxu0 0.0
    %3624 = vmatprep.subr.mxu0 0.0
    %3625 = vmatpush1.xpose.msra.mxu0 0.0
    %3626 = vmatprep.subr.mxu0 0.0
    %3627 = vmatpush1.xpose.msra.mxu0 0.0
    %3628 = vmatprep.subr.mxu0 0.0
    %3629 = vmatpush1.xpose.msra.mxu0 0.0
    %3630 = vmatprep.subr.mxu0 0.0
    %3631 = vmatpush1.xpose.msra.mxu0 0.0
    %3632 = vmatprep.subr.mxu0 0.0
    %3633 = vmatpush1.xpose.msra.mxu0 0.0
    %3634 = vmatprep.subr.mxu0 0.0
    %3635 = vmatpush1.xpose.msra.mxu0 0.0
    %3636 = vmatprep.subr.mxu0 0.0
    %3637 = vmatpush1.xpose.msra.mxu0 0.0
    %3638 = vmatprep.subr.mxu0 0.0
    %3639 = vmatpush1.xpose.msra.mxu0 0.0
    %3640 = vmatprep.subr.mxu0 0.0
    %3641 = vmatpush1.xpose.msra.mxu0 0.0
    %3642 = vmatprep.subr.mxu0 0.0
    %3643 = vmatpush1.xpose.msra.mxu0 0.0
    %3644 = vmatprep.subr.mxu0 0.0
    %3645 = vmatpush1.xpose.msra.mxu0 0.0
    %3646 = vmatprep.subr.mxu0 0.0
    %3647 = vmatpush1.xpose.msra.mxu0 0.0
    %3648 = vmatprep.subr.mxu0 0.0
    %3649 = vmatpush1.xpose.msra.mxu0 0.0
    %3650 = vmatprep.subr.mxu0 0.0
    %3651 = vmatpush1.xpose.msra.mxu0 0.0
    %3652 = vmatprep.subr.mxu0 0.0
    %3653 = vmatpush1.xpose.msra.mxu0 0.0
    %3654 = vmatprep.subr.mxu0 0.0
    %3655 = vmatpush1.xpose.msra.mxu0 0.0
    %3656 = vmatprep.subr.mxu0 0.0
    %3657 = vmatpush1.xpose.msra.mxu0 0.0
    %3658 = vmatprep.subr.mxu0 0.0
    %3659 = vmatpush1.xpose.msra.mxu0 0.0
    %3660 = vmatprep.subr.mxu0 0.0
    %3661 = vmatpush1.xpose.msra.mxu0 0.0
    %3662 = vmatprep.subr.mxu0 0.0
    %3663 = vmatpush1.xpose.msra.mxu0 0.0
    %3664 = vmatprep.subr.mxu0 0.0
    %3665 = vmatpush1.xpose.msra.mxu0 0.0
    %3666 = vmatprep.subr.mxu0 0.0
    %3667 = vmatpush1.xpose.msra.mxu0 0.0
    %3668 = vmatprep.subr.mxu0 0.0
    %3669 = vmatpush1.xpose.msra.mxu0 0.0
    %3670 = vmatprep.subr.mxu0 0.0
    %3671 = vmatpush1.xpose.msra.mxu0 0.0
    %3672 = vmatprep.subr.mxu0 0.0
    %3673 = vmatpush1.xpose.msra.mxu0 0.0
    %3674 = vmatprep.subr.mxu0 0.0
    %3675 = vmatpush1.xpose.msra.mxu0 0.0
    %3676 = vmatprep.mubr.f32.mxu0 0.0
    %3677 = vmatmul.mubr.f32.gmra.mrb[0].mxu0 %v3608
    %v3678 = vpop.f32.mrb[0].mxu0
    %v3679 = vadd.f32 0.0, %v3678
    %v3680 = vpop.f32.mrb[0].mxu0
    %3681 = vdwg.mxu0
    %3682 = vrot.lane.b32.xlu0 %v2357, 104
    %v3683 = vpop.permute.xlu0 %3682
    %3684 = vrot.lane.b32.xlu0 %v2357, 72
    %v3685 = vpop.permute.xlu0 %3684
    %v3686 = vsel %vm311, %v3683, 0
    %v3688 = vsel %vm311, %v3685, 0
    %3690 = vmatprep.subr.mxu0 0.0
    %3691 = vmatpush1.xpose.msra.mxu0 %v3688
    %3692 = vmatprep.subr.mxu0 0.0
    %3693 = vmatpush1.xpose.msra.mxu0 0.0
    %3694 = vmatprep.subr.mxu0 0.0
    %3695 = vmatpush1.xpose.msra.mxu0 0.0
    %3696 = vmatprep.subr.mxu0 0.0
    %3697 = vmatpush1.xpose.msra.mxu0 0.0
    %3698 = vmatprep.subr.mxu0 0.0
    %3699 = vmatpush1.xpose.msra.mxu0 0.0
    %3700 = vmatprep.subr.mxu0 0.0
    %3701 = vmatpush1.xpose.msra.mxu0 0.0
    %3702 = vmatprep.subr.mxu0 0.0
    %3703 = vmatpush1.xpose.msra.mxu0 0.0
    %3704 = vmatprep.subr.mxu0 0.0
    %3705 = vmatpush1.xpose.msra.mxu0 0.0
    %3706 = vmatprep.subr.mxu0 0.0
    %3707 = vmatpush1.xpose.msra.mxu0 0.0
    %3708 = vmatprep.subr.mxu0 0.0
    %3709 = vmatpush1.xpose.msra.mxu0 0.0
    %3710 = vmatprep.subr.mxu0 0.0
    %3711 = vmatpush1.xpose.msra.mxu0 0.0
    %3712 = vmatprep.subr.mxu0 0.0
    %3713 = vmatpush1.xpose.msra.mxu0 0.0
    %3714 = vmatprep.subr.mxu0 0.0
    %3715 = vmatpush1.xpose.msra.mxu0 0.0
    %3716 = vmatprep.subr.mxu0 0.0
    %3717 = vmatpush1.xpose.msra.mxu0 0.0
    %3718 = vmatprep.subr.mxu0 0.0
    %3719 = vmatpush1.xpose.msra.mxu0 0.0
    %3720 = vmatprep.subr.mxu0 0.0
    %3721 = vmatpush1.xpose.msra.mxu0 0.0
    %3722 = vmatprep.subr.mxu0 0.0
    %3723 = vmatpush1.xpose.msra.mxu0 0.0
    %3724 = vmatprep.subr.mxu0 0.0
    %3725 = vmatpush1.xpose.msra.mxu0 0.0
    %3726 = vmatprep.subr.mxu0 0.0
    %3727 = vmatpush1.xpose.msra.mxu0 0.0
    %3728 = vmatprep.subr.mxu0 0.0
    %3729 = vmatpush1.xpose.msra.mxu0 0.0
    %3730 = vmatprep.subr.mxu0 0.0
    %3731 = vmatpush1.xpose.msra.mxu0 0.0
    %3732 = vmatprep.subr.mxu0 0.0
    %3733 = vmatpush1.xpose.msra.mxu0 0.0
    %3734 = vmatprep.subr.mxu0 0.0
    %3735 = vmatpush1.xpose.msra.mxu0 0.0
    %3736 = vmatprep.subr.mxu0 0.0
    %3737 = vmatpush1.xpose.msra.mxu0 0.0
    %3738 = vmatprep.subr.mxu0 0.0
    %3739 = vmatpush1.xpose.msra.mxu0 0.0
    %3740 = vmatprep.subr.mxu0 0.0
    %3741 = vmatpush1.xpose.msra.mxu0 0.0
    %3742 = vmatprep.subr.mxu0 0.0
    %3743 = vmatpush1.xpose.msra.mxu0 0.0
    %3744 = vmatprep.subr.mxu0 0.0
    %3745 = vmatpush1.xpose.msra.mxu0 0.0
    %3746 = vmatprep.subr.mxu0 0.0
    %3747 = vmatpush1.xpose.msra.mxu0 0.0
    %3748 = vmatprep.subr.mxu0 0.0
    %3749 = vmatpush1.xpose.msra.mxu0 0.0
    %3750 = vmatprep.subr.mxu0 0.0
    %3751 = vmatpush1.xpose.msra.mxu0 0.0
    %3752 = vmatprep.subr.mxu0 0.0
    %3753 = vmatpush1.xpose.msra.mxu0 0.0
    %3754 = vmatprep.mubr.f32.mxu0 0.0
    %3755 = vmatmul.mubr.f32.gmra.mrb[0].mxu0 %v3686
    %v3756 = vpop.f32.mrb[0].mxu0
    %v3757 = vadd.f32 0.0, %v3756
    %v3758 = vpop.f32.mrb[0].mxu0
    %3759 = vdwg.mxu0
    %v3760 = vmul.f32 %v3679, 0.35355338
    %v3761 = vmul.f32 %v3757, 0.35355338
    %v3762 = vsel %vm311, %v3760, -inf
    %3763 = vmax.xlane.f32.xlu0 %v3762
    %v3764 = vpop.xlane.xlu0 %3763
    %v3765 = vsel %vm311, %v3761, -inf
    %3766 = vmax.xlane.f32.xlu0 %v3765
    %v3767 = vpop.xlane.xlu0 %3766
    %v3768 = vsub.f32 %v3760, %v3764
    %v3769 = vsub.f32 %v3761, %v3767
    %v3770 = vmul.f32 %v3768, 1.442695
    %v3771 = vpow.pop %v3770
    %v3772 = vmul.f32 %v3769, 1.442695
    %v3773 = vpow.pop %v3772
    %v3774 = vsel %vm311, %v3771, 0.0
    %3775 = vadd.xlane.f32.xlu0 %v3774
    %v3776 = vpop.xlane.xlu0 %3775
    %v3777 = vsel %vm311, %v3773, 0.0
    %3778 = vadd.xlane.f32.xlu0 %v3777
    %v3779 = vpop.xlane.xlu0 %3778
    %v3780 = vrcp.pop %v3776
    %v3781 = vrcp.pop %v3779
    %v3782 = vmul.f32 %v3771, %v3780
    %v3783 = vmul.f32 %v3773, %v3781
    %3784 = vrot.lane.b32.xlu0 %v2352, 40
    %v3785 = vpop.permute.xlu0 %3784
    %v3788 = vsel %vm311, %v3782, 0
    %3790 = vmatprep.subr.mxu0 0.0
    %3791 = vmatpush1.msra.mxu0 %v3785
    %3792 = vmatprep.subr.mxu0 0.0
    %3793 = vmatpush1.msra.mxu0 0.0
    %3794 = vmatprep.subr.mxu0 0.0
    %3795 = vmatpush1.msra.mxu0 0.0
    %3796 = vmatprep.subr.mxu0 0.0
    %3797 = vmatpush1.msra.mxu0 0.0
    %3798 = vmatprep.subr.mxu0 0.0
    %3799 = vmatpush1.msra.mxu0 0.0
    %3800 = vmatprep.subr.mxu0 0.0
    %3801 = vmatpush1.msra.mxu0 0.0
    %3802 = vmatprep.subr.mxu0 0.0
    %3803 = vmatpush1.msra.mxu0 0.0
    %3804 = vmatprep.subr.mxu0 0.0
    %3805 = vmatpush1.msra.mxu0 0.0
    %3806 = vmatprep.subr.mxu0 0.0
    %3807 = vmatpush1.msra.mxu0 0.0
    %3808 = vmatprep.subr.mxu0 0.0
    %3809 = vmatpush1.msra.mxu0 0.0
    %3810 = vmatprep.subr.mxu0 0.0
    %3811 = vmatpush1.msra.mxu0 0.0
    %3812 = vmatprep.subr.mxu0 0.0
    %3813 = vmatpush1.msra.mxu0 0.0
    %3814 = vmatprep.subr.mxu0 0.0
    %3815 = vmatpush1.msra.mxu0 0.0
    %3816 = vmatprep.subr.mxu0 0.0
    %3817 = vmatpush1.msra.mxu0 0.0
    %3818 = vmatprep.subr.mxu0 0.0
    %3819 = vmatpush1.msra.mxu0 0.0
    %3820 = vmatprep.subr.mxu0 0.0
    %3821 = vmatpush1.msra.mxu0 0.0
    %3822 = vmatprep.subr.mxu0 0.0
    %3823 = vmatpush1.msra.mxu0 0.0
    %3824 = vmatprep.subr.mxu0 0.0
    %3825 = vmatpush1.msra.mxu0 0.0
    %3826 = vmatprep.subr.mxu0 0.0
    %3827 = vmatpush1.msra.mxu0 0.0
    %3828 = vmatprep.subr.mxu0 0.0
    %3829 = vmatpush1.msra.mxu0 0.0
    %3830 = vmatprep.subr.mxu0 0.0
    %3831 = vmatpush1.msra.mxu0 0.0
    %3832 = vmatprep.subr.mxu0 0.0
    %3833 = vmatpush1.msra.mxu0 0.0
    %3834 = vmatprep.subr.mxu0 0.0
    %3835 = vmatpush1.msra.mxu0 0.0
    %3836 = vmatprep.subr.mxu0 0.0
    %3837 = vmatpush1.msra.mxu0 0.0
    %3838 = vmatprep.subr.mxu0 0.0
    %3839 = vmatpush1.msra.mxu0 0.0
    %3840 = vmatprep.subr.mxu0 0.0
    %3841 = vmatpush1.msra.mxu0 0.0
    %3842 = vmatprep.subr.mxu0 0.0
    %3843 = vmatpush1.msra.mxu0 0.0
    %3844 = vmatprep.subr.mxu0 0.0
    %3845 = vmatpush1.msra.mxu0 0.0
    %3846 = vmatprep.subr.mxu0 0.0
    %3847 = vmatpush1.msra.mxu0 0.0
    %3848 = vmatprep.subr.mxu0 0.0
    %3849 = vmatpush1.msra.mxu0 0.0
    %3850 = vmatprep.subr.mxu0 0.0
    %3851 = vmatpush1.msra.mxu0 0.0
    %3852 = vmatprep.subr.mxu0 0.0
    %3853 = vmatpush1.msra.mxu0 0.0
    %3854 = vmatprep.mubr.f32.mxu0 0.0
    %3855 = vmatmul.mubr.f32.gmra.mrb[0].mxu0 %v3788
    %v3856 = vpop.f32.mrb[0].mxu0
    %v3857 = vadd.f32 0.0, %v3856
    %v3858 = vpop.f32.mrb[0].mxu0
    %3859 = vdwg.mxu0
    %3860 = vrot.lane.b32.xlu0 %v2357, 40
    %v3861 = vpop.permute.xlu0 %3860
    %v3864 = vsel %vm311, %v3783, 0
    %3866 = vmatprep.subr.mxu0 0.0
    %3867 = vmatpush1.msra.mxu0 %v3861
    %3868 = vmatprep.subr.mxu0 0.0
    %3869 = vmatpush1.msra.mxu0 0.0
    %3870 = vmatprep.subr.mxu0 0.0
    %3871 = vmatpush1.msra.mxu0 0.0
    %3872 = vmatprep.subr.mxu0 0.0
    %3873 = vmatpush1.msra.mxu0 0.0
    %3874 = vmatprep.subr.mxu0 0.0
    %3875 = vmatpush1.msra.mxu0 0.0
    %3876 = vmatprep.subr.mxu0 0.0
    %3877 = vmatpush1.msra.mxu0 0.0
    %3878 = vmatprep.subr.mxu0 0.0
    %3879 = vmatpush1.msra.mxu0 0.0
    %3880 = vmatprep.subr.mxu0 0.0
    %3881 = vmatpush1.msra.mxu0 0.0
    %3882 = vmatprep.subr.mxu0 0.0
    %3883 = vmatpush1.msra.mxu0 0.0
    %3884 = vmatprep.subr.mxu0 0.0
    %3885 = vmatpush1.msra.mxu0 0.0
    %3886 = vmatprep.subr.mxu0 0.0
    %3887 = vmatpush1.msra.mxu0 0.0
    %3888 = vmatprep.subr.mxu0 0.0
    %3889 = vmatpush1.msra.mxu0 0.0
    %3890 = vmatprep.subr.mxu0 0.0
    %3891 = vmatpush1.msra.mxu0 0.0
    %3892 = vmatprep.subr.mxu0 0.0
    %3893 = vmatpush1.msra.mxu0 0.0
    %3894 = vmatprep.subr.mxu0 0.0
    %3895 = vmatpush1.msra.mxu0 0.0
    %3896 = vmatprep.subr.mxu0 0.0
    %3897 = vmatpush1.msra.mxu0 0.0
    %3898 = vmatprep.subr.mxu0 0.0
    %3899 = vmatpush1.msra.mxu0 0.0
    %3900 = vmatprep.subr.mxu0 0.0
    %3901 = vmatpush1.msra.mxu0 0.0
    %3902 = vmatprep.subr.mxu0 0.0
    %3903 = vmatpush1.msra.mxu0 0.0
    %3904 = vmatprep.subr.mxu0 0.0
    %3905 = vmatpush1.msra.mxu0 0.0
    %3906 = vmatprep.subr.mxu0 0.0
    %3907 = vmatpush1.msra.mxu0 0.0
    %3908 = vmatprep.subr.mxu0 0.0
    %3909 = vmatpush1.msra.mxu0 0.0
    %3910 = vmatprep.subr.mxu0 0.0
    %3911 = vmatpush1.msra.mxu0 0.0
    %3912 = vmatprep.subr.mxu0 0.0
    %3913 = vmatpush1.msra.mxu0 0.0
    %3914 = vmatprep.subr.mxu0 0.0
    %3915 = vmatpush1.msra.mxu0 0.0
    %3916 = vmatprep.subr.mxu0 0.0
    %3917 = vmatpush1.msra.mxu0 0.0
    %3918 = vmatprep.subr.mxu0 0.0
    %3919 = vmatpush1.msra.mxu0 0.0
    %3920 = vmatprep.subr.mxu0 0.0
    %3921 = vmatpush1.msra.mxu0 0.0
    %3922 = vmatprep.subr.mxu0 0.0
    %3923 = vmatpush1.msra.mxu0 0.0
    %3924 = vmatprep.subr.mxu0 0.0
    %3925 = vmatpush1.msra.mxu0 0.0
    %3926 = vmatprep.subr.mxu0 0.0
    %3927 = vmatpush1.msra.mxu0 0.0
    %3928 = vmatprep.subr.mxu0 0.0
    %3929 = vmatpush1.msra.mxu0 0.0
    %3930 = vmatprep.mubr.f32.mxu0 0.0
    %3931 = vmatmul.mubr.f32.gmra.mrb[0].mxu0 %v3864
    %v3932 = vpop.f32.mrb[0].mxu0
    %v3933 = vadd.f32 0.0, %v3932
    %v3934 = vpop.f32.mrb[0].mxu0
    %3935 = vdwg.mxu0
    %v3937 = vsel %vm311, %v3857, 0
    %v3940 = vsel %vm311, %v3933, 0
    %3942 = vmatprep.subr.mxu0 0.0
    %3943 = vmatpush1.msra.mxu0 %v2364
    %3944 = vmatprep.subr.mxu0 0.0
    %3945 = vmatpush1.msra.mxu0 0.0
    %3946 = vmatprep.subr.mxu0 0.0
    %3947 = vmatpush1.msra.mxu0 0.0
    %3948 = vmatprep.subr.mxu0 0.0
    %3949 = vmatpush1.msra.mxu0 0.0
    %3950 = vmatprep.subr.mxu0 0.0
    %3951 = vmatpush1.msra.mxu0 0.0
    %3952 = vmatprep.subr.mxu0 0.0
    %3953 = vmatpush1.msra.mxu0 0.0
    %3954 = vmatprep.subr.mxu0 0.0
    %3955 = vmatpush1.msra.mxu0 0.0
    %3956 = vmatprep.subr.mxu0 0.0
    %3957 = vmatpush1.msra.mxu0 0.0
    %3958 = vmatprep.subr.mxu0 0.0
    %3959 = vmatpush1.msra.mxu0 0.0
    %3960 = vmatprep.subr.mxu0 0.0
    %3961 = vmatpush1.msra.mxu0 0.0
    %3962 = vmatprep.subr.mxu0 0.0
    %3963 = vmatpush1.msra.mxu0 0.0
    %3964 = vmatprep.subr.mxu0 0.0
    %3965 = vmatpush1.msra.mxu0 0.0
    %3966 = vmatprep.subr.mxu0 0.0
    %3967 = vmatpush1.msra.mxu0 0.0
    %3968 = vmatprep.subr.mxu0 0.0
    %3969 = vmatpush1.msra.mxu0 0.0
    %3970 = vmatprep.subr.mxu0 0.0
    %3971 = vmatpush1.msra.mxu0 0.0
    %3972 = vmatprep.subr.mxu0 0.0
    %3973 = vmatpush1.msra.mxu0 0.0
    %3974 = vmatprep.subr.mxu0 0.0
    %3975 = vmatpush1.msra.mxu0 0.0
    %3976 = vmatprep.subr.mxu0 0.0
    %3977 = vmatpush1.msra.mxu0 0.0
    %3978 = vmatprep.subr.mxu0 0.0
    %3979 = vmatpush1.msra.mxu0 0.0
    %3980 = vmatprep.subr.mxu0 0.0
    %3981 = vmatpush1.msra.mxu0 0.0
    %3982 = vmatprep.subr.mxu0 0.0
    %3983 = vmatpush1.msra.mxu0 0.0
    %3984 = vmatprep.subr.mxu0 0.0
    %3985 = vmatpush1.msra.mxu0 0.0
    %3986 = vmatprep.subr.mxu0 0.0
    %3987 = vmatpush1.msra.mxu0 0.0
    %3988 = vmatprep.subr.mxu0 0.0
    %3989 = vmatpush1.msra.mxu0 0.0
    %3990 = vmatprep.subr.mxu0 0.0
    %3991 = vmatpush1.msra.mxu0 0.0
    %3992 = vmatprep.subr.mxu0 0.0
    %3993 = vmatpush1.msra.mxu0 0.0
    %3994 = vmatprep.subr.mxu0 0.0
    %3995 = vmatpush1.msra.mxu0 0.0
    %3996 = vmatprep.subr.mxu0 0.0
    %3997 = vmatpush1.msra.mxu0 0.0
    %3998 = vmatprep.subr.mxu0 0.0
    %3999 = vmatpush1.msra.mxu0 0.0
    %4000 = vmatprep.subr.mxu0 0.0
    %4001 = vmatpush1.msra.mxu0 0.0
    %4002 = vmatprep.subr.mxu0 0.0
    %4003 = vmatpush1.msra.mxu0 0.0
    %4004 = vmatprep.subr.mxu0 0.0
    %4005 = vmatpush1.msra.mxu0 0.0
    %4006 = vmatprep.mubr.f32.mxu0 0.0
    %4007 = vmatmul.mubr.f32.gmra.mrb[0].mxu0 %v3937
    %v4008 = vpop.f32.mrb[0].mxu0
    %v4009 = vadd.f32 0.0, %v4008
    %v4010 = vpop.f32.mrb[0].mxu0
    %4011 = vmatprep.mubr.f32.mxu0 0.0
    %4012 = vmatmul.mubr.f32.gmra.mrb[0].mxu0 %v3940
    %v4013 = vpop.f32.mrb[0].mxu0
    %v4014 = vadd.f32 0.0, %v4013
    %v4015 = vpop.f32.mrb[0].mxu0
    %4016 = vdwg.mxu0
    %v4017 = vadd.f32 %v3602, %v4009
    %v4018 = vadd.f32 %v3603, %v4014
    %v4019 = vadd.f32 %v2218, %v4017
    %v4020 = vadd.f32 %v2219, %v4018
    %s4021 = scalar_lea.vmem %s7, 1
    %v4022 = vld [vmem:[%s4021] sm:$0x1]
    %v4024 = vlaneseq
    %v4025 = vshrl.u32 %v4024, 7
    %v4026 = vsub.s32 0, %v4025
    %v4027 = vrot.slane %v4022, %v4026
    %v4029 = vadd.f32 %v4019, %v4027
    %v4030 = vadd.f32 %v4020, %v4027
    %s4031 = scalar_lea.vmem %s8, 1
    %v4032 = vld [vmem:[%s4031] sm:$0x1]
    %s4033 = scalar_lea.vmem %s9, 1
    %v4034 = vld [vmem:[%s4033] sm:$0x1]
    %v4035 = vsel %vm168, %v4029, 0.0
    %4036 = vadd.xlane.f32.xlu0 %v4035
    %v4037 = vpop.xlane.xlu0 %4036
    %v4038 = vsel %vm168, %v4030, 0.0
    %4039 = vadd.xlane.f32.xlu0 %v4038
    %v4040 = vpop.xlane.xlu0 %4039
    %v4041 = vmul.f32 %v4037, %v175
    %v4042 = vmul.f32 %v4040, %v175
    %v4043 = vsub.f32 %v4029, %v4041
    %v4044 = vsub.f32 %v4030, %v4042
    %v4045 = vmul.f32 %v4043, %v4043
    %v4046 = vmul.f32 %v4044, %v4044
    %v4047 = vsel %vm168, %v4045, 0.0
    %4048 = vadd.xlane.f32.xlu0 %v4047
    %v4049 = vpop.xlane.xlu0 %4048
    %v4050 = vsel %vm168, %v4046, 0.0
    %4051 = vadd.xlane.f32.xlu0 %v4050
    %v4052 = vpop.xlane.xlu0 %4051
    %v4053 = vmul.f32 %v4049, %v175
    %v4054 = vmul.f32 %v4052, %v175
    %v4055 = vadd.f32 %v4053, 1e-05
    %v4056 = vadd.f32 %v4054, 1e-05
    %v4057 = vrsqrt.pop %v4055
    %v4058 = vrsqrt.pop %v4056
    %v4059 = vmul.f32 %v4043, %v4057
    %v4060 = vmul.f32 %v4044, %v4058
    %v4062 = vlaneseq
    %v4063 = vshrl.u32 %v4062, 7
    %v4064 = vsub.s32 0, %v4063
    %v4065 = vrot.slane %v4032, %v4064
    %v4067 = vmul.f32 %v4059, %v4065
    %v4068 = vmul.f32 %v4060, %v4065
    %v4070 = vlaneseq
    %v4071 = vshrl.u32 %v4070, 7
    %v4072 = vsub.s32 0, %v4071
    %v4073 = vrot.slane %v4034, %v4072
    %v4075 = vadd.f32 %v4067, %v4073
    %v4076 = vadd.f32 %v4068, %v4073
    %s4077 = scalar_lea.vmem %s10, 32
    %v4078 = vld [vmem:[%s4077] sm:$0xff]
    %v4079 = vld [vmem:[%s4077 + $0x8] sm:$0xff]
    %v4080 = vld [vmem:[%s4077 + $0x10] sm:$0xff]
    %v4081 = vld [vmem:[%s4077 + $0x18] sm:$0xff]
    %s4082 = scalar_lea.vmem %s11, 1
    %v4083 = vld [vmem:[%s4082] sm:$0x1]
    %v4085 = vlaneseq
    %v4086 = vshrl.u32 %v4085, 7
    %v4087 = vsub.s32 0, %v4086
    %v4088 = vrot.slane %v4083, %v4087
    %v4091 = vsel %vm168, %v4075, 0
    %v4094 = vsel %vm168, %v4076, 0
    %4096 = vmatprep.subr.mxu0 0.0
    %4097 = vmatpush1.msra.mxu0 %v4078
    %4098 = vmatprep.subr.mxu0 0.0
    %4099 = vmatpush1.msra.mxu0 %v4079
    %4100 = vmatprep.subr.mxu0 0.0
    %4101 = vmatpush1.msra.mxu0 %v4080
    %4102 = vmatprep.subr.mxu0 0.0
    %4103 = vmatpush1.msra.mxu0 %v4081
    %4104 = vmatprep.subr.mxu0 0.0
    %4105 = vmatpush1.msra.mxu0 0.0
    %4106 = vmatprep.subr.mxu0 0.0
    %4107 = vmatpush1.msra.mxu0 0.0
    %4108 = vmatprep.subr.mxu0 0.0
    %4109 = vmatpush1.msra.mxu0 0.0
    %4110 = vmatprep.subr.mxu0 0.0
    %4111 = vmatpush1.msra.mxu0 0.0
    %4112 = vmatprep.subr.mxu0 0.0
    %4113 = vmatpush1.msra.mxu0 0.0
    %4114 = vmatprep.subr.mxu0 0.0
    %4115 = vmatpush1.msra.mxu0 0.0
    %4116 = vmatprep.subr.mxu0 0.0
    %4117 = vmatpush1.msra.mxu0 0.0
    %4118 = vmatprep.subr.mxu0 0.0
    %4119 = vmatpush1.msra.mxu0 0.0
    %4120 = vmatprep.subr.mxu0 0.0
    %4121 = vmatpush1.msra.mxu0 0.0
    %4122 = vmatprep.subr.mxu0 0.0
    %4123 = vmatpush1.msra.mxu0 0.0
    %4124 = vmatprep.subr.mxu0 0.0
    %4125 = vmatpush1.msra.mxu0 0.0
    %4126 = vmatprep.subr.mxu0 0.0
    %4127 = vmatpush1.msra.mxu0 0.0
    %4128 = vmatprep.subr.mxu0 0.0
    %4129 = vmatpush1.msra.mxu0 0.0
    %4130 = vmatprep.subr.mxu0 0.0
    %4131 = vmatpush1.msra.mxu0 0.0
    %4132 = vmatprep.subr.mxu0 0.0
    %4133 = vmatpush1.msra.mxu0 0.0
    %4134 = vmatprep.subr.mxu0 0.0
    %4135 = vmatpush1.msra.mxu0 0.0
    %4136 = vmatprep.subr.mxu0 0.0
    %4137 = vmatpush1.msra.mxu0 0.0
    %4138 = vmatprep.subr.mxu0 0.0
    %4139 = vmatpush1.msra.mxu0 0.0
    %4140 = vmatprep.subr.mxu0 0.0
    %4141 = vmatpush1.msra.mxu0 0.0
    %4142 = vmatprep.subr.mxu0 0.0
    %4143 = vmatpush1.msra.mxu0 0.0
    %4144 = vmatprep.subr.mxu0 0.0
    %4145 = vmatpush1.msra.mxu0 0.0
    %4146 = vmatprep.subr.mxu0 0.0
    %4147 = vmatpush1.msra.mxu0 0.0
    %4148 = vmatprep.subr.mxu0 0.0
    %4149 = vmatpush1.msra.mxu0 0.0
    %4150 = vmatprep.subr.mxu0 0.0
    %4151 = vmatpush1.msra.mxu0 0.0
    %4152 = vmatprep.subr.mxu0 0.0
    %4153 = vmatpush1.msra.mxu0 0.0
    %4154 = vmatprep.subr.mxu0 0.0
    %4155 = vmatpush1.msra.mxu0 0.0
    %4156 = vmatprep.subr.mxu0 0.0
    %4157 = vmatpush1.msra.mxu0 0.0
    %4158 = vmatprep.subr.mxu0 0.0
    %4159 = vmatpush1.msra.mxu0 0.0
    %4160 = vmatprep.mubr.f32.mxu0 0.0
    %4161 = vmatmul.mubr.f32.gmra.mrb[0].mxu0 %v4091
    %v4162 = vpop.f32.mrb[0].mxu0
    %v4163 = vadd.f32 %v4088, %v4162
    %v4164 = vpop.f32.mrb[0].mxu0
    %4165 = vmatprep.mubr.f32.mxu0 0.0
    %4166 = vmatmul.mubr.f32.gmra.mrb[0].mxu0 %v4094
    %v4167 = vpop.f32.mrb[0].mxu0
    %v4168 = vadd.f32 %v4088, %v4167
    %v4169 = vpop.f32.mrb[0].mxu0
    %4170 = vdwg.mxu0
    %v4171 = vmul.f32 %v4163, 0.5
    %v4172 = vmul.f32 %v4168, 0.5
    %v4173 = vmul.f32 %v4163, 0.70710677
    %v4174 = vmul.f32 %v4168, 0.70710677
    %v4175 = verf.f32.pop %v4173
    %v4176 = verf.f32.pop %v4174
    %v4177 = vadd.f32 %v4175, 1.0
    %v4178 = vadd.f32 %v4176, 1.0
    %v4179 = vmul.f32 %v4171, %v4177
    %v4180 = vmul.f32 %v4172, %v4178
    %s4181 = scalar_lea.vmem %s12, 64
    %v4182 = vld [vmem:[%s4181] sm:$0xff]
    %v4183 = vld [vmem:[%s4181 + $0x8] sm:$0xff]
    %v4184 = vld [vmem:[%s4181 + $0x10] sm:$0xff]
    %v4185 = vld [vmem:[%s4181 + $0x18] sm:$0xff]
    %v4186 = vld [vmem:[%s4181 + $0x20] sm:$0xff]
    %v4187 = vld [vmem:[%s4181 + $0x28] sm:$0xff]
    %v4188 = vld [vmem:[%s4181 + $0x30] sm:$0xff]
    %v4189 = vld [vmem:[%s4181 + $0x38] sm:$0xff]
    %v4191 = vsel %vm84, %v4179, 0
    %v4194 = vsel %vm84, %v4180, 0
    %4196 = vmatprep.subr.mxu0 0.0
    %4197 = vmatpush1.msra.mxu0 %v4182
    %4198 = vmatprep.subr.mxu0 0.0
    %4199 = vmatpush1.msra.mxu0 %v4183
    %4200 = vmatprep.subr.mxu0 0.0
    %4201 = vmatpush1.msra.mxu0 %v4184
    %4202 = vmatprep.subr.mxu0 0.0
    %4203 = vmatpush1.msra.mxu0 %v4185
    %4204 = vmatprep.subr.mxu0 0.0
    %4205 = vmatpush1.msra.mxu0 %v4186
    %4206 = vmatprep.subr.mxu0 0.0
    %4207 = vmatpush1.msra.mxu0 %v4187
    %4208 = vmatprep.subr.mxu0 0.0
    %4209 = vmatpush1.msra.mxu0 %v4188
    %4210 = vmatprep.subr.mxu0 0.0
    %4211 = vmatpush1.msra.mxu0 %v4189
    %4212 = vmatprep.subr.mxu0 0.0
    %4213 = vmatpush1.msra.mxu0 0.0
    %4214 = vmatprep.subr.mxu0 0.0
    %4215 = vmatpush1.msra.mxu0 0.0
    %4216 = vmatprep.subr.mxu0 0.0
    %4217 = vmatpush1.msra.mxu0 0.0
    %4218 = vmatprep.subr.mxu0 0.0
    %4219 = vmatpush1.msra.mxu0 0.0
    %4220 = vmatprep.subr.mxu0 0.0
    %4221 = vmatpush1.msra.mxu0 0.0
    %4222 = vmatprep.subr.mxu0 0.0
    %4223 = vmatpush1.msra.mxu0 0.0
    %4224 = vmatprep.subr.mxu0 0.0
    %4225 = vmatpush1.msra.mxu0 0.0
    %4226 = vmatprep.subr.mxu0 0.0
    %4227 = vmatpush1.msra.mxu0 0.0
    %4228 = vmatprep.subr.mxu0 0.0
    %4229 = vmatpush1.msra.mxu0 0.0
    %4230 = vmatprep.subr.mxu0 0.0
    %4231 = vmatpush1.msra.mxu0 0.0
    %4232 = vmatprep.subr.mxu0 0.0
    %4233 = vmatpush1.msra.mxu0 0.0
    %4234 = vmatprep.subr.mxu0 0.0
    %4235 = vmatpush1.msra.mxu0 0.0
    %4236 = vmatprep.subr.mxu0 0.0
    %4237 = vmatpush1.msra.mxu0 0.0
    %4238 = vmatprep.subr.mxu0 0.0
    %4239 = vmatpush1.msra.mxu0 0.0
    %4240 = vmatprep.subr.mxu0 0.0
    %4241 = vmatpush1.msra.mxu0 0.0
    %4242 = vmatprep.subr.mxu0 0.0
    %4243 = vmatpush1.msra.mxu0 0.0
    %4244 = vmatprep.subr.mxu0 0.0
    %4245 = vmatpush1.msra.mxu0 0.0
    %4246 = vmatprep.subr.mxu0 0.0
    %4247 = vmatpush1.msra.mxu0 0.0
    %4248 = vmatprep.subr.mxu0 0.0
    %4249 = vmatpush1.msra.mxu0 0.0
    %4250 = vmatprep.subr.mxu0 0.0
    %4251 = vmatpush1.msra.mxu0 0.0
    %4252 = vmatprep.subr.mxu0 0.0
    %4253 = vmatpush1.msra.mxu0 0.0
    %4254 = vmatprep.subr.mxu0 0.0
    %4255 = vmatpush1.msra.mxu0 0.0
    %4256 = vmatprep.subr.mxu0 0.0
    %4257 = vmatpush1.msra.mxu0 0.0
    %4258 = vmatprep.subr.mxu0 0.0
    %4259 = vmatpush1.msra.mxu0 0.0
    %4260 = vmatprep.mubr.f32.mxu0 0.0
    %4261 = vmatmul.mubr.f32.gmra.mrb[0].mxu0 %v4191
    %v4262 = vpop.f32.mrb[0].mxu0
    %v4263 = vadd.f32 0.0, %v4262
    %v4264 = vpop.f32.mrb[0].mxu0
    %4265 = vmatprep.mubr.f32.mxu0 0.0
    %4266 = vmatmul.mubr.f32.gmra.mrb[0].mxu0 %v4194
    %v4267 = vpop.f32.mrb[0].mxu0
    %v4268 = vadd.f32 0.0, %v4267
    %v4269 = vpop.f32.mrb[0].mxu0
    %4270 = vdwg.mxu0
    %v4271 = vadd.f32 %v4029, %v4263
    %v4272 = vadd.f32 %v4030, %v4268
    %s4273 = scalar_lea.vmem %s13, 1
    %v4274 = vld [vmem:[%s4273] sm:$0x1]
    %v4276 = vlaneseq
    %v4277 = vshrl.u32 %v4276, 7
    %v4278 = vsub.s32 0, %v4277
    %v4279 = vrot.slane %v4274, %v4278
    %v4281 = vadd.f32 %v4271, %v4279
    %v4282 = vadd.f32 %v4272, %v4279
    %v4283 = vld [vmem:[%s14] sm:$0x1]
    %v4284 = vld [vmem:[%s15] sm:$0x1]
    %v4285 = vsel %vm168, %v4281, 0.0
    %4286 = vadd.xlane.f32.xlu0 %v4285
    %v4287 = vpop.xlane.xlu0 %4286
    %v4288 = vsel %vm168, %v4282, 0.0
    %4289 = vadd.xlane.f32.xlu0 %v4288
    %v4290 = vpop.xlane.xlu0 %4289
    %v4291 = vmul.f32 %v4287, %v175
    %v4292 = vmul.f32 %v4290, %v175
    %v4293 = vsub.f32 %v4281, %v4291
    %v4294 = vsub.f32 %v4282, %v4292
    %v4295 = vmul.f32 %v4293, %v4293
    %v4296 = vmul.f32 %v4294, %v4294
    %v4297 = vsel %vm168, %v4295, 0.0
    %4298 = vadd.xlane.f32.xlu0 %v4297
    %v4299 = vpop.xlane.xlu0 %4298
    %v4300 = vsel %vm168, %v4296, 0.0
    %4301 = vadd.xlane.f32.xlu0 %v4300
    %v4302 = vpop.xlane.xlu0 %4301
    %v4303 = vmul.f32 %v4299, %v175
    %v4304 = vmul.f32 %v4302, %v175
    %v4305 = vadd.f32 %v4303, 1e-05
    %v4306 = vadd.f32 %v4304, 1e-05
    %v4307 = vrsqrt.pop %v4305
    %v4308 = vrsqrt.pop %v4306
    %v4309 = vmul.f32 %v4293, %v4307
    %v4310 = vmul.f32 %v4294, %v4308
    %v4312 = vlaneseq
    %v4313 = vshrl.u32 %v4312, 7
    %v4314 = vsub.s32 0, %v4313
    %v4315 = vrot.slane %v4283, %v4314
    %v4317 = vmul.f32 %v4309, %v4315
    %v4318 = vmul.f32 %v4310, %v4315
    %v4320 = vlaneseq
    %v4321 = vshrl.u32 %v4320, 7
    %v4322 = vsub.s32 0, %v4321
    %v4323 = vrot.slane %v4284, %v4322
    %v4325 = vadd.f32 %v4317, %v4323
    %v4326 = vadd.f32 %v4318, %v4323
    %v4327 = vld [vmem:[%s16] sm:$0xff]
    %v4328 = vld [vmem:[%s16 + $0x8] sm:$0xff]
    %v4329 = vld [vmem:[%s16 + $0x10] sm:$0xff]
    %v4330 = vld [vmem:[%s16 + $0x18] sm:$0xff]
    %v4331 = vld [vmem:[%s17] sm:$0x1]
    %v4333 = vlaneseq
    %v4334 = vshrl.u32 %v4333, 7
    %v4335 = vsub.s32 0, %v4334
    %v4336 = vrot.slane %v4331, %v4335
    %v4339 = vsel %vm168, %v4325, 0
    %v4342 = vsel %vm168, %v4326, 0
    %4344 = vmatprep.subr.mxu0 0.0
    %4345 = vmatpush1.msra.mxu0 %v4327
    %4346 = vmatprep.subr.mxu0 0.0
    %4347 = vmatpush1.msra.mxu0 %v4328
    %4348 = vmatprep.subr.mxu0 0.0
    %4349 = vmatpush1.msra.mxu0 %v4329
    %4350 = vmatprep.subr.mxu0 0.0
    %4351 = vmatpush1.msra.mxu0 %v4330
    %4352 = vmatprep.subr.mxu0 0.0
    %4353 = vmatpush1.msra.mxu0 0.0
    %4354 = vmatprep.subr.mxu0 0.0
    %4355 = vmatpush1.msra.mxu0 0.0
    %4356 = vmatprep.subr.mxu0 0.0
    %4357 = vmatpush1.msra.mxu0 0.0
    %4358 = vmatprep.subr.mxu0 0.0
    %4359 = vmatpush1.msra.mxu0 0.0
    %4360 = vmatprep.subr.mxu0 0.0
    %4361 = vmatpush1.msra.mxu0 0.0
    %4362 = vmatprep.subr.mxu0 0.0
    %4363 = vmatpush1.msra.mxu0 0.0
    %4364 = vmatprep.subr.mxu0 0.0
    %4365 = vmatpush1.msra.mxu0 0.0
    %4366 = vmatprep.subr.mxu0 0.0
    %4367 = vmatpush1.msra.mxu0 0.0
    %4368 = vmatprep.subr.mxu0 0.0
    %4369 = vmatpush1.msra.mxu0 0.0
    %4370 = vmatprep.subr.mxu0 0.0
    %4371 = vmatpush1.msra.mxu0 0.0
    %4372 = vmatprep.subr.mxu0 0.0
    %4373 = vmatpush1.msra.mxu0 0.0
    %4374 = vmatprep.subr.mxu0 0.0
    %4375 = vmatpush1.msra.mxu0 0.0
    %4376 = vmatprep.subr.mxu0 0.0
    %4377 = vmatpush1.msra.mxu0 0.0
    %4378 = vmatprep.subr.mxu0 0.0
    %4379 = vmatpush1.msra.mxu0 0.0
    %4380 = vmatprep.subr.mxu0 0.0
    %4381 = vmatpush1.msra.mxu0 0.0
    %4382 = vmatprep.subr.mxu0 0.0
    %4383 = vmatpush1.msra.mxu0 0.0
    %4384 = vmatprep.subr.mxu0 0.0
    %4385 = vmatpush1.msra.mxu0 0.0
    %4386 = vmatprep.subr.mxu0 0.0
    %4387 = vmatpush1.msra.mxu0 0.0
    %4388 = vmatprep.subr.mxu0 0.0
    %4389 = vmatpush1.msra.mxu0 0.0
    %4390 = vmatprep.subr.mxu0 0.0
    %4391 = vmatpush1.msra.mxu0 0.0
    %4392 = vmatprep.subr.mxu0 0.0
    %4393 = vmatpush1.msra.mxu0 0.0
    %4394 = vmatprep.subr.mxu0 0.0
    %4395 = vmatpush1.msra.mxu0 0.0
    %4396 = vmatprep.subr.mxu0 0.0
    %4397 = vmatpush1.msra.mxu0 0.0
    %4398 = vmatprep.subr.mxu0 0.0
    %4399 = vmatpush1.msra.mxu0 0.0
    %4400 = vmatprep.subr.mxu0 0.0
    %4401 = vmatpush1.msra.mxu0 0.0
    %4402 = vmatprep.subr.mxu0 0.0
    %4403 = vmatpush1.msra.mxu0 0.0
    %4404 = vmatprep.subr.mxu0 0.0
    %4405 = vmatpush1.msra.mxu0 0.0
    %4406 = vmatprep.subr.mxu0 0.0
    %4407 = vmatpush1.msra.mxu0 0.0
    %4408 = vmatprep.mubr.f32.mxu0 0.0
    %4409 = vmatmul.mubr.f32.gmra.mrb[0].mxu0 %v4339
    %v4410 = vpop.f32.mrb[0].mxu0
    %v4411 = vadd.f32 %v4336, %v4410
    %v4412 = vpop.f32.mrb[0].mxu0
    %4413 = vmatprep.mubr.f32.mxu0 0.0
    %4414 = vmatmul.mubr.f32.gmra.mrb[0].mxu0 %v4342
    %v4415 = vpop.f32.mrb[0].mxu0
    %v4416 = vadd.f32 %v4336, %v4415
    %v4417 = vpop.f32.mrb[0].mxu0
    %4418 = vdwg.mxu0
    %4419 = vst [vmem:[#allocation2] sm:$0xff] %v4411
    %4420 = vst [vmem:[#allocation2 + $0x8] sm:$0xff] %v4416
    // Predicated region
    $region74: #{tpu_custom_call.1} parent=1 // pred_check
      _
    $region75: #{tpu_custom_call.1} parent=1 // pred_check_branch
      %4422 = sbr.rel (0) target = $region77
    $region76: #{tpu_custom_call.1} parent=1 // pred_region
      %s4424 = ssub.s32 256, 256
      %4425 = vsyncadd [#allocation3], %s4424
      %s4426 = sshll.u32 [#allocation2], 4
      %s4427 = int_to_ptr.vmem [resolvable:$true] %s4426
      %4432 = dma.vmem_to_hbm [thread:$0]  %s4427, 256, %s18, [#allocation3], 128, 128, 8
    $region77: #{tpu_custom_call.1} parent=1 // pred_fallthru
      _
    // Predicated region
    $region78: #{tpu_custom_call.1} parent=1 // pred_check
      _
    $region79: #{tpu_custom_call.1} parent=1 // pred_check_branch
      %4434 = sbr.rel (0) target = $region81
    $region80: #{tpu_custom_call.1} parent=1 // pred_region
      %4435 = dma.done [#allocation3], 256
    $region81: #{tpu_custom_call.1} parent=1 // pred_fallthru
      _
    %4436 = vsyncpa [#allocation3], 1

</llo_original>
